<compile_context>
chip_gen: v7x
topology: tpu7x:2x2x1
jax: 0.10.0
libtpu: 0.0.40
codegen_flags: <defaults>
</compile_context>

<pallas_src>
import numpy as np
import jax
import jax.numpy as jnp
from jax.experimental import pallas as pl
from jax.experimental.pallas import tpu as pltpu
from jax.scipy.special import gammaln


# ---------------------------------------------------------------------------
# float32-targeted lgamma: Lanczos g=5, n=6 (Numerical Recipes coefficients),
# collapsed into a rational and evaluated in u = 1/z (reversed polynomials).
#
#   lgamma(z) = (z+0.5)*log(z+5.5) - (z+5.5) + log( sqrt(2*pi) * ser(z)/z )
#   ser(z)    = c0 + sum_{j=1..6} c_j/(z+j) = P(z)/Q(z),  Q(z) = prod_j (z+j)
#   ser(z)/z  = u * Prev(u) / Qrev(u),  u = 1/z
#
# Reversed-in-u evaluation keeps every intermediate O(1e4) for z >= 1, so huge
# arguments (z = coverage + alpha + beta) cannot overflow f32.  Qrev has
# all-positive coefficients (no cancellation); Prev has only mild cancellation.
# Approximation error ~2e-10 in exact arithmetic; f32 + approx reciprocals keep
# it around ~1e-5 relative — far inside the 5e-3 test tolerance.
# TODO(synk): arguments < ~0.5 (alphas/betas drifting tiny during training)
#             would need the reflection formula; param init keeps them >= 1.
# ---------------------------------------------------------------------------
_LANCZOS_C0 = 1.000000000190015
_LANCZOS_COF = (
    76.18009172947146,
    -86.50532032941677,
    24.01409824083091,
    -1.231739572450155,
    0.1208650973866179e-2,
    -0.5395239384953e-5,
)
_LANCZOS_STP = 2.5066282746310005      # sqrt(2*pi)


def _lanczos_reversed_coeffs():
    """ser(z) = P(z)/Q(z); return Horner coeffs of Prev(u), Qrev(u), u = 1/z."""
    q = np.poly1d([1.0])
    for j in range(1, 7):
        q = q * np.poly1d([1.0, float(j)])
    p = _LANCZOS_C0 * q
    for idx, c in enumerate(_LANCZOS_COF):
        j = idx + 1
        pj = np.poly1d([1.0])
        for k in range(1, 7):
            if k != j:
                pj = pj * np.poly1d([1.0, float(k)])
        p = p + c * pj
    # poly1d coeffs are highest-power-of-z first; P(z) = z^6 * sum_k coeffs[k]*u^k,
    # so Horner-in-u (highest power of u first) wants the coefficients reversed.
    return (tuple(float(c) for c in p.coeffs[::-1]),
            tuple(float(c) for c in q.coeffs[::-1]))


_PU_COEF, _QU_COEF = _lanczos_reversed_coeffs()


def _horner(coeffs, t):
    acc = coeffs[0]
    for c in coeffs[1:]:
        acc = acc * t + c
    return acc


def _lgamma(z):
    """log Gamma(z) for z > 0, elementwise f32 (in-kernel only; uses pl.reciprocal)."""
    u = pl.reciprocal(z, approx=True)                                   # EUP
    ser_over_z = (_LANCZOS_STP * u * _horner(_PU_COEF, u)
                  * pl.reciprocal(_horner(_QU_COEF, u), approx=True))   # VALU Horner + EUP vrcp
    w = z + 5.5
    return (z + 0.5) * jnp.log(w) - w + jnp.log(ser_over_z)


# ---------------------------------------------------------------------------
# Pallas kernel: one (K, 8, TILE) lane-dense output block per grid step.
# Positions are packed densely on (sublane, lane); states K on the leading dim.
# ---------------------------------------------------------------------------
def _bb_kernel(x_ref, cov_ref, a_ref, b_ref, c_ref, o_ref):
    # x_ref/cov_ref: (8, TILE) densely packed positions.
    # a_ref/b_ref/c_ref: (K,) per-state scalars in SMEM.
    # o_ref: (K, 8, TILE).
    x = x_ref[...]
    cov = cov_ref[...]
    cmx = cov - x

    # Per-position terms, evaluated once per position at full vreg density.
    row = _lgamma(cov + 1.0) - _lgamma(x + 1.0) - _lgamma(cmx + 1.0)

    num_states = o_ref.shape[0]
    for k in range(num_states):     # static unroll; K = num_states is small
        a = a_ref[k]                # SMEM scalars; implicit broadcast only
        b = b_ref[k]
        wide = _lgamma(x + a) + _lgamma(cmx + b) - _lgamma(cov + (a + b))
        o_ref[k] = (wide + row + c_ref[k]).astype(o_ref.dtype)


def _cdiv(a, b):
    return -(-a // b)


def _round_up(n, m):
    return _cdiv(n, m) * m


def _choose_tiling(n_positions, tile_lanes):
    """Packed lane extent (mult of 128) and a lane tile <= tile_lanes."""
    lanes_min = _round_up(max(1, _cdiv(n_positions, 8)), 128)
    tile = max(128, min(_round_up(tile_lanes, 128), lanes_min))
    steps = _cdiv(lanes_min, tile)
    # v7x megacore: two TensorCores share the "parallel" grid axis, so prefer an
    # even step count whenever there is more than one step.  On single-TC
    # v5e/v6e this costs at most one extra ~0.35us grid step (noise next to the
    # per-step compute); the old "force >= 2 steps" split is removed entirely.
    if steps > 1 and steps % 2 == 1:
        alt_tile = max(128, _round_up(_cdiv(lanes_min, steps + 1), 128))
        alt_steps = _cdiv(lanes_min, alt_tile)
        if alt_steps % 2 == 0:
            tile, steps = alt_tile, alt_steps
    return tile, steps


def beta_binomial_embedding(x, coverage, ln_alphas, ln_betas, *,
                            tile_lanes=1024, transpose_output=True):
    """x, coverage: (B, S, 1); ln_alphas, ln_betas: (K,).

    Returns (B, S, K) float32 (module-compatible).  transpose_output=False
    returns the kernel-native (K, B, S) layout and skips the wrapper-side
    HBM transpose (fuse the relayout into the downstream consumer instead).
    """
    B, S, last = x.shape
    assert last == 1, "x last dim must be 1 (expanded over num_states)"
    assert coverage.shape == (B, S, 1)
    K = int(ln_alphas.shape[0])
    N = B * S

    # Per-state params; hoist the per-state lgamma constant (only K elements).
    a = jnp.exp(ln_alphas.astype(jnp.float32))
    b = jnp.exp(ln_betas.astype(jnp.float32))
    const_k = gammaln(a + b) - gammaln(a) - gammaln(b)

    # Pack the B*S positions densely into an (8, lanes) slab so every lgamma
    # runs at full vreg occupancy.  Padded positions have x=0, cov=0, keeping
    # every lgamma argument > 0 (their results are sliced away).
    tile, steps = _choose_tiling(N, tile_lanes)
    lanes = tile * steps
    n_pad = 8 * lanes
    x_flat = jnp.pad(x.reshape(N).astype(jnp.float32), (0, n_pad - N))
    c_flat = jnp.pad(coverage.reshape(N).astype(jnp.float32), (0, n_pad - N))
    x_d = x_flat.reshape(8, lanes)
    c_d = c_flat.reshape(8, lanes)

    out = pl.pallas_call(
        _bb_kernel,
        out_shape=jax.ShapeDtypeStruct((K, 8, lanes), jnp.float32),
        grid_spec=pltpu.PrefetchScalarGridSpec(
            num_scalar_prefetch=0,
            grid=(steps,),
            in_specs=[
                pl.BlockSpec((8, tile), lambda i: (0, i)),            # x (packed)
                pl.BlockSpec((8, tile), lambda i: (0, i)),            # coverage (packed)
                pl.BlockSpec(memory_space=pltpu.MemorySpace.SMEM),    # alphas (K,)
                pl.BlockSpec(memory_space=pltpu.MemorySpace.SMEM),    # betas (K,)
                pl.BlockSpec(memory_space=pltpu.MemorySpace.SMEM),    # per-state const (K,)
            ],
            out_specs=pl.BlockSpec((K, 8, tile), lambda i: (0, 0, i)),
        ),
        compiler_params=pltpu.CompilerParams(
            dimension_semantics=("parallel",)
        ),
    )(x_d, c_d, a, b, const_k)

    # (K, 8, lanes) -> (K, n_pad) is a free row-major reshape; slice padding.
    out = out.reshape(K, n_pad)[:, :N]
    if transpose_output:
        return out.T.reshape(B, S, K)      # module-compatible (B, S, K)
    return out.reshape(K, B, S)            # kernel-native layout, no extra HBM pass


if __name__ == "__main__":
    key = jax.random.PRNGKey(0)
    B, S, K = 2, 16, 8  # batch, sequence, num_states

    k1, k2 = jax.random.split(key)
    coverage = jax.random.randint(k1, (B, S, 1), 5, 40).astype(jnp.float32)
    frac = jax.random.uniform(k2, (B, S, 1))
    x = jnp.floor(frac * coverage)  # counts in [0, coverage]

    # Deterministic parameter init (one alpha/beta per state, as in __init__)
    init_alphas = np.linspace(1.0, 8.0, K).astype(np.float32)
    init_betas = np.linspace(8.0, 1.0, K).astype(np.float32)
    ln_alphas = jnp.log(jnp.asarray(init_alphas))
    ln_betas = jnp.log(jnp.asarray(init_betas))

    out = beta_binomial_embedding(x, coverage, ln_alphas, ln_betas)
    out = jax.block_until_ready(out)
    assert out.shape == (B, S, K)

    # Reference check in plain JAX (same math via jax.scipy.special.gammaln)
    a = jnp.exp(ln_alphas)
    b = jnp.exp(ln_betas)
    xe = jnp.broadcast_to(x, (B, S, K))
    ref = (
        gammaln(1.0 + coverage)
        + gammaln(xe + a)
        + gammaln(coverage - xe + b)
        + gammaln(a + b)
        - gammaln(coverage + a + b)
        - gammaln(xe + 1.0)
        - gammaln(coverage - xe + 1.0)
        - gammaln(a)
        - gammaln(b)
    )
    np.testing.assert_allclose(np.asarray(out), np.asarray(ref), rtol=5e-3, atol=5e-3)

    print("KERNEL_OK")
</pallas_src>

<mosaic_0001>
module attributes {stable_mosaic.version = 11 : i64} {
  func.func @_bb_kernel(%arg0: i32, %arg1: memref<8x128xf32, #tpu.memory_space<vmem>>, %arg2: memref<8x128xf32, #tpu.memory_space<vmem>>, %arg3: memref<8xf32, #tpu.memory_space<smem>>, %arg4: memref<8xf32, #tpu.memory_space<smem>>, %arg5: memref<8xf32, #tpu.memory_space<smem>>, %arg6: memref<8x8x128xf32, #tpu.memory_space<vmem>>) attributes {dimension_semantics = [#tpu.dimension_semantics<parallel>], iteration_bounds = array<i64: 1>, scalar_prefetch = 0 : i64, scratch_operands = 0 : i64, tpu.core_type = #tpu.core_type<tc>, window_params = [{transform_indices = @transform_0, window_bounds = array<i64: 8, 128>}, {transform_indices = @transform_1, window_bounds = array<i64: 8, 128>}, {transform_indices = @transform_2, window_bounds = array<i64: 8>}, {transform_indices = @transform_3, window_bounds = array<i64: 8>}, {transform_indices = @transform_4, window_bounds = array<i64: 8>}, {transform_indices = @transform_5, window_bounds = array<i64: 8, 8, 128>}]} {
    %c0 = arith.constant 0 : index
    %c0_0 = arith.constant 0 : index
    %0 = vector.load %arg1[%c0, %c0_0] : memref<8x128xf32, #tpu.memory_space<vmem>>, vector<8x128xf32>
    %c0_1 = arith.constant 0 : index
    %c0_2 = arith.constant 0 : index
    %1 = vector.load %arg2[%c0_1, %c0_2] : memref<8x128xf32, #tpu.memory_space<vmem>>, vector<8x128xf32>
    %2 = arith.subf %1, %0 : vector<8x128xf32>
    %cst = arith.constant 1.000000e+00 : f32
    %3 = vector.broadcast %cst : f32 to vector<8x128xf32>
    %4 = arith.addf %1, %3 : vector<8x128xf32>
    %5 = tpu.reciprocal %4 {approx = true} : vector<8x128xf32> -> vector<8x128xf32>
    %cst_3 = arith.constant 2.50662827 : f32
    %6 = vector.broadcast %cst_3 : f32 to vector<8x128xf32>
    %7 = arith.mulf %6, %5 : vector<8x128xf32>
    %cst_4 = arith.constant 29969.5938 : f32
    %8 = vector.broadcast %cst_4 : f32 to vector<8x128xf32>
    %9 = arith.mulf %8, %5 : vector<8x128xf32>
    %cst_5 = arith.constant 32281.0645 : f32
    %10 = vector.broadcast %cst_5 : f32 to vector<8x128xf32>
    %11 = arith.addf %9, %10 : vector<8x128xf32>
    %12 = arith.mulf %11, %5 : vector<8x128xf32>
    %cst_6 = arith.constant 14484.9141 : f32
    %13 = vector.broadcast %cst_6 : f32 to vector<8x128xf32>
    %14 = arith.addf %12, %13 : vector<8x128xf32>
    %15 = arith.mulf %14, %5 : vector<8x128xf32>
    %cst_7 = arith.constant 3465.70947 : f32
    %16 = vector.broadcast %cst_7 : f32 to vector<8x128xf32>
    %17 = arith.addf %15, %16 : vector<8x128xf32>
    %18 = arith.mulf %17, %5 : vector<8x128xf32>
    %cst_8 = arith.constant 466.334198 : f32
    %19 = vector.broadcast %cst_8 : f32 to vector<8x128xf32>
    %20 = arith.addf %18, %19 : vector<8x128xf32>
    %21 = arith.mulf %20, %5 : vector<8x128xf32>
    %cst_9 = arith.constant 33.4583321 : f32
    %22 = vector.broadcast %cst_9 : f32 to vector<8x128xf32>
    %23 = arith.addf %21, %22 : vector<8x128xf32>
    %24 = arith.mulf %23, %5 : vector<8x128xf32>
    %cst_10 = arith.constant 1.000000e+00 : f32
    %25 = vector.broadcast %cst_10 : f32 to vector<8x128xf32>
    %26 = arith.addf %24, %25 : vector<8x128xf32>
    %27 = arith.mulf %7, %26 : vector<8x128xf32>
    %cst_11 = arith.constant 7.200000e+02 : f32
    %28 = vector.broadcast %cst_11 : f32 to vector<8x128xf32>
    %29 = arith.mulf %28, %5 : vector<8x128xf32>
    %cst_12 = arith.constant 1.764000e+03 : f32
    %30 = vector.broadcast %cst_12 : f32 to vector<8x128xf32>
    %31 = arith.addf %29, %30 : vector<8x128xf32>
    %32 = arith.mulf %31, %5 : vector<8x128xf32>
    %cst_13 = arith.constant 1.624000e+03 : f32
    %33 = vector.broadcast %cst_13 : f32 to vector<8x128xf32>
    %34 = arith.addf %32, %33 : vector<8x128xf32>
    %35 = arith.mulf %34, %5 : vector<8x128xf32>
    %cst_14 = arith.constant 7.350000e+02 : f32
    %36 = vector.broadcast %cst_14 : f32 to vector<8x128xf32>
    %37 = arith.addf %35, %36 : vector<8x128xf32>
    %38 = arith.mulf %37, %5 : vector<8x128xf32>
    %cst_15 = arith.constant 1.750000e+02 : f32
    %39 = vector.broadcast %cst_15 : f32 to vector<8x128xf32>
    %40 = arith.addf %38, %39 : vector<8x128xf32>
    %41 = arith.mulf %40, %5 : vector<8x128xf32>
    %cst_16 = arith.constant 2.100000e+01 : f32
    %42 = vector.broadcast %cst_16 : f32 to vector<8x128xf32>
    %43 = arith.addf %41, %42 : vector<8x128xf32>
    %44 = arith.mulf %43, %5 : vector<8x128xf32>
    %cst_17 = arith.constant 1.000000e+00 : f32
    %45 = vector.broadcast %cst_17 : f32 to vector<8x128xf32>
    %46 = arith.addf %44, %45 : vector<8x128xf32>
    %47 = tpu.reciprocal %46 {approx = true} : vector<8x128xf32> -> vector<8x128xf32>
    %48 = arith.mulf %27, %47 : vector<8x128xf32>
    %cst_18 = arith.constant 5.500000e+00 : f32
    %49 = vector.broadcast %cst_18 : f32 to vector<8x128xf32>
    %50 = arith.addf %4, %49 : vector<8x128xf32>
    %cst_19 = arith.constant 5.000000e-01 : f32
    %51 = vector.broadcast %cst_19 : f32 to vector<8x128xf32>
    %52 = arith.addf %4, %51 : vector<8x128xf32>
    %53 = math.log %50 : vector<8x128xf32>
    %54 = arith.mulf %52, %53 : vector<8x128xf32>
    %55 = arith.subf %54, %50 : vector<8x128xf32>
    %56 = math.log %48 : vector<8x128xf32>
    %57 = arith.addf %55, %56 : vector<8x128xf32>
    %cst_20 = arith.constant 1.000000e+00 : f32
    %58 = vector.broadcast %cst_20 : f32 to vector<8x128xf32>
    %59 = arith.addf %0, %58 : vector<8x128xf32>
    %60 = tpu.reciprocal %59 {approx = true} : vector<8x128xf32> -> vector<8x128xf32>
    %cst_21 = arith.constant 2.50662827 : f32
    %61 = vector.broadcast %cst_21 : f32 to vector<8x128xf32>
    %62 = arith.mulf %61, %60 : vector<8x128xf32>
    %cst_22 = arith.constant 29969.5938 : f32
    %63 = vector.broadcast %cst_22 : f32 to vector<8x128xf32>
    %64 = arith.mulf %63, %60 : vector<8x128xf32>
    %cst_23 = arith.constant 32281.0645 : f32
    %65 = vector.broadcast %cst_23 : f32 to vector<8x128xf32>
    %66 = arith.addf %64, %65 : vector<8x128xf32>
    %67 = arith.mulf %66, %60 : vector<8x128xf32>
    %cst_24 = arith.constant 14484.9141 : f32
    %68 = vector.broadcast %cst_24 : f32 to vector<8x128xf32>
    %69 = arith.addf %67, %68 : vector<8x128xf32>
    %70 = arith.mulf %69, %60 : vector<8x128xf32>
    %cst_25 = arith.constant 3465.70947 : f32
    %71 = vector.broadcast %cst_25 : f32 to vector<8x128xf32>
    %72 = arith.addf %70, %71 : vector<8x128xf32>
    %73 = arith.mulf %72, %60 : vector<8x128xf32>
    %cst_26 = arith.constant 466.334198 : f32
    %74 = vector.broadcast %cst_26 : f32 to vector<8x128xf32>
    %75 = arith.addf %73, %74 : vector<8x128xf32>
    %76 = arith.mulf %75, %60 : vector<8x128xf32>
    %cst_27 = arith.constant 33.4583321 : f32
    %77 = vector.broadcast %cst_27 : f32 to vector<8x128xf32>
    %78 = arith.addf %76, %77 : vector<8x128xf32>
    %79 = arith.mulf %78, %60 : vector<8x128xf32>
    %cst_28 = arith.constant 1.000000e+00 : f32
    %80 = vector.broadcast %cst_28 : f32 to vector<8x128xf32>
    %81 = arith.addf %79, %80 : vector<8x128xf32>
    %82 = arith.mulf %62, %81 : vector<8x128xf32>
    %cst_29 = arith.constant 7.200000e+02 : f32
    %83 = vector.broadcast %cst_29 : f32 to vector<8x128xf32>
    %84 = arith.mulf %83, %60 : vector<8x128xf32>
    %cst_30 = arith.constant 1.764000e+03 : f32
    %85 = vector.broadcast %cst_30 : f32 to vector<8x128xf32>
    %86 = arith.addf %84, %85 : vector<8x128xf32>
    %87 = arith.mulf %86, %60 : vector<8x128xf32>
    %cst_31 = arith.constant 1.624000e+03 : f32
    %88 = vector.broadcast %cst_31 : f32 to vector<8x128xf32>
    %89 = arith.addf %87, %88 : vector<8x128xf32>
    %90 = arith.mulf %89, %60 : vector<8x128xf32>
    %cst_32 = arith.constant 7.350000e+02 : f32
    %91 = vector.broadcast %cst_32 : f32 to vector<8x128xf32>
    %92 = arith.addf %90, %91 : vector<8x128xf32>
    %93 = arith.mulf %92, %60 : vector<8x128xf32>
    %cst_33 = arith.constant 1.750000e+02 : f32
    %94 = vector.broadcast %cst_33 : f32 to vector<8x128xf32>
    %95 = arith.addf %93, %94 : vector<8x128xf32>
    %96 = arith.mulf %95, %60 : vector<8x128xf32>
    %cst_34 = arith.constant 2.100000e+01 : f32
    %97 = vector.broadcast %cst_34 : f32 to vector<8x128xf32>
    %98 = arith.addf %96, %97 : vector<8x128xf32>
    %99 = arith.mulf %98, %60 : vector<8x128xf32>
    %cst_35 = arith.constant 1.000000e+00 : f32
    %100 = vector.broadcast %cst_35 : f32 to vector<8x128xf32>
    %101 = arith.addf %99, %100 : vector<8x128xf32>
    %102 = tpu.reciprocal %101 {approx = true} : vector<8x128xf32> -> vector<8x128xf32>
    %103 = arith.mulf %82, %102 : vector<8x128xf32>
    %cst_36 = arith.constant 5.500000e+00 : f32
    %104 = vector.broadcast %cst_36 : f32 to vector<8x128xf32>
    %105 = arith.addf %59, %104 : vector<8x128xf32>
    %cst_37 = arith.constant 5.000000e-01 : f32
    %106 = vector.broadcast %cst_37 : f32 to vector<8x128xf32>
    %107 = arith.addf %59, %106 : vector<8x128xf32>
    %108 = math.log %105 : vector<8x128xf32>
    %109 = arith.mulf %107, %108 : vector<8x128xf32>
    %110 = arith.subf %109, %105 : vector<8x128xf32>
    %111 = math.log %103 : vector<8x128xf32>
    %112 = arith.addf %110, %111 : vector<8x128xf32>
    %113 = arith.subf %57, %112 : vector<8x128xf32>
    %cst_38 = arith.constant 1.000000e+00 : f32
    %114 = vector.broadcast %cst_38 : f32 to vector<8x128xf32>
    %115 = arith.addf %2, %114 : vector<8x128xf32>
    %116 = tpu.reciprocal %115 {approx = true} : vector<8x128xf32> -> vector<8x128xf32>
    %cst_39 = arith.constant 2.50662827 : f32
    %117 = vector.broadcast %cst_39 : f32 to vector<8x128xf32>
    %118 = arith.mulf %117, %116 : vector<8x128xf32>
    %cst_40 = arith.constant 29969.5938 : f32
    %119 = vector.broadcast %cst_40 : f32 to vector<8x128xf32>
    %120 = arith.mulf %119, %116 : vector<8x128xf32>
    %cst_41 = arith.constant 32281.0645 : f32
    %121 = vector.broadcast %cst_41 : f32 to vector<8x128xf32>
    %122 = arith.addf %120, %121 : vector<8x128xf32>
    %123 = arith.mulf %122, %116 : vector<8x128xf32>
    %cst_42 = arith.constant 14484.9141 : f32
    %124 = vector.broadcast %cst_42 : f32 to vector<8x128xf32>
    %125 = arith.addf %123, %124 : vector<8x128xf32>
    %126 = arith.mulf %125, %116 : vector<8x128xf32>
    %cst_43 = arith.constant 3465.70947 : f32
    %127 = vector.broadcast %cst_43 : f32 to vector<8x128xf32>
    %128 = arith.addf %126, %127 : vector<8x128xf32>
    %129 = arith.mulf %128, %116 : vector<8x128xf32>
    %cst_44 = arith.constant 466.334198 : f32
    %130 = vector.broadcast %cst_44 : f32 to vector<8x128xf32>
    %131 = arith.addf %129, %130 : vector<8x128xf32>
    %132 = arith.mulf %131, %116 : vector<8x128xf32>
    %cst_45 = arith.constant 33.4583321 : f32
    %133 = vector.broadcast %cst_45 : f32 to vector<8x128xf32>
    %134 = arith.addf %132, %133 : vector<8x128xf32>
    %135 = arith.mulf %134, %116 : vector<8x128xf32>
    %cst_46 = arith.constant 1.000000e+00 : f32
    %136 = vector.broadcast %cst_46 : f32 to vector<8x128xf32>
    %137 = arith.addf %135, %136 : vector<8x128xf32>
    %138 = arith.mulf %118, %137 : vector<8x128xf32>
    %cst_47 = arith.constant 7.200000e+02 : f32
    %139 = vector.broadcast %cst_47 : f32 to vector<8x128xf32>
    %140 = arith.mulf %139, %116 : vector<8x128xf32>
    %cst_48 = arith.constant 1.764000e+03 : f32
    %141 = vector.broadcast %cst_48 : f32 to vector<8x128xf32>
    %142 = arith.addf %140, %141 : vector<8x128xf32>
    %143 = arith.mulf %142, %116 : vector<8x128xf32>
    %cst_49 = arith.constant 1.624000e+03 : f32
    %144 = vector.broadcast %cst_49 : f32 to vector<8x128xf32>
    %145 = arith.addf %143, %144 : vector<8x128xf32>
    %146 = arith.mulf %145, %116 : vector<8x128xf32>
    %cst_50 = arith.constant 7.350000e+02 : f32
    %147 = vector.broadcast %cst_50 : f32 to vector<8x128xf32>
    %148 = arith.addf %146, %147 : vector<8x128xf32>
    %149 = arith.mulf %148, %116 : vector<8x128xf32>
    %cst_51 = arith.constant 1.750000e+02 : f32
    %150 = vector.broadcast %cst_51 : f32 to vector<8x128xf32>
    %151 = arith.addf %149, %150 : vector<8x128xf32>
    %152 = arith.mulf %151, %116 : vector<8x128xf32>
    %cst_52 = arith.constant 2.100000e+01 : f32
    %153 = vector.broadcast %cst_52 : f32 to vector<8x128xf32>
    %154 = arith.addf %152, %153 : vector<8x128xf32>
    %155 = arith.mulf %154, %116 : vector<8x128xf32>
    %cst_53 = arith.constant 1.000000e+00 : f32
    %156 = vector.broadcast %cst_53 : f32 to vector<8x128xf32>
    %157 = arith.addf %155, %156 : vector<8x128xf32>
    %158 = tpu.reciprocal %157 {approx = true} : vector<8x128xf32> -> vector<8x128xf32>
    %159 = arith.mulf %138, %158 : vector<8x128xf32>
    %cst_54 = arith.constant 5.500000e+00 : f32
    %160 = vector.broadcast %cst_54 : f32 to vector<8x128xf32>
    %161 = arith.addf %115, %160 : vector<8x128xf32>
    %cst_55 = arith.constant 5.000000e-01 : f32
    %162 = vector.broadcast %cst_55 : f32 to vector<8x128xf32>
    %163 = arith.addf %115, %162 : vector<8x128xf32>
    %164 = math.log %161 : vector<8x128xf32>
    %165 = arith.mulf %163, %164 : vector<8x128xf32>
    %166 = arith.subf %165, %161 : vector<8x128xf32>
    %167 = math.log %159 : vector<8x128xf32>
    %168 = arith.addf %166, %167 : vector<8x128xf32>
    %169 = arith.subf %113, %168 : vector<8x128xf32>
    %c0_56 = arith.constant 0 : index
    %170 = memref.load %arg3[%c0_56] : memref<8xf32, #tpu.memory_space<smem>>
    %c0_57 = arith.constant 0 : index
    %171 = memref.load %arg4[%c0_57] : memref<8xf32, #tpu.memory_space<smem>>
    %172 = vector.broadcast %170 : f32 to vector<8x128xf32>
    %173 = arith.addf %0, %172 : vector<8x128xf32>
    %174 = tpu.reciprocal %173 {approx = true} : vector<8x128xf32> -> vector<8x128xf32>
    %cst_58 = arith.constant 2.50662827 : f32
    %175 = vector.broadcast %cst_58 : f32 to vector<8x128xf32>
    %176 = arith.mulf %175, %174 : vector<8x128xf32>
    %cst_59 = arith.constant 29969.5938 : f32
    %177 = vector.broadcast %cst_59 : f32 to vector<8x128xf32>
    %178 = arith.mulf %177, %174 : vector<8x128xf32>
    %cst_60 = arith.constant 32281.0645 : f32
    %179 = vector.broadcast %cst_60 : f32 to vector<8x128xf32>
    %180 = arith.addf %178, %179 : vector<8x128xf32>
    %181 = arith.mulf %180, %174 : vector<8x128xf32>
    %cst_61 = arith.constant 14484.9141 : f32
    %182 = vector.broadcast %cst_61 : f32 to vector<8x128xf32>
    %183 = arith.addf %181, %182 : vector<8x128xf32>
    %184 = arith.mulf %183, %174 : vector<8x128xf32>
    %cst_62 = arith.constant 3465.70947 : f32
    %185 = vector.broadcast %cst_62 : f32 to vector<8x128xf32>
    %186 = arith.addf %184, %185 : vector<8x128xf32>
    %187 = arith.mulf %186, %174 : vector<8x128xf32>
    %cst_63 = arith.constant 466.334198 : f32
    %188 = vector.broadcast %cst_63 : f32 to vector<8x128xf32>
    %189 = arith.addf %187, %188 : vector<8x128xf32>
    %190 = arith.mulf %189, %174 : vector<8x128xf32>
    %cst_64 = arith.constant 33.4583321 : f32
    %191 = vector.broadcast %cst_64 : f32 to vector<8x128xf32>
    %192 = arith.addf %190, %191 : vector<8x128xf32>
    %193 = arith.mulf %192, %174 : vector<8x128xf32>
    %cst_65 = arith.constant 1.000000e+00 : f32
    %194 = vector.broadcast %cst_65 : f32 to vector<8x128xf32>
    %195 = arith.addf %193, %194 : vector<8x128xf32>
    %196 = arith.mulf %176, %195 : vector<8x128xf32>
    %cst_66 = arith.constant 7.200000e+02 : f32
    %197 = vector.broadcast %cst_66 : f32 to vector<8x128xf32>
    %198 = arith.mulf %197, %174 : vector<8x128xf32>
    %cst_67 = arith.constant 1.764000e+03 : f32
    %199 = vector.broadcast %cst_67 : f32 to vector<8x128xf32>
    %200 = arith.addf %198, %199 : vector<8x128xf32>
    %201 = arith.mulf %200, %174 : vector<8x128xf32>
    %cst_68 = arith.constant 1.624000e+03 : f32
    %202 = vector.broadcast %cst_68 : f32 to vector<8x128xf32>
    %203 = arith.addf %201, %202 : vector<8x128xf32>
    %204 = arith.mulf %203, %174 : vector<8x128xf32>
    %cst_69 = arith.constant 7.350000e+02 : f32
    %205 = vector.broadcast %cst_69 : f32 to vector<8x128xf32>
    %206 = arith.addf %204, %205 : vector<8x128xf32>
    %207 = arith.mulf %206, %174 : vector<8x128xf32>
    %cst_70 = arith.constant 1.750000e+02 : f32
    %208 = vector.broadcast %cst_70 : f32 to vector<8x128xf32>
    %209 = arith.addf %207, %208 : vector<8x128xf32>
    %210 = arith.mulf %209, %174 : vector<8x128xf32>
    %cst_71 = arith.constant 2.100000e+01 : f32
    %211 = vector.broadcast %cst_71 : f32 to vector<8x128xf32>
    %212 = arith.addf %210, %211 : vector<8x128xf32>
    %213 = arith.mulf %212, %174 : vector<8x128xf32>
    %cst_72 = arith.constant 1.000000e+00 : f32
    %214 = vector.broadcast %cst_72 : f32 to vector<8x128xf32>
    %215 = arith.addf %213, %214 : vector<8x128xf32>
    %216 = tpu.reciprocal %215 {approx = true} : vector<8x128xf32> -> vector<8x128xf32>
    %217 = arith.mulf %196, %216 : vector<8x128xf32>
    %cst_73 = arith.constant 5.500000e+00 : f32
    %218 = vector.broadcast %cst_73 : f32 to vector<8x128xf32>
    %219 = arith.addf %173, %218 : vector<8x128xf32>
    %cst_74 = arith.constant 5.000000e-01 : f32
    %220 = vector.broadcast %cst_74 : f32 to vector<8x128xf32>
    %221 = arith.addf %173, %220 : vector<8x128xf32>
    %222 = math.log %219 : vector<8x128xf32>
    %223 = arith.mulf %221, %222 : vector<8x128xf32>
    %224 = arith.subf %223, %219 : vector<8x128xf32>
    %225 = math.log %217 : vector<8x128xf32>
    %226 = arith.addf %224, %225 : vector<8x128xf32>
    %227 = vector.broadcast %171 : f32 to vector<8x128xf32>
    %228 = arith.addf %2, %227 : vector<8x128xf32>
    %229 = tpu.reciprocal %228 {approx = true} : vector<8x128xf32> -> vector<8x128xf32>
    %cst_75 = arith.constant 2.50662827 : f32
    %230 = vector.broadcast %cst_75 : f32 to vector<8x128xf32>
    %231 = arith.mulf %230, %229 : vector<8x128xf32>
    %cst_76 = arith.constant 29969.5938 : f32
    %232 = vector.broadcast %cst_76 : f32 to vector<8x128xf32>
    %233 = arith.mulf %232, %229 : vector<8x128xf32>
    %cst_77 = arith.constant 32281.0645 : f32
    %234 = vector.broadcast %cst_77 : f32 to vector<8x128xf32>
    %235 = arith.addf %233, %234 : vector<8x128xf32>
    %236 = arith.mulf %235, %229 : vector<8x128xf32>
    %cst_78 = arith.constant 14484.9141 : f32
    %237 = vector.broadcast %cst_78 : f32 to vector<8x128xf32>
    %238 = arith.addf %236, %237 : vector<8x128xf32>
    %239 = arith.mulf %238, %229 : vector<8x128xf32>
    %cst_79 = arith.constant 3465.70947 : f32
    %240 = vector.broadcast %cst_79 : f32 to vector<8x128xf32>
    %241 = arith.addf %239, %240 : vector<8x128xf32>
    %242 = arith.mulf %241, %229 : vector<8x128xf32>
    %cst_80 = arith.constant 466.334198 : f32
    %243 = vector.broadcast %cst_80 : f32 to vector<8x128xf32>
    %244 = arith.addf %242, %243 : vector<8x128xf32>
    %245 = arith.mulf %244, %229 : vector<8x128xf32>
    %cst_81 = arith.constant 33.4583321 : f32
    %246 = vector.broadcast %cst_81 : f32 to vector<8x128xf32>
    %247 = arith.addf %245, %246 : vector<8x128xf32>
    %248 = arith.mulf %247, %229 : vector<8x128xf32>
    %cst_82 = arith.constant 1.000000e+00 : f32
    %249 = vector.broadcast %cst_82 : f32 to vector<8x128xf32>
    %250 = arith.addf %248, %249 : vector<8x128xf32>
    %251 = arith.mulf %231, %250 : vector<8x128xf32>
    %cst_83 = arith.constant 7.200000e+02 : f32
    %252 = vector.broadcast %cst_83 : f32 to vector<8x128xf32>
    %253 = arith.mulf %252, %229 : vector<8x128xf32>
    %cst_84 = arith.constant 1.764000e+03 : f32
    %254 = vector.broadcast %cst_84 : f32 to vector<8x128xf32>
    %255 = arith.addf %253, %254 : vector<8x128xf32>
    %256 = arith.mulf %255, %229 : vector<8x128xf32>
    %cst_85 = arith.constant 1.624000e+03 : f32
    %257 = vector.broadcast %cst_85 : f32 to vector<8x128xf32>
    %258 = arith.addf %256, %257 : vector<8x128xf32>
    %259 = arith.mulf %258, %229 : vector<8x128xf32>
    %cst_86 = arith.constant 7.350000e+02 : f32
    %260 = vector.broadcast %cst_86 : f32 to vector<8x128xf32>
    %261 = arith.addf %259, %260 : vector<8x128xf32>
    %262 = arith.mulf %261, %229 : vector<8x128xf32>
    %cst_87 = arith.constant 1.750000e+02 : f32
    %263 = vector.broadcast %cst_87 : f32 to vector<8x128xf32>
    %264 = arith.addf %262, %263 : vector<8x128xf32>
    %265 = arith.mulf %264, %229 : vector<8x128xf32>
    %cst_88 = arith.constant 2.100000e+01 : f32
    %266 = vector.broadcast %cst_88 : f32 to vector<8x128xf32>
    %267 = arith.addf %265, %266 : vector<8x128xf32>
    %268 = arith.mulf %267, %229 : vector<8x128xf32>
    %cst_89 = arith.constant 1.000000e+00 : f32
    %269 = vector.broadcast %cst_89 : f32 to vector<8x128xf32>
    %270 = arith.addf %268, %269 : vector<8x128xf32>
    %271 = tpu.reciprocal %270 {approx = true} : vector<8x128xf32> -> vector<8x128xf32>
    %272 = arith.mulf %251, %271 : vector<8x128xf32>
    %cst_90 = arith.constant 5.500000e+00 : f32
    %273 = vector.broadcast %cst_90 : f32 to vector<8x128xf32>
    %274 = arith.addf %228, %273 : vector<8x128xf32>
    %cst_91 = arith.constant 5.000000e-01 : f32
    %275 = vector.broadcast %cst_91 : f32 to vector<8x128xf32>
    %276 = arith.addf %228, %275 : vector<8x128xf32>
    %277 = math.log %274 : vector<8x128xf32>
    %278 = arith.mulf %276, %277 : vector<8x128xf32>
    %279 = arith.subf %278, %274 : vector<8x128xf32>
    %280 = math.log %272 : vector<8x128xf32>
    %281 = arith.addf %279, %280 : vector<8x128xf32>
    %282 = arith.addf %226, %281 : vector<8x128xf32>
    %283 = arith.addf %170, %171 : f32
    %284 = vector.broadcast %283 : f32 to vector<8x128xf32>
    %285 = arith.addf %1, %284 : vector<8x128xf32>
    %286 = tpu.reciprocal %285 {approx = true} : vector<8x128xf32> -> vector<8x128xf32>
    %cst_92 = arith.constant 2.50662827 : f32
    %287 = vector.broadcast %cst_92 : f32 to vector<8x128xf32>
    %288 = arith.mulf %287, %286 : vector<8x128xf32>
    %cst_93 = arith.constant 29969.5938 : f32
    %289 = vector.broadcast %cst_93 : f32 to vector<8x128xf32>
    %290 = arith.mulf %289, %286 : vector<8x128xf32>
    %cst_94 = arith.constant 32281.0645 : f32
    %291 = vector.broadcast %cst_94 : f32 to vector<8x128xf32>
    %292 = arith.addf %290, %291 : vector<8x128xf32>
    %293 = arith.mulf %292, %286 : vector<8x128xf32>
    %cst_95 = arith.constant 14484.9141 : f32
    %294 = vector.broadcast %cst_95 : f32 to vector<8x128xf32>
    %295 = arith.addf %293, %294 : vector<8x128xf32>
    %296 = arith.mulf %295, %286 : vector<8x128xf32>
    %cst_96 = arith.constant 3465.70947 : f32
    %297 = vector.broadcast %cst_96 : f32 to vector<8x128xf32>
    %298 = arith.addf %296, %297 : vector<8x128xf32>
    %299 = arith.mulf %298, %286 : vector<8x128xf32>
    %cst_97 = arith.constant 466.334198 : f32
    %300 = vector.broadcast %cst_97 : f32 to vector<8x128xf32>
    %301 = arith.addf %299, %300 : vector<8x128xf32>
    %302 = arith.mulf %301, %286 : vector<8x128xf32>
    %cst_98 = arith.constant 33.4583321 : f32
    %303 = vector.broadcast %cst_98 : f32 to vector<8x128xf32>
    %304 = arith.addf %302, %303 : vector<8x128xf32>
    %305 = arith.mulf %304, %286 : vector<8x128xf32>
    %cst_99 = arith.constant 1.000000e+00 : f32
    %306 = vector.broadcast %cst_99 : f32 to vector<8x128xf32>
    %307 = arith.addf %305, %306 : vector<8x128xf32>
    %308 = arith.mulf %288, %307 : vector<8x128xf32>
    %cst_100 = arith.constant 7.200000e+02 : f32
    %309 = vector.broadcast %cst_100 : f32 to vector<8x128xf32>
    %310 = arith.mulf %309, %286 : vector<8x128xf32>
    %cst_101 = arith.constant 1.764000e+03 : f32
    %311 = vector.broadcast %cst_101 : f32 to vector<8x128xf32>
    %312 = arith.addf %310, %311 : vector<8x128xf32>
    %313 = arith.mulf %312, %286 : vector<8x128xf32>
    %cst_102 = arith.constant 1.624000e+03 : f32
    %314 = vector.broadcast %cst_102 : f32 to vector<8x128xf32>
    %315 = arith.addf %313, %314 : vector<8x128xf32>
    %316 = arith.mulf %315, %286 : vector<8x128xf32>
    %cst_103 = arith.constant 7.350000e+02 : f32
    %317 = vector.broadcast %cst_103 : f32 to vector<8x128xf32>
    %318 = arith.addf %316, %317 : vector<8x128xf32>
    %319 = arith.mulf %318, %286 : vector<8x128xf32>
    %cst_104 = arith.constant 1.750000e+02 : f32
    %320 = vector.broadcast %cst_104 : f32 to vector<8x128xf32>
    %321 = arith.addf %319, %320 : vector<8x128xf32>
    %322 = arith.mulf %321, %286 : vector<8x128xf32>
    %cst_105 = arith.constant 2.100000e+01 : f32
    %323 = vector.broadcast %cst_105 : f32 to vector<8x128xf32>
    %324 = arith.addf %322, %323 : vector<8x128xf32>
    %325 = arith.mulf %324, %286 : vector<8x128xf32>
    %cst_106 = arith.constant 1.000000e+00 : f32
    %326 = vector.broadcast %cst_106 : f32 to vector<8x128xf32>
    %327 = arith.addf %325, %326 : vector<8x128xf32>
    %328 = tpu.reciprocal %327 {approx = true} : vector<8x128xf32> -> vector<8x128xf32>
    %329 = arith.mulf %308, %328 : vector<8x128xf32>
    %cst_107 = arith.constant 5.500000e+00 : f32
    %330 = vector.broadcast %cst_107 : f32 to vector<8x128xf32>
    %331 = arith.addf %285, %330 : vector<8x128xf32>
    %cst_108 = arith.constant 5.000000e-01 : f32
    %332 = vector.broadcast %cst_108 : f32 to vector<8x128xf32>
    %333 = arith.addf %285, %332 : vector<8x128xf32>
    %334 = math.log %331 : vector<8x128xf32>
    %335 = arith.mulf %333, %334 : vector<8x128xf32>
    %336 = arith.subf %335, %331 : vector<8x128xf32>
    %337 = math.log %329 : vector<8x128xf32>
    %338 = arith.addf %336, %337 : vector<8x128xf32>
    %339 = arith.subf %282, %338 : vector<8x128xf32>
    %340 = arith.addf %339, %169 : vector<8x128xf32>
    %c0_109 = arith.constant 0 : index
    %341 = memref.load %arg5[%c0_109] : memref<8xf32, #tpu.memory_space<smem>>
    %342 = vector.broadcast %341 : f32 to vector<8x128xf32>
    %343 = arith.addf %340, %342 : vector<8x128xf32>
    %c0_110 = arith.constant 0 : index
    %c0_111 = arith.constant 0 : index
    %c0_112 = arith.constant 0 : index
    %344 = vector.load %arg6[%c0_110, %c0_111, %c0_112] : memref<8x8x128xf32, #tpu.memory_space<vmem>>, vector<1x8x128xf32>
    %345 = vector.shape_cast %344 : vector<1x8x128xf32> to vector<8x128xf32>
    %346 = vector.shape_cast %343 : vector<8x128xf32> to vector<1x8x128xf32>
    tpu.vector_store %arg6[%c0_110, %c0_111, %c0_112], %346 {strides = array<i32>} : memref<8x8x128xf32, #tpu.memory_space<vmem>>, vector<1x8x128xf32>,
    %c1 = arith.constant 1 : index
    %347 = memref.load %arg3[%c1] : memref<8xf32, #tpu.memory_space<smem>>
    %c1_113 = arith.constant 1 : index
    %348 = memref.load %arg4[%c1_113] : memref<8xf32, #tpu.memory_space<smem>>
    %349 = vector.broadcast %347 : f32 to vector<8x128xf32>
    %350 = arith.addf %0, %349 : vector<8x128xf32>
    %351 = tpu.reciprocal %350 {approx = true} : vector<8x128xf32> -> vector<8x128xf32>
    %cst_114 = arith.constant 2.50662827 : f32
    %352 = vector.broadcast %cst_114 : f32 to vector<8x128xf32>
    %353 = arith.mulf %352, %351 : vector<8x128xf32>
    %cst_115 = arith.constant 29969.5938 : f32
    %354 = vector.broadcast %cst_115 : f32 to vector<8x128xf32>
    %355 = arith.mulf %354, %351 : vector<8x128xf32>
    %cst_116 = arith.constant 32281.0645 : f32
    %356 = vector.broadcast %cst_116 : f32 to vector<8x128xf32>
    %357 = arith.addf %355, %356 : vector<8x128xf32>
    %358 = arith.mulf %357, %351 : vector<8x128xf32>
    %cst_117 = arith.constant 14484.9141 : f32
    %359 = vector.broadcast %cst_117 : f32 to vector<8x128xf32>
    %360 = arith.addf %358, %359 : vector<8x128xf32>
    %361 = arith.mulf %360, %351 : vector<8x128xf32>
    %cst_118 = arith.constant 3465.70947 : f32
    %362 = vector.broadcast %cst_118 : f32 to vector<8x128xf32>
    %363 = arith.addf %361, %362 : vector<8x128xf32>
    %364 = arith.mulf %363, %351 : vector<8x128xf32>
    %cst_119 = arith.constant 466.334198 : f32
    %365 = vector.broadcast %cst_119 : f32 to vector<8x128xf32>
    %366 = arith.addf %364, %365 : vector<8x128xf32>
    %367 = arith.mulf %366, %351 : vector<8x128xf32>
    %cst_120 = arith.constant 33.4583321 : f32
    %368 = vector.broadcast %cst_120 : f32 to vector<8x128xf32>
    %369 = arith.addf %367, %368 : vector<8x128xf32>
    %370 = arith.mulf %369, %351 : vector<8x128xf32>
    %cst_121 = arith.constant 1.000000e+00 : f32
    %371 = vector.broadcast %cst_121 : f32 to vector<8x128xf32>
    %372 = arith.addf %370, %371 : vector<8x128xf32>
    %373 = arith.mulf %353, %372 : vector<8x128xf32>
    %cst_122 = arith.constant 7.200000e+02 : f32
    %374 = vector.broadcast %cst_122 : f32 to vector<8x128xf32>
    %375 = arith.mulf %374, %351 : vector<8x128xf32>
    %cst_123 = arith.constant 1.764000e+03 : f32
    %376 = vector.broadcast %cst_123 : f32 to vector<8x128xf32>
    %377 = arith.addf %375, %376 : vector<8x128xf32>
    %378 = arith.mulf %377, %351 : vector<8x128xf32>
    %cst_124 = arith.constant 1.624000e+03 : f32
    %379 = vector.broadcast %cst_124 : f32 to vector<8x128xf32>
    %380 = arith.addf %378, %379 : vector<8x128xf32>
    %381 = arith.mulf %380, %351 : vector<8x128xf32>
    %cst_125 = arith.constant 7.350000e+02 : f32
    %382 = vector.broadcast %cst_125 : f32 to vector<8x128xf32>
    %383 = arith.addf %381, %382 : vector<8x128xf32>
    %384 = arith.mulf %383, %351 : vector<8x128xf32>
    %cst_126 = arith.constant 1.750000e+02 : f32
    %385 = vector.broadcast %cst_126 : f32 to vector<8x128xf32>
    %386 = arith.addf %384, %385 : vector<8x128xf32>
    %387 = arith.mulf %386, %351 : vector<8x128xf32>
    %cst_127 = arith.constant 2.100000e+01 : f32
    %388 = vector.broadcast %cst_127 : f32 to vector<8x128xf32>
    %389 = arith.addf %387, %388 : vector<8x128xf32>
    %390 = arith.mulf %389, %351 : vector<8x128xf32>
    %cst_128 = arith.constant 1.000000e+00 : f32
    %391 = vector.broadcast %cst_128 : f32 to vector<8x128xf32>
    %392 = arith.addf %390, %391 : vector<8x128xf32>
    %393 = tpu.reciprocal %392 {approx = true} : vector<8x128xf32> -> vector<8x128xf32>
    %394 = arith.mulf %373, %393 : vector<8x128xf32>
    %cst_129 = arith.constant 5.500000e+00 : f32
    %395 = vector.broadcast %cst_129 : f32 to vector<8x128xf32>
    %396 = arith.addf %350, %395 : vector<8x128xf32>
    %cst_130 = arith.constant 5.000000e-01 : f32
    %397 = vector.broadcast %cst_130 : f32 to vector<8x128xf32>
    %398 = arith.addf %350, %397 : vector<8x128xf32>
    %399 = math.log %396 : vector<8x128xf32>
    %400 = arith.mulf %398, %399 : vector<8x128xf32>
    %401 = arith.subf %400, %396 : vector<8x128xf32>
    %402 = math.log %394 : vector<8x128xf32>
    %403 = arith.addf %401, %402 : vector<8x128xf32>
    %404 = vector.broadcast %348 : f32 to vector<8x128xf32>
    %405 = arith.addf %2, %404 : vector<8x128xf32>
    %406 = tpu.reciprocal %405 {approx = true} : vector<8x128xf32> -> vector<8x128xf32>
    %cst_131 = arith.constant 2.50662827 : f32
    %407 = vector.broadcast %cst_131 : f32 to vector<8x128xf32>
    %408 = arith.mulf %407, %406 : vector<8x128xf32>
    %cst_132 = arith.constant 29969.5938 : f32
    %409 = vector.broadcast %cst_132 : f32 to vector<8x128xf32>
    %410 = arith.mulf %409, %406 : vector<8x128xf32>
    %cst_133 = arith.constant 32281.0645 : f32
    %411 = vector.broadcast %cst_133 : f32 to vector<8x128xf32>
    %412 = arith.addf %410, %411 : vector<8x128xf32>
    %413 = arith.mulf %412, %406 : vector<8x128xf32>
    %cst_134 = arith.constant 14484.9141 : f32
    %414 = vector.broadcast %cst_134 : f32 to vector<8x128xf32>
    %415 = arith.addf %413, %414 : vector<8x128xf32>
    %416 = arith.mulf %415, %406 : vector<8x128xf32>
    %cst_135 = arith.constant 3465.70947 : f32
    %417 = vector.broadcast %cst_135 : f32 to vector<8x128xf32>
    %418 = arith.addf %416, %417 : vector<8x128xf32>
    %419 = arith.mulf %418, %406 : vector<8x128xf32>
    %cst_136 = arith.constant 466.334198 : f32
    %420 = vector.broadcast %cst_136 : f32 to vector<8x128xf32>
    %421 = arith.addf %419, %420 : vector<8x128xf32>
    %422 = arith.mulf %421, %406 : vector<8x128xf32>
    %cst_137 = arith.constant 33.4583321 : f32
    %423 = vector.broadcast %cst_137 : f32 to vector<8x128xf32>
    %424 = arith.addf %422, %423 : vector<8x128xf32>
    %425 = arith.mulf %424, %406 : vector<8x128xf32>
    %cst_138 = arith.constant 1.000000e+00 : f32
    %426 = vector.broadcast %cst_138 : f32 to vector<8x128xf32>
    %427 = arith.addf %425, %426 : vector<8x128xf32>
    %428 = arith.mulf %408, %427 : vector<8x128xf32>
    %cst_139 = arith.constant 7.200000e+02 : f32
    %429 = vector.broadcast %cst_139 : f32 to vector<8x128xf32>
    %430 = arith.mulf %429, %406 : vector<8x128xf32>
    %cst_140 = arith.constant 1.764000e+03 : f32
    %431 = vector.broadcast %cst_140 : f32 to vector<8x128xf32>
    %432 = arith.addf %430, %431 : vector<8x128xf32>
    %433 = arith.mulf %432, %406 : vector<8x128xf32>
    %cst_141 = arith.constant 1.624000e+03 : f32
    %434 = vector.broadcast %cst_141 : f32 to vector<8x128xf32>
    %435 = arith.addf %433, %434 : vector<8x128xf32>
    %436 = arith.mulf %435, %406 : vector<8x128xf32>
    %cst_142 = arith.constant 7.350000e+02 : f32
    %437 = vector.broadcast %cst_142 : f32 to vector<8x128xf32>
    %438 = arith.addf %436, %437 : vector<8x128xf32>
    %439 = arith.mulf %438, %406 : vector<8x128xf32>
    %cst_143 = arith.constant 1.750000e+02 : f32
    %440 = vector.broadcast %cst_143 : f32 to vector<8x128xf32>
    %441 = arith.addf %439, %440 : vector<8x128xf32>
    %442 = arith.mulf %441, %406 : vector<8x128xf32>
    %cst_144 = arith.constant 2.100000e+01 : f32
    %443 = vector.broadcast %cst_144 : f32 to vector<8x128xf32>
    %444 = arith.addf %442, %443 : vector<8x128xf32>
    %445 = arith.mulf %444, %406 : vector<8x128xf32>
    %cst_145 = arith.constant 1.000000e+00 : f32
    %446 = vector.broadcast %cst_145 : f32 to vector<8x128xf32>
    %447 = arith.addf %445, %446 : vector<8x128xf32>
    %448 = tpu.reciprocal %447 {approx = true} : vector<8x128xf32> -> vector<8x128xf32>
    %449 = arith.mulf %428, %448 : vector<8x128xf32>
    %cst_146 = arith.constant 5.500000e+00 : f32
    %450 = vector.broadcast %cst_146 : f32 to vector<8x128xf32>
    %451 = arith.addf %405, %450 : vector<8x128xf32>
    %cst_147 = arith.constant 5.000000e-01 : f32
    %452 = vector.broadcast %cst_147 : f32 to vector<8x128xf32>
    %453 = arith.addf %405, %452 : vector<8x128xf32>
    %454 = math.log %451 : vector<8x128xf32>
    %455 = arith.mulf %453, %454 : vector<8x128xf32>
    %456 = arith.subf %455, %451 : vector<8x128xf32>
    %457 = math.log %449 : vector<8x128xf32>
    %458 = arith.addf %456, %457 : vector<8x128xf32>
    %459 = arith.addf %403, %458 : vector<8x128xf32>
    %460 = arith.addf %347, %348 : f32
    %461 = vector.broadcast %460 : f32 to vector<8x128xf32>
    %462 = arith.addf %1, %461 : vector<8x128xf32>
    %463 = tpu.reciprocal %462 {approx = true} : vector<8x128xf32> -> vector<8x128xf32>
    %cst_148 = arith.constant 2.50662827 : f32
    %464 = vector.broadcast %cst_148 : f32 to vector<8x128xf32>
    %465 = arith.mulf %464, %463 : vector<8x128xf32>
    %cst_149 = arith.constant 29969.5938 : f32
    %466 = vector.broadcast %cst_149 : f32 to vector<8x128xf32>
    %467 = arith.mulf %466, %463 : vector<8x128xf32>
    %cst_150 = arith.constant 32281.0645 : f32
    %468 = vector.broadcast %cst_150 : f32 to vector<8x128xf32>
    %469 = arith.addf %467, %468 : vector<8x128xf32>
    %470 = arith.mulf %469, %463 : vector<8x128xf32>
    %cst_151 = arith.constant 14484.9141 : f32
    %471 = vector.broadcast %cst_151 : f32 to vector<8x128xf32>
    %472 = arith.addf %470, %471 : vector<8x128xf32>
    %473 = arith.mulf %472, %463 : vector<8x128xf32>
    %cst_152 = arith.constant 3465.70947 : f32
    %474 = vector.broadcast %cst_152 : f32 to vector<8x128xf32>
    %475 = arith.addf %473, %474 : vector<8x128xf32>
    %476 = arith.mulf %475, %463 : vector<8x128xf32>
    %cst_153 = arith.constant 466.334198 : f32
    %477 = vector.broadcast %cst_153 : f32 to vector<8x128xf32>
    %478 = arith.addf %476, %477 : vector<8x128xf32>
    %479 = arith.mulf %478, %463 : vector<8x128xf32>
    %cst_154 = arith.constant 33.4583321 : f32
    %480 = vector.broadcast %cst_154 : f32 to vector<8x128xf32>
    %481 = arith.addf %479, %480 : vector<8x128xf32>
    %482 = arith.mulf %481, %463 : vector<8x128xf32>
    %cst_155 = arith.constant 1.000000e+00 : f32
    %483 = vector.broadcast %cst_155 : f32 to vector<8x128xf32>
    %484 = arith.addf %482, %483 : vector<8x128xf32>
    %485 = arith.mulf %465, %484 : vector<8x128xf32>
    %cst_156 = arith.constant 7.200000e+02 : f32
    %486 = vector.broadcast %cst_156 : f32 to vector<8x128xf32>
    %487 = arith.mulf %486, %463 : vector<8x128xf32>
    %cst_157 = arith.constant 1.764000e+03 : f32
    %488 = vector.broadcast %cst_157 : f32 to vector<8x128xf32>
    %489 = arith.addf %487, %488 : vector<8x128xf32>
    %490 = arith.mulf %489, %463 : vector<8x128xf32>
    %cst_158 = arith.constant 1.624000e+03 : f32
    %491 = vector.broadcast %cst_158 : f32 to vector<8x128xf32>
    %492 = arith.addf %490, %491 : vector<8x128xf32>
    %493 = arith.mulf %492, %463 : vector<8x128xf32>
    %cst_159 = arith.constant 7.350000e+02 : f32
    %494 = vector.broadcast %cst_159 : f32 to vector<8x128xf32>
    %495 = arith.addf %493, %494 : vector<8x128xf32>
    %496 = arith.mulf %495, %463 : vector<8x128xf32>
    %cst_160 = arith.constant 1.750000e+02 : f32
    %497 = vector.broadcast %cst_160 : f32 to vector<8x128xf32>
    %498 = arith.addf %496, %497 : vector<8x128xf32>
    %499 = arith.mulf %498, %463 : vector<8x128xf32>
    %cst_161 = arith.constant 2.100000e+01 : f32
    %500 = vector.broadcast %cst_161 : f32 to vector<8x128xf32>
    %501 = arith.addf %499, %500 : vector<8x128xf32>
    %502 = arith.mulf %501, %463 : vector<8x128xf32>
    %cst_162 = arith.constant 1.000000e+00 : f32
    %503 = vector.broadcast %cst_162 : f32 to vector<8x128xf32>
    %504 = arith.addf %502, %503 : vector<8x128xf32>
    %505 = tpu.reciprocal %504 {approx = true} : vector<8x128xf32> -> vector<8x128xf32>
    %506 = arith.mulf %485, %505 : vector<8x128xf32>
    %cst_163 = arith.constant 5.500000e+00 : f32
    %507 = vector.broadcast %cst_163 : f32 to vector<8x128xf32>
    %508 = arith.addf %462, %507 : vector<8x128xf32>
    %cst_164 = arith.constant 5.000000e-01 : f32
    %509 = vector.broadcast %cst_164 : f32 to vector<8x128xf32>
    %510 = arith.addf %462, %509 : vector<8x128xf32>
    %511 = math.log %508 : vector<8x128xf32>
    %512 = arith.mulf %510, %511 : vector<8x128xf32>
    %513 = arith.subf %512, %508 : vector<8x128xf32>
    %514 = math.log %506 : vector<8x128xf32>
    %515 = arith.addf %513, %514 : vector<8x128xf32>
    %516 = arith.subf %459, %515 : vector<8x128xf32>
    %517 = arith.addf %516, %169 : vector<8x128xf32>
    %c1_165 = arith.constant 1 : index
    %518 = memref.load %arg5[%c1_165] : memref<8xf32, #tpu.memory_space<smem>>
    %519 = vector.broadcast %518 : f32 to vector<8x128xf32>
    %520 = arith.addf %517, %519 : vector<8x128xf32>
    %c1_166 = arith.constant 1 : index
    %c0_167 = arith.constant 0 : index
    %c0_168 = arith.constant 0 : index
    %521 = vector.load %arg6[%c1_166, %c0_167, %c0_168] : memref<8x8x128xf32, #tpu.memory_space<vmem>>, vector<1x8x128xf32>
    %522 = vector.shape_cast %521 : vector<1x8x128xf32> to vector<8x128xf32>
    %523 = vector.shape_cast %520 : vector<8x128xf32> to vector<1x8x128xf32>
    tpu.vector_store %arg6[%c1_166, %c0_167, %c0_168], %523 {strides = array<i32>} : memref<8x8x128xf32, #tpu.memory_space<vmem>>, vector<1x8x128xf32>,
    %c2 = arith.constant 2 : index
    %524 = memref.load %arg3[%c2] : memref<8xf32, #tpu.memory_space<smem>>
    %c2_169 = arith.constant 2 : index
    %525 = memref.load %arg4[%c2_169] : memref<8xf32, #tpu.memory_space<smem>>
    %526 = vector.broadcast %524 : f32 to vector<8x128xf32>
    %527 = arith.addf %0, %526 : vector<8x128xf32>
    %528 = tpu.reciprocal %527 {approx = true} : vector<8x128xf32> -> vector<8x128xf32>
    %cst_170 = arith.constant 2.50662827 : f32
    %529 = vector.broadcast %cst_170 : f32 to vector<8x128xf32>
    %530 = arith.mulf %529, %528 : vector<8x128xf32>
    %cst_171 = arith.constant 29969.5938 : f32
    %531 = vector.broadcast %cst_171 : f32 to vector<8x128xf32>
    %532 = arith.mulf %531, %528 : vector<8x128xf32>
    %cst_172 = arith.constant 32281.0645 : f32
    %533 = vector.broadcast %cst_172 : f32 to vector<8x128xf32>
    %534 = arith.addf %532, %533 : vector<8x128xf32>
    %535 = arith.mulf %534, %528 : vector<8x128xf32>
    %cst_173 = arith.constant 14484.9141 : f32
    %536 = vector.broadcast %cst_173 : f32 to vector<8x128xf32>
    %537 = arith.addf %535, %536 : vector<8x128xf32>
    %538 = arith.mulf %537, %528 : vector<8x128xf32>
    %cst_174 = arith.constant 3465.70947 : f32
    %539 = vector.broadcast %cst_174 : f32 to vector<8x128xf32>
    %540 = arith.addf %538, %539 : vector<8x128xf32>
    %541 = arith.mulf %540, %528 : vector<8x128xf32>
    %cst_175 = arith.constant 466.334198 : f32
    %542 = vector.broadcast %cst_175 : f32 to vector<8x128xf32>
    %543 = arith.addf %541, %542 : vector<8x128xf32>
    %544 = arith.mulf %543, %528 : vector<8x128xf32>
    %cst_176 = arith.constant 33.4583321 : f32
    %545 = vector.broadcast %cst_176 : f32 to vector<8x128xf32>
    %546 = arith.addf %544, %545 : vector<8x128xf32>
    %547 = arith.mulf %546, %528 : vector<8x128xf32>
    %cst_177 = arith.constant 1.000000e+00 : f32
    %548 = vector.broadcast %cst_177 : f32 to vector<8x128xf32>
    %549 = arith.addf %547, %548 : vector<8x128xf32>
    %550 = arith.mulf %530, %549 : vector<8x128xf32>
    %cst_178 = arith.constant 7.200000e+02 : f32
    %551 = vector.broadcast %cst_178 : f32 to vector<8x128xf32>
    %552 = arith.mulf %551, %528 : vector<8x128xf32>
    %cst_179 = arith.constant 1.764000e+03 : f32
    %553 = vector.broadcast %cst_179 : f32 to vector<8x128xf32>
    %554 = arith.addf %552, %553 : vector<8x128xf32>
    %555 = arith.mulf %554, %528 : vector<8x128xf32>
    %cst_180 = arith.constant 1.624000e+03 : f32
    %556 = vector.broadcast %cst_180 : f32 to vector<8x128xf32>
    %557 = arith.addf %555, %556 : vector<8x128xf32>
    %558 = arith.mulf %557, %528 : vector<8x128xf32>
    %cst_181 = arith.constant 7.350000e+02 : f32
    %559 = vector.broadcast %cst_181 : f32 to vector<8x128xf32>
    %560 = arith.addf %558, %559 : vector<8x128xf32>
    %561 = arith.mulf %560, %528 : vector<8x128xf32>
    %cst_182 = arith.constant 1.750000e+02 : f32
    %562 = vector.broadcast %cst_182 : f32 to vector<8x128xf32>
    %563 = arith.addf %561, %562 : vector<8x128xf32>
    %564 = arith.mulf %563, %528 : vector<8x128xf32>
    %cst_183 = arith.constant 2.100000e+01 : f32
    %565 = vector.broadcast %cst_183 : f32 to vector<8x128xf32>
    %566 = arith.addf %564, %565 : vector<8x128xf32>
    %567 = arith.mulf %566, %528 : vector<8x128xf32>
    %cst_184 = arith.constant 1.000000e+00 : f32
    %568 = vector.broadcast %cst_184 : f32 to vector<8x128xf32>
    %569 = arith.addf %567, %568 : vector<8x128xf32>
    %570 = tpu.reciprocal %569 {approx = true} : vector<8x128xf32> -> vector<8x128xf32>
    %571 = arith.mulf %550, %570 : vector<8x128xf32>
    %cst_185 = arith.constant 5.500000e+00 : f32
    %572 = vector.broadcast %cst_185 : f32 to vector<8x128xf32>
    %573 = arith.addf %527, %572 : vector<8x128xf32>
    %cst_186 = arith.constant 5.000000e-01 : f32
    %574 = vector.broadcast %cst_186 : f32 to vector<8x128xf32>
    %575 = arith.addf %527, %574 : vector<8x128xf32>
    %576 = math.log %573 : vector<8x128xf32>
    %577 = arith.mulf %575, %576 : vector<8x128xf32>
    %578 = arith.subf %577, %573 : vector<8x128xf32>
    %579 = math.log %571 : vector<8x128xf32>
    %580 = arith.addf %578, %579 : vector<8x128xf32>
    %581 = vector.broadcast %525 : f32 to vector<8x128xf32>
    %582 = arith.addf %2, %581 : vector<8x128xf32>
    %583 = tpu.reciprocal %582 {approx = true} : vector<8x128xf32> -> vector<8x128xf32>
    %cst_187 = arith.constant 2.50662827 : f32
    %584 = vector.broadcast %cst_187 : f32 to vector<8x128xf32>
    %585 = arith.mulf %584, %583 : vector<8x128xf32>
    %cst_188 = arith.constant 29969.5938 : f32
    %586 = vector.broadcast %cst_188 : f32 to vector<8x128xf32>
    %587 = arith.mulf %586, %583 : vector<8x128xf32>
    %cst_189 = arith.constant 32281.0645 : f32
    %588 = vector.broadcast %cst_189 : f32 to vector<8x128xf32>
    %589 = arith.addf %587, %588 : vector<8x128xf32>
    %590 = arith.mulf %589, %583 : vector<8x128xf32>
    %cst_190 = arith.constant 14484.9141 : f32
    %591 = vector.broadcast %cst_190 : f32 to vector<8x128xf32>
    %592 = arith.addf %590, %591 : vector<8x128xf32>
    %593 = arith.mulf %592, %583 : vector<8x128xf32>
    %cst_191 = arith.constant 3465.70947 : f32
    %594 = vector.broadcast %cst_191 : f32 to vector<8x128xf32>
    %595 = arith.addf %593, %594 : vector<8x128xf32>
    %596 = arith.mulf %595, %583 : vector<8x128xf32>
    %cst_192 = arith.constant 466.334198 : f32
    %597 = vector.broadcast %cst_192 : f32 to vector<8x128xf32>
    %598 = arith.addf %596, %597 : vector<8x128xf32>
    %599 = arith.mulf %598, %583 : vector<8x128xf32>
    %cst_193 = arith.constant 33.4583321 : f32
    %600 = vector.broadcast %cst_193 : f32 to vector<8x128xf32>
    %601 = arith.addf %599, %600 : vector<8x128xf32>
    %602 = arith.mulf %601, %583 : vector<8x128xf32>
    %cst_194 = arith.constant 1.000000e+00 : f32
    %603 = vector.broadcast %cst_194 : f32 to vector<8x128xf32>
    %604 = arith.addf %602, %603 : vector<8x128xf32>
    %605 = arith.mulf %585, %604 : vector<8x128xf32>
    %cst_195 = arith.constant 7.200000e+02 : f32
    %606 = vector.broadcast %cst_195 : f32 to vector<8x128xf32>
    %607 = arith.mulf %606, %583 : vector<8x128xf32>
    %cst_196 = arith.constant 1.764000e+03 : f32
    %608 = vector.broadcast %cst_196 : f32 to vector<8x128xf32>
    %609 = arith.addf %607, %608 : vector<8x128xf32>
    %610 = arith.mulf %609, %583 : vector<8x128xf32>
    %cst_197 = arith.constant 1.624000e+03 : f32
    %611 = vector.broadcast %cst_197 : f32 to vector<8x128xf32>
    %612 = arith.addf %610, %611 : vector<8x128xf32>
    %613 = arith.mulf %612, %583 : vector<8x128xf32>
    %cst_198 = arith.constant 7.350000e+02 : f32
    %614 = vector.broadcast %cst_198 : f32 to vector<8x128xf32>
    %615 = arith.addf %613, %614 : vector<8x128xf32>
    %616 = arith.mulf %615, %583 : vector<8x128xf32>
    %cst_199 = arith.constant 1.750000e+02 : f32
    %617 = vector.broadcast %cst_199 : f32 to vector<8x128xf32>
    %618 = arith.addf %616, %617 : vector<8x128xf32>
    %619 = arith.mulf %618, %583 : vector<8x128xf32>
    %cst_200 = arith.constant 2.100000e+01 : f32
    %620 = vector.broadcast %cst_200 : f32 to vector<8x128xf32>
    %621 = arith.addf %619, %620 : vector<8x128xf32>
    %622 = arith.mulf %621, %583 : vector<8x128xf32>
    %cst_201 = arith.constant 1.000000e+00 : f32
    %623 = vector.broadcast %cst_201 : f32 to vector<8x128xf32>
    %624 = arith.addf %622, %623 : vector<8x128xf32>
    %625 = tpu.reciprocal %624 {approx = true} : vector<8x128xf32> -> vector<8x128xf32>
    %626 = arith.mulf %605, %625 : vector<8x128xf32>
    %cst_202 = arith.constant 5.500000e+00 : f32
    %627 = vector.broadcast %cst_202 : f32 to vector<8x128xf32>
    %628 = arith.addf %582, %627 : vector<8x128xf32>
    %cst_203 = arith.constant 5.000000e-01 : f32
    %629 = vector.broadcast %cst_203 : f32 to vector<8x128xf32>
    %630 = arith.addf %582, %629 : vector<8x128xf32>
    %631 = math.log %628 : vector<8x128xf32>
    %632 = arith.mulf %630, %631 : vector<8x128xf32>
    %633 = arith.subf %632, %628 : vector<8x128xf32>
    %634 = math.log %626 : vector<8x128xf32>
    %635 = arith.addf %633, %634 : vector<8x128xf32>
    %636 = arith.addf %580, %635 : vector<8x128xf32>
    %637 = arith.addf %524, %525 : f32
    %638 = vector.broadcast %637 : f32 to vector<8x128xf32>
    %639 = arith.addf %1, %638 : vector<8x128xf32>
    %640 = tpu.reciprocal %639 {approx = true} : vector<8x128xf32> -> vector<8x128xf32>
    %cst_204 = arith.constant 2.50662827 : f32
    %641 = vector.broadcast %cst_204 : f32 to vector<8x128xf32>
    %642 = arith.mulf %641, %640 : vector<8x128xf32>
    %cst_205 = arith.constant 29969.5938 : f32
    %643 = vector.broadcast %cst_205 : f32 to vector<8x128xf32>
    %644 = arith.mulf %643, %640 : vector<8x128xf32>
    %cst_206 = arith.constant 32281.0645 : f32
    %645 = vector.broadcast %cst_206 : f32 to vector<8x128xf32>
    %646 = arith.addf %644, %645 : vector<8x128xf32>
    %647 = arith.mulf %646, %640 : vector<8x128xf32>
    %cst_207 = arith.constant 14484.9141 : f32
    %648 = vector.broadcast %cst_207 : f32 to vector<8x128xf32>
    %649 = arith.addf %647, %648 : vector<8x128xf32>
    %650 = arith.mulf %649, %640 : vector<8x128xf32>
    %cst_208 = arith.constant 3465.70947 : f32
    %651 = vector.broadcast %cst_208 : f32 to vector<8x128xf32>
    %652 = arith.addf %650, %651 : vector<8x128xf32>
    %653 = arith.mulf %652, %640 : vector<8x128xf32>
    %cst_209 = arith.constant 466.334198 : f32
    %654 = vector.broadcast %cst_209 : f32 to vector<8x128xf32>
    %655 = arith.addf %653, %654 : vector<8x128xf32>
    %656 = arith.mulf %655, %640 : vector<8x128xf32>
    %cst_210 = arith.constant 33.4583321 : f32
    %657 = vector.broadcast %cst_210 : f32 to vector<8x128xf32>
    %658 = arith.addf %656, %657 : vector<8x128xf32>
    %659 = arith.mulf %658, %640 : vector<8x128xf32>
    %cst_211 = arith.constant 1.000000e+00 : f32
    %660 = vector.broadcast %cst_211 : f32 to vector<8x128xf32>
    %661 = arith.addf %659, %660 : vector<8x128xf32>
    %662 = arith.mulf %642, %661 : vector<8x128xf32>
    %cst_212 = arith.constant 7.200000e+02 : f32
    %663 = vector.broadcast %cst_212 : f32 to vector<8x128xf32>
    %664 = arith.mulf %663, %640 : vector<8x128xf32>
    %cst_213 = arith.constant 1.764000e+03 : f32
    %665 = vector.broadcast %cst_213 : f32 to vector<8x128xf32>
    %666 = arith.addf %664, %665 : vector<8x128xf32>
    %667 = arith.mulf %666, %640 : vector<8x128xf32>
    %cst_214 = arith.constant 1.624000e+03 : f32
    %668 = vector.broadcast %cst_214 : f32 to vector<8x128xf32>
    %669 = arith.addf %667, %668 : vector<8x128xf32>
    %670 = arith.mulf %669, %640 : vector<8x128xf32>
    %cst_215 = arith.constant 7.350000e+02 : f32
    %671 = vector.broadcast %cst_215 : f32 to vector<8x128xf32>
    %672 = arith.addf %670, %671 : vector<8x128xf32>
    %673 = arith.mulf %672, %640 : vector<8x128xf32>
    %cst_216 = arith.constant 1.750000e+02 : f32
    %674 = vector.broadcast %cst_216 : f32 to vector<8x128xf32>
    %675 = arith.addf %673, %674 : vector<8x128xf32>
    %676 = arith.mulf %675, %640 : vector<8x128xf32>
    %cst_217 = arith.constant 2.100000e+01 : f32
    %677 = vector.broadcast %cst_217 : f32 to vector<8x128xf32>
    %678 = arith.addf %676, %677 : vector<8x128xf32>
    %679 = arith.mulf %678, %640 : vector<8x128xf32>
    %cst_218 = arith.constant 1.000000e+00 : f32
    %680 = vector.broadcast %cst_218 : f32 to vector<8x128xf32>
    %681 = arith.addf %679, %680 : vector<8x128xf32>
    %682 = tpu.reciprocal %681 {approx = true} : vector<8x128xf32> -> vector<8x128xf32>
    %683 = arith.mulf %662, %682 : vector<8x128xf32>
    %cst_219 = arith.constant 5.500000e+00 : f32
    %684 = vector.broadcast %cst_219 : f32 to vector<8x128xf32>
    %685 = arith.addf %639, %684 : vector<8x128xf32>
    %cst_220 = arith.constant 5.000000e-01 : f32
    %686 = vector.broadcast %cst_220 : f32 to vector<8x128xf32>
    %687 = arith.addf %639, %686 : vector<8x128xf32>
    %688 = math.log %685 : vector<8x128xf32>
    %689 = arith.mulf %687, %688 : vector<8x128xf32>
    %690 = arith.subf %689, %685 : vector<8x128xf32>
    %691 = math.log %683 : vector<8x128xf32>
    %692 = arith.addf %690, %691 : vector<8x128xf32>
    %693 = arith.subf %636, %692 : vector<8x128xf32>
    %694 = arith.addf %693, %169 : vector<8x128xf32>
    %c2_221 = arith.constant 2 : index
    %695 = memref.load %arg5[%c2_221] : memref<8xf32, #tpu.memory_space<smem>>
    %696 = vector.broadcast %695 : f32 to vector<8x128xf32>
    %697 = arith.addf %694, %696 : vector<8x128xf32>
    %c2_222 = arith.constant 2 : index
    %c0_223 = arith.constant 0 : index
    %c0_224 = arith.constant 0 : index
    %698 = vector.load %arg6[%c2_222, %c0_223, %c0_224] : memref<8x8x128xf32, #tpu.memory_space<vmem>>, vector<1x8x128xf32>
    %699 = vector.shape_cast %698 : vector<1x8x128xf32> to vector<8x128xf32>
    %700 = vector.shape_cast %697 : vector<8x128xf32> to vector<1x8x128xf32>
    tpu.vector_store %arg6[%c2_222, %c0_223, %c0_224], %700 {strides = array<i32>} : memref<8x8x128xf32, #tpu.memory_space<vmem>>, vector<1x8x128xf32>,
    %c3 = arith.constant 3 : index
    %701 = memref.load %arg3[%c3] : memref<8xf32, #tpu.memory_space<smem>>
    %c3_225 = arith.constant 3 : index
    %702 = memref.load %arg4[%c3_225] : memref<8xf32, #tpu.memory_space<smem>>
    %703 = vector.broadcast %701 : f32 to vector<8x128xf32>
    %704 = arith.addf %0, %703 : vector<8x128xf32>
    %705 = tpu.reciprocal %704 {approx = true} : vector<8x128xf32> -> vector<8x128xf32>
    %cst_226 = arith.constant 2.50662827 : f32
    %706 = vector.broadcast %cst_226 : f32 to vector<8x128xf32>
    %707 = arith.mulf %706, %705 : vector<8x128xf32>
    %cst_227 = arith.constant 29969.5938 : f32
    %708 = vector.broadcast %cst_227 : f32 to vector<8x128xf32>
    %709 = arith.mulf %708, %705 : vector<8x128xf32>
    %cst_228 = arith.constant 32281.0645 : f32
    %710 = vector.broadcast %cst_228 : f32 to vector<8x128xf32>
    %711 = arith.addf %709, %710 : vector<8x128xf32>
    %712 = arith.mulf %711, %705 : vector<8x128xf32>
    %cst_229 = arith.constant 14484.9141 : f32
    %713 = vector.broadcast %cst_229 : f32 to vector<8x128xf32>
    %714 = arith.addf %712, %713 : vector<8x128xf32>
    %715 = arith.mulf %714, %705 : vector<8x128xf32>
    %cst_230 = arith.constant 3465.70947 : f32
    %716 = vector.broadcast %cst_230 : f32 to vector<8x128xf32>
    %717 = arith.addf %715, %716 : vector<8x128xf32>
    %718 = arith.mulf %717, %705 : vector<8x128xf32>
    %cst_231 = arith.constant 466.334198 : f32
    %719 = vector.broadcast %cst_231 : f32 to vector<8x128xf32>
    %720 = arith.addf %718, %719 : vector<8x128xf32>
    %721 = arith.mulf %720, %705 : vector<8x128xf32>
    %cst_232 = arith.constant 33.4583321 : f32
    %722 = vector.broadcast %cst_232 : f32 to vector<8x128xf32>
    %723 = arith.addf %721, %722 : vector<8x128xf32>
    %724 = arith.mulf %723, %705 : vector<8x128xf32>
    %cst_233 = arith.constant 1.000000e+00 : f32
    %725 = vector.broadcast %cst_233 : f32 to vector<8x128xf32>
    %726 = arith.addf %724, %725 : vector<8x128xf32>
    %727 = arith.mulf %707, %726 : vector<8x128xf32>
    %cst_234 = arith.constant 7.200000e+02 : f32
    %728 = vector.broadcast %cst_234 : f32 to vector<8x128xf32>
    %729 = arith.mulf %728, %705 : vector<8x128xf32>
    %cst_235 = arith.constant 1.764000e+03 : f32
    %730 = vector.broadcast %cst_235 : f32 to vector<8x128xf32>
    %731 = arith.addf %729, %730 : vector<8x128xf32>
    %732 = arith.mulf %731, %705 : vector<8x128xf32>
    %cst_236 = arith.constant 1.624000e+03 : f32
    %733 = vector.broadcast %cst_236 : f32 to vector<8x128xf32>
    %734 = arith.addf %732, %733 : vector<8x128xf32>
    %735 = arith.mulf %734, %705 : vector<8x128xf32>
    %cst_237 = arith.constant 7.350000e+02 : f32
    %736 = vector.broadcast %cst_237 : f32 to vector<8x128xf32>
    %737 = arith.addf %735, %736 : vector<8x128xf32>
    %738 = arith.mulf %737, %705 : vector<8x128xf32>
    %cst_238 = arith.constant 1.750000e+02 : f32
    %739 = vector.broadcast %cst_238 : f32 to vector<8x128xf32>
    %740 = arith.addf %738, %739 : vector<8x128xf32>
    %741 = arith.mulf %740, %705 : vector<8x128xf32>
    %cst_239 = arith.constant 2.100000e+01 : f32
    %742 = vector.broadcast %cst_239 : f32 to vector<8x128xf32>
    %743 = arith.addf %741, %742 : vector<8x128xf32>
    %744 = arith.mulf %743, %705 : vector<8x128xf32>
    %cst_240 = arith.constant 1.000000e+00 : f32
    %745 = vector.broadcast %cst_240 : f32 to vector<8x128xf32>
    %746 = arith.addf %744, %745 : vector<8x128xf32>
    %747 = tpu.reciprocal %746 {approx = true} : vector<8x128xf32> -> vector<8x128xf32>
    %748 = arith.mulf %727, %747 : vector<8x128xf32>
    %cst_241 = arith.constant 5.500000e+00 : f32
    %749 = vector.broadcast %cst_241 : f32 to vector<8x128xf32>
    %750 = arith.addf %704, %749 : vector<8x128xf32>
    %cst_242 = arith.constant 5.000000e-01 : f32
    %751 = vector.broadcast %cst_242 : f32 to vector<8x128xf32>
    %752 = arith.addf %704, %751 : vector<8x128xf32>
    %753 = math.log %750 : vector<8x128xf32>
    %754 = arith.mulf %752, %753 : vector<8x128xf32>
    %755 = arith.subf %754, %750 : vector<8x128xf32>
    %756 = math.log %748 : vector<8x128xf32>
    %757 = arith.addf %755, %756 : vector<8x128xf32>
    %758 = vector.broadcast %702 : f32 to vector<8x128xf32>
    %759 = arith.addf %2, %758 : vector<8x128xf32>
    %760 = tpu.reciprocal %759 {approx = true} : vector<8x128xf32> -> vector<8x128xf32>
    %cst_243 = arith.constant 2.50662827 : f32
    %761 = vector.broadcast %cst_243 : f32 to vector<8x128xf32>
    %762 = arith.mulf %761, %760 : vector<8x128xf32>
    %cst_244 = arith.constant 29969.5938 : f32
    %763 = vector.broadcast %cst_244 : f32 to vector<8x128xf32>
    %764 = arith.mulf %763, %760 : vector<8x128xf32>
    %cst_245 = arith.constant 32281.0645 : f32
    %765 = vector.broadcast %cst_245 : f32 to vector<8x128xf32>
    %766 = arith.addf %764, %765 : vector<8x128xf32>
    %767 = arith.mulf %766, %760 : vector<8x128xf32>
    %cst_246 = arith.constant 14484.9141 : f32
    %768 = vector.broadcast %cst_246 : f32 to vector<8x128xf32>
    %769 = arith.addf %767, %768 : vector<8x128xf32>
    %770 = arith.mulf %769, %760 : vector<8x128xf32>
    %cst_247 = arith.constant 3465.70947 : f32
    %771 = vector.broadcast %cst_247 : f32 to vector<8x128xf32>
    %772 = arith.addf %770, %771 : vector<8x128xf32>
    %773 = arith.mulf %772, %760 : vector<8x128xf32>
    %cst_248 = arith.constant 466.334198 : f32
    %774 = vector.broadcast %cst_248 : f32 to vector<8x128xf32>
    %775 = arith.addf %773, %774 : vector<8x128xf32>
    %776 = arith.mulf %775, %760 : vector<8x128xf32>
    %cst_249 = arith.constant 33.4583321 : f32
    %777 = vector.broadcast %cst_249 : f32 to vector<8x128xf32>
    %778 = arith.addf %776, %777 : vector<8x128xf32>
    %779 = arith.mulf %778, %760 : vector<8x128xf32>
    %cst_250 = arith.constant 1.000000e+00 : f32
    %780 = vector.broadcast %cst_250 : f32 to vector<8x128xf32>
    %781 = arith.addf %779, %780 : vector<8x128xf32>
    %782 = arith.mulf %762, %781 : vector<8x128xf32>
    %cst_251 = arith.constant 7.200000e+02 : f32
    %783 = vector.broadcast %cst_251 : f32 to vector<8x128xf32>
    %784 = arith.mulf %783, %760 : vector<8x128xf32>
    %cst_252 = arith.constant 1.764000e+03 : f32
    %785 = vector.broadcast %cst_252 : f32 to vector<8x128xf32>
    %786 = arith.addf %784, %785 : vector<8x128xf32>
    %787 = arith.mulf %786, %760 : vector<8x128xf32>
    %cst_253 = arith.constant 1.624000e+03 : f32
    %788 = vector.broadcast %cst_253 : f32 to vector<8x128xf32>
    %789 = arith.addf %787, %788 : vector<8x128xf32>
    %790 = arith.mulf %789, %760 : vector<8x128xf32>
    %cst_254 = arith.constant 7.350000e+02 : f32
    %791 = vector.broadcast %cst_254 : f32 to vector<8x128xf32>
    %792 = arith.addf %790, %791 : vector<8x128xf32>
    %793 = arith.mulf %792, %760 : vector<8x128xf32>
    %cst_255 = arith.constant 1.750000e+02 : f32
    %794 = vector.broadcast %cst_255 : f32 to vector<8x128xf32>
    %795 = arith.addf %793, %794 : vector<8x128xf32>
    %796 = arith.mulf %795, %760 : vector<8x128xf32>
    %cst_256 = arith.constant 2.100000e+01 : f32
    %797 = vector.broadcast %cst_256 : f32 to vector<8x128xf32>
    %798 = arith.addf %796, %797 : vector<8x128xf32>
    %799 = arith.mulf %798, %760 : vector<8x128xf32>
    %cst_257 = arith.constant 1.000000e+00 : f32
    %800 = vector.broadcast %cst_257 : f32 to vector<8x128xf32>
    %801 = arith.addf %799, %800 : vector<8x128xf32>
    %802 = tpu.reciprocal %801 {approx = true} : vector<8x128xf32> -> vector<8x128xf32>
    %803 = arith.mulf %782, %802 : vector<8x128xf32>
    %cst_258 = arith.constant 5.500000e+00 : f32
    %804 = vector.broadcast %cst_258 : f32 to vector<8x128xf32>
    %805 = arith.addf %759, %804 : vector<8x128xf32>
    %cst_259 = arith.constant 5.000000e-01 : f32
    %806 = vector.broadcast %cst_259 : f32 to vector<8x128xf32>
    %807 = arith.addf %759, %806 : vector<8x128xf32>
    %808 = math.log %805 : vector<8x128xf32>
    %809 = arith.mulf %807, %808 : vector<8x128xf32>
    %810 = arith.subf %809, %805 : vector<8x128xf32>
    %811 = math.log %803 : vector<8x128xf32>
    %812 = arith.addf %810, %811 : vector<8x128xf32>
    %813 = arith.addf %757, %812 : vector<8x128xf32>
    %814 = arith.addf %701, %702 : f32
    %815 = vector.broadcast %814 : f32 to vector<8x128xf32>
    %816 = arith.addf %1, %815 : vector<8x128xf32>
    %817 = tpu.reciprocal %816 {approx = true} : vector<8x128xf32> -> vector<8x128xf32>
    %cst_260 = arith.constant 2.50662827 : f32
    %818 = vector.broadcast %cst_260 : f32 to vector<8x128xf32>
    %819 = arith.mulf %818, %817 : vector<8x128xf32>
    %cst_261 = arith.constant 29969.5938 : f32
    %820 = vector.broadcast %cst_261 : f32 to vector<8x128xf32>
    %821 = arith.mulf %820, %817 : vector<8x128xf32>
    %cst_262 = arith.constant 32281.0645 : f32
    %822 = vector.broadcast %cst_262 : f32 to vector<8x128xf32>
    %823 = arith.addf %821, %822 : vector<8x128xf32>
    %824 = arith.mulf %823, %817 : vector<8x128xf32>
    %cst_263 = arith.constant 14484.9141 : f32
    %825 = vector.broadcast %cst_263 : f32 to vector<8x128xf32>
    %826 = arith.addf %824, %825 : vector<8x128xf32>
    %827 = arith.mulf %826, %817 : vector<8x128xf32>
    %cst_264 = arith.constant 3465.70947 : f32
    %828 = vector.broadcast %cst_264 : f32 to vector<8x128xf32>
    %829 = arith.addf %827, %828 : vector<8x128xf32>
    %830 = arith.mulf %829, %817 : vector<8x128xf32>
    %cst_265 = arith.constant 466.334198 : f32
    %831 = vector.broadcast %cst_265 : f32 to vector<8x128xf32>
    %832 = arith.addf %830, %831 : vector<8x128xf32>
    %833 = arith.mulf %832, %817 : vector<8x128xf32>
    %cst_266 = arith.constant 33.4583321 : f32
    %834 = vector.broadcast %cst_266 : f32 to vector<8x128xf32>
    %835 = arith.addf %833, %834 : vector<8x128xf32>
    %836 = arith.mulf %835, %817 : vector<8x128xf32>
    %cst_267 = arith.constant 1.000000e+00 : f32
    %837 = vector.broadcast %cst_267 : f32 to vector<8x128xf32>
    %838 = arith.addf %836, %837 : vector<8x128xf32>
    %839 = arith.mulf %819, %838 : vector<8x128xf32>
    %cst_268 = arith.constant 7.200000e+02 : f32
    %840 = vector.broadcast %cst_268 : f32 to vector<8x128xf32>
    %841 = arith.mulf %840, %817 : vector<8x128xf32>
    %cst_269 = arith.constant 1.764000e+03 : f32
    %842 = vector.broadcast %cst_269 : f32 to vector<8x128xf32>
    %843 = arith.addf %841, %842 : vector<8x128xf32>
    %844 = arith.mulf %843, %817 : vector<8x128xf32>
    %cst_270 = arith.constant 1.624000e+03 : f32
    %845 = vector.broadcast %cst_270 : f32 to vector<8x128xf32>
    %846 = arith.addf %844, %845 : vector<8x128xf32>
    %847 = arith.mulf %846, %817 : vector<8x128xf32>
    %cst_271 = arith.constant 7.350000e+02 : f32
    %848 = vector.broadcast %cst_271 : f32 to vector<8x128xf32>
    %849 = arith.addf %847, %848 : vector<8x128xf32>
    %850 = arith.mulf %849, %817 : vector<8x128xf32>
    %cst_272 = arith.constant 1.750000e+02 : f32
    %851 = vector.broadcast %cst_272 : f32 to vector<8x128xf32>
    %852 = arith.addf %850, %851 : vector<8x128xf32>
    %853 = arith.mulf %852, %817 : vector<8x128xf32>
    %cst_273 = arith.constant 2.100000e+01 : f32
    %854 = vector.broadcast %cst_273 : f32 to vector<8x128xf32>
    %855 = arith.addf %853, %854 : vector<8x128xf32>
    %856 = arith.mulf %855, %817 : vector<8x128xf32>
    %cst_274 = arith.constant 1.000000e+00 : f32
    %857 = vector.broadcast %cst_274 : f32 to vector<8x128xf32>
    %858 = arith.addf %856, %857 : vector<8x128xf32>
    %859 = tpu.reciprocal %858 {approx = true} : vector<8x128xf32> -> vector<8x128xf32>
    %860 = arith.mulf %839, %859 : vector<8x128xf32>
    %cst_275 = arith.constant 5.500000e+00 : f32
    %861 = vector.broadcast %cst_275 : f32 to vector<8x128xf32>
    %862 = arith.addf %816, %861 : vector<8x128xf32>
    %cst_276 = arith.constant 5.000000e-01 : f32
    %863 = vector.broadcast %cst_276 : f32 to vector<8x128xf32>
    %864 = arith.addf %816, %863 : vector<8x128xf32>
    %865 = math.log %862 : vector<8x128xf32>
    %866 = arith.mulf %864, %865 : vector<8x128xf32>
    %867 = arith.subf %866, %862 : vector<8x128xf32>
    %868 = math.log %860 : vector<8x128xf32>
    %869 = arith.addf %867, %868 : vector<8x128xf32>
    %870 = arith.subf %813, %869 : vector<8x128xf32>
    %871 = arith.addf %870, %169 : vector<8x128xf32>
    %c3_277 = arith.constant 3 : index
    %872 = memref.load %arg5[%c3_277] : memref<8xf32, #tpu.memory_space<smem>>
    %873 = vector.broadcast %872 : f32 to vector<8x128xf32>
    %874 = arith.addf %871, %873 : vector<8x128xf32>
    %c3_278 = arith.constant 3 : index
    %c0_279 = arith.constant 0 : index
    %c0_280 = arith.constant 0 : index
    %875 = vector.load %arg6[%c3_278, %c0_279, %c0_280] : memref<8x8x128xf32, #tpu.memory_space<vmem>>, vector<1x8x128xf32>
    %876 = vector.shape_cast %875 : vector<1x8x128xf32> to vector<8x128xf32>
    %877 = vector.shape_cast %874 : vector<8x128xf32> to vector<1x8x128xf32>
    tpu.vector_store %arg6[%c3_278, %c0_279, %c0_280], %877 {strides = array<i32>} : memref<8x8x128xf32, #tpu.memory_space<vmem>>, vector<1x8x128xf32>,
    %c4 = arith.constant 4 : index
    %878 = memref.load %arg3[%c4] : memref<8xf32, #tpu.memory_space<smem>>
    %c4_281 = arith.constant 4 : index
    %879 = memref.load %arg4[%c4_281] : memref<8xf32, #tpu.memory_space<smem>>
    %880 = vector.broadcast %878 : f32 to vector<8x128xf32>
    %881 = arith.addf %0, %880 : vector<8x128xf32>
    %882 = tpu.reciprocal %881 {approx = true} : vector<8x128xf32> -> vector<8x128xf32>
    %cst_282 = arith.constant 2.50662827 : f32
    %883 = vector.broadcast %cst_282 : f32 to vector<8x128xf32>
    %884 = arith.mulf %883, %882 : vector<8x128xf32>
    %cst_283 = arith.constant 29969.5938 : f32
    %885 = vector.broadcast %cst_283 : f32 to vector<8x128xf32>
    %886 = arith.mulf %885, %882 : vector<8x128xf32>
    %cst_284 = arith.constant 32281.0645 : f32
    %887 = vector.broadcast %cst_284 : f32 to vector<8x128xf32>
    %888 = arith.addf %886, %887 : vector<8x128xf32>
    %889 = arith.mulf %888, %882 : vector<8x128xf32>
    %cst_285 = arith.constant 14484.9141 : f32
    %890 = vector.broadcast %cst_285 : f32 to vector<8x128xf32>
    %891 = arith.addf %889, %890 : vector<8x128xf32>
    %892 = arith.mulf %891, %882 : vector<8x128xf32>
    %cst_286 = arith.constant 3465.70947 : f32
    %893 = vector.broadcast %cst_286 : f32 to vector<8x128xf32>
    %894 = arith.addf %892, %893 : vector<8x128xf32>
    %895 = arith.mulf %894, %882 : vector<8x128xf32>
    %cst_287 = arith.constant 466.334198 : f32
    %896 = vector.broadcast %cst_287 : f32 to vector<8x128xf32>
    %897 = arith.addf %895, %896 : vector<8x128xf32>
    %898 = arith.mulf %897, %882 : vector<8x128xf32>
    %cst_288 = arith.constant 33.4583321 : f32
    %899 = vector.broadcast %cst_288 : f32 to vector<8x128xf32>
    %900 = arith.addf %898, %899 : vector<8x128xf32>
    %901 = arith.mulf %900, %882 : vector<8x128xf32>
    %cst_289 = arith.constant 1.000000e+00 : f32
    %902 = vector.broadcast %cst_289 : f32 to vector<8x128xf32>
    %903 = arith.addf %901, %902 : vector<8x128xf32>
    %904 = arith.mulf %884, %903 : vector<8x128xf32>
    %cst_290 = arith.constant 7.200000e+02 : f32
    %905 = vector.broadcast %cst_290 : f32 to vector<8x128xf32>
    %906 = arith.mulf %905, %882 : vector<8x128xf32>
    %cst_291 = arith.constant 1.764000e+03 : f32
    %907 = vector.broadcast %cst_291 : f32 to vector<8x128xf32>
    %908 = arith.addf %906, %907 : vector<8x128xf32>
    %909 = arith.mulf %908, %882 : vector<8x128xf32>
    %cst_292 = arith.constant 1.624000e+03 : f32
    %910 = vector.broadcast %cst_292 : f32 to vector<8x128xf32>
    %911 = arith.addf %909, %910 : vector<8x128xf32>
    %912 = arith.mulf %911, %882 : vector<8x128xf32>
    %cst_293 = arith.constant 7.350000e+02 : f32
    %913 = vector.broadcast %cst_293 : f32 to vector<8x128xf32>
    %914 = arith.addf %912, %913 : vector<8x128xf32>
    %915 = arith.mulf %914, %882 : vector<8x128xf32>
    %cst_294 = arith.constant 1.750000e+02 : f32
    %916 = vector.broadcast %cst_294 : f32 to vector<8x128xf32>
    %917 = arith.addf %915, %916 : vector<8x128xf32>
    %918 = arith.mulf %917, %882 : vector<8x128xf32>
    %cst_295 = arith.constant 2.100000e+01 : f32
    %919 = vector.broadcast %cst_295 : f32 to vector<8x128xf32>
    %920 = arith.addf %918, %919 : vector<8x128xf32>
    %921 = arith.mulf %920, %882 : vector<8x128xf32>
    %cst_296 = arith.constant 1.000000e+00 : f32
    %922 = vector.broadcast %cst_296 : f32 to vector<8x128xf32>
    %923 = arith.addf %921, %922 : vector<8x128xf32>
    %924 = tpu.reciprocal %923 {approx = true} : vector<8x128xf32> -> vector<8x128xf32>
    %925 = arith.mulf %904, %924 : vector<8x128xf32>
    %cst_297 = arith.constant 5.500000e+00 : f32
    %926 = vector.broadcast %cst_297 : f32 to vector<8x128xf32>
    %927 = arith.addf %881, %926 : vector<8x128xf32>
    %cst_298 = arith.constant 5.000000e-01 : f32
    %928 = vector.broadcast %cst_298 : f32 to vector<8x128xf32>
    %929 = arith.addf %881, %928 : vector<8x128xf32>
    %930 = math.log %927 : vector<8x128xf32>
    %931 = arith.mulf %929, %930 : vector<8x128xf32>
    %932 = arith.subf %931, %927 : vector<8x128xf32>
    %933 = math.log %925 : vector<8x128xf32>
    %934 = arith.addf %932, %933 : vector<8x128xf32>
    %935 = vector.broadcast %879 : f32 to vector<8x128xf32>
    %936 = arith.addf %2, %935 : vector<8x128xf32>
    %937 = tpu.reciprocal %936 {approx = true} : vector<8x128xf32> -> vector<8x128xf32>
    %cst_299 = arith.constant 2.50662827 : f32
    %938 = vector.broadcast %cst_299 : f32 to vector<8x128xf32>
    %939 = arith.mulf %938, %937 : vector<8x128xf32>
    %cst_300 = arith.constant 29969.5938 : f32
    %940 = vector.broadcast %cst_300 : f32 to vector<8x128xf32>
    %941 = arith.mulf %940, %937 : vector<8x128xf32>
    %cst_301 = arith.constant 32281.0645 : f32
    %942 = vector.broadcast %cst_301 : f32 to vector<8x128xf32>
    %943 = arith.addf %941, %942 : vector<8x128xf32>
    %944 = arith.mulf %943, %937 : vector<8x128xf32>
    %cst_302 = arith.constant 14484.9141 : f32
    %945 = vector.broadcast %cst_302 : f32 to vector<8x128xf32>
    %946 = arith.addf %944, %945 : vector<8x128xf32>
    %947 = arith.mulf %946, %937 : vector<8x128xf32>
    %cst_303 = arith.constant 3465.70947 : f32
    %948 = vector.broadcast %cst_303 : f32 to vector<8x128xf32>
    %949 = arith.addf %947, %948 : vector<8x128xf32>
    %950 = arith.mulf %949, %937 : vector<8x128xf32>
    %cst_304 = arith.constant 466.334198 : f32
    %951 = vector.broadcast %cst_304 : f32 to vector<8x128xf32>
    %952 = arith.addf %950, %951 : vector<8x128xf32>
    %953 = arith.mulf %952, %937 : vector<8x128xf32>
    %cst_305 = arith.constant 33.4583321 : f32
    %954 = vector.broadcast %cst_305 : f32 to vector<8x128xf32>
    %955 = arith.addf %953, %954 : vector<8x128xf32>
    %956 = arith.mulf %955, %937 : vector<8x128xf32>
    %cst_306 = arith.constant 1.000000e+00 : f32
    %957 = vector.broadcast %cst_306 : f32 to vector<8x128xf32>
    %958 = arith.addf %956, %957 : vector<8x128xf32>
    %959 = arith.mulf %939, %958 : vector<8x128xf32>
    %cst_307 = arith.constant 7.200000e+02 : f32
    %960 = vector.broadcast %cst_307 : f32 to vector<8x128xf32>
    %961 = arith.mulf %960, %937 : vector<8x128xf32>
    %cst_308 = arith.constant 1.764000e+03 : f32
    %962 = vector.broadcast %cst_308 : f32 to vector<8x128xf32>
    %963 = arith.addf %961, %962 : vector<8x128xf32>
    %964 = arith.mulf %963, %937 : vector<8x128xf32>
    %cst_309 = arith.constant 1.624000e+03 : f32
    %965 = vector.broadcast %cst_309 : f32 to vector<8x128xf32>
    %966 = arith.addf %964, %965 : vector<8x128xf32>
    %967 = arith.mulf %966, %937 : vector<8x128xf32>
    %cst_310 = arith.constant 7.350000e+02 : f32
    %968 = vector.broadcast %cst_310 : f32 to vector<8x128xf32>
    %969 = arith.addf %967, %968 : vector<8x128xf32>
    %970 = arith.mulf %969, %937 : vector<8x128xf32>
    %cst_311 = arith.constant 1.750000e+02 : f32
    %971 = vector.broadcast %cst_311 : f32 to vector<8x128xf32>
    %972 = arith.addf %970, %971 : vector<8x128xf32>
    %973 = arith.mulf %972, %937 : vector<8x128xf32>
    %cst_312 = arith.constant 2.100000e+01 : f32
    %974 = vector.broadcast %cst_312 : f32 to vector<8x128xf32>
    %975 = arith.addf %973, %974 : vector<8x128xf32>
    %976 = arith.mulf %975, %937 : vector<8x128xf32>
    %cst_313 = arith.constant 1.000000e+00 : f32
    %977 = vector.broadcast %cst_313 : f32 to vector<8x128xf32>
    %978 = arith.addf %976, %977 : vector<8x128xf32>
    %979 = tpu.reciprocal %978 {approx = true} : vector<8x128xf32> -> vector<8x128xf32>
    %980 = arith.mulf %959, %979 : vector<8x128xf32>
    %cst_314 = arith.constant 5.500000e+00 : f32
    %981 = vector.broadcast %cst_314 : f32 to vector<8x128xf32>
    %982 = arith.addf %936, %981 : vector<8x128xf32>
    %cst_315 = arith.constant 5.000000e-01 : f32
    %983 = vector.broadcast %cst_315 : f32 to vector<8x128xf32>
    %984 = arith.addf %936, %983 : vector<8x128xf32>
    %985 = math.log %982 : vector<8x128xf32>
    %986 = arith.mulf %984, %985 : vector<8x128xf32>
    %987 = arith.subf %986, %982 : vector<8x128xf32>
    %988 = math.log %980 : vector<8x128xf32>
    %989 = arith.addf %987, %988 : vector<8x128xf32>
    %990 = arith.addf %934, %989 : vector<8x128xf32>
    %991 = arith.addf %878, %879 : f32
    %992 = vector.broadcast %991 : f32 to vector<8x128xf32>
    %993 = arith.addf %1, %992 : vector<8x128xf32>
    %994 = tpu.reciprocal %993 {approx = true} : vector<8x128xf32> -> vector<8x128xf32>
    %cst_316 = arith.constant 2.50662827 : f32
    %995 = vector.broadcast %cst_316 : f32 to vector<8x128xf32>
    %996 = arith.mulf %995, %994 : vector<8x128xf32>
    %cst_317 = arith.constant 29969.5938 : f32
    %997 = vector.broadcast %cst_317 : f32 to vector<8x128xf32>
    %998 = arith.mulf %997, %994 : vector<8x128xf32>
    %cst_318 = arith.constant 32281.0645 : f32
    %999 = vector.broadcast %cst_318 : f32 to vector<8x128xf32>
    %1000 = arith.addf %998, %999 : vector<8x128xf32>
    %1001 = arith.mulf %1000, %994 : vector<8x128xf32>
    %cst_319 = arith.constant 14484.9141 : f32
    %1002 = vector.broadcast %cst_319 : f32 to vector<8x128xf32>
    %1003 = arith.addf %1001, %1002 : vector<8x128xf32>
    %1004 = arith.mulf %1003, %994 : vector<8x128xf32>
    %cst_320 = arith.constant 3465.70947 : f32
    %1005 = vector.broadcast %cst_320 : f32 to vector<8x128xf32>
    %1006 = arith.addf %1004, %1005 : vector<8x128xf32>
    %1007 = arith.mulf %1006, %994 : vector<8x128xf32>
    %cst_321 = arith.constant 466.334198 : f32
    %1008 = vector.broadcast %cst_321 : f32 to vector<8x128xf32>
    %1009 = arith.addf %1007, %1008 : vector<8x128xf32>
    %1010 = arith.mulf %1009, %994 : vector<8x128xf32>
    %cst_322 = arith.constant 33.4583321 : f32
    %1011 = vector.broadcast %cst_322 : f32 to vector<8x128xf32>
    %1012 = arith.addf %1010, %1011 : vector<8x128xf32>
    %1013 = arith.mulf %1012, %994 : vector<8x128xf32>
    %cst_323 = arith.constant 1.000000e+00 : f32
    %1014 = vector.broadcast %cst_323 : f32 to vector<8x128xf32>
    %1015 = arith.addf %1013, %1014 : vector<8x128xf32>
    %1016 = arith.mulf %996, %1015 : vector<8x128xf32>
    %cst_324 = arith.constant 7.200000e+02 : f32
    %1017 = vector.broadcast %cst_324 : f32 to vector<8x128xf32>
    %1018 = arith.mulf %1017, %994 : vector<8x128xf32>
    %cst_325 = arith.constant 1.764000e+03 : f32
    %1019 = vector.broadcast %cst_325 : f32 to vector<8x128xf32>
    %1020 = arith.addf %1018, %1019 : vector<8x128xf32>
    %1021 = arith.mulf %1020, %994 : vector<8x128xf32>
    %cst_326 = arith.constant 1.624000e+03 : f32
    %1022 = vector.broadcast %cst_326 : f32 to vector<8x128xf32>
    %1023 = arith.addf %1021, %1022 : vector<8x128xf32>
    %1024 = arith.mulf %1023, %994 : vector<8x128xf32>
    %cst_327 = arith.constant 7.350000e+02 : f32
    %1025 = vector.broadcast %cst_327 : f32 to vector<8x128xf32>
    %1026 = arith.addf %1024, %1025 : vector<8x128xf32>
    %1027 = arith.mulf %1026, %994 : vector<8x128xf32>
    %cst_328 = arith.constant 1.750000e+02 : f32
    %1028 = vector.broadcast %cst_328 : f32 to vector<8x128xf32>
    %1029 = arith.addf %1027, %1028 : vector<8x128xf32>
    %1030 = arith.mulf %1029, %994 : vector<8x128xf32>
    %cst_329 = arith.constant 2.100000e+01 : f32
    %1031 = vector.broadcast %cst_329 : f32 to vector<8x128xf32>
    %1032 = arith.addf %1030, %1031 : vector<8x128xf32>
    %1033 = arith.mulf %1032, %994 : vector<8x128xf32>
    %cst_330 = arith.constant 1.000000e+00 : f32
    %1034 = vector.broadcast %cst_330 : f32 to vector<8x128xf32>
    %1035 = arith.addf %1033, %1034 : vector<8x128xf32>
    %1036 = tpu.reciprocal %1035 {approx = true} : vector<8x128xf32> -> vector<8x128xf32>
    %1037 = arith.mulf %1016, %1036 : vector<8x128xf32>
    %cst_331 = arith.constant 5.500000e+00 : f32
    %1038 = vector.broadcast %cst_331 : f32 to vector<8x128xf32>
    %1039 = arith.addf %993, %1038 : vector<8x128xf32>
    %cst_332 = arith.constant 5.000000e-01 : f32
    %1040 = vector.broadcast %cst_332 : f32 to vector<8x128xf32>
    %1041 = arith.addf %993, %1040 : vector<8x128xf32>
    %1042 = math.log %1039 : vector<8x128xf32>
    %1043 = arith.mulf %1041, %1042 : vector<8x128xf32>
    %1044 = arith.subf %1043, %1039 : vector<8x128xf32>
    %1045 = math.log %1037 : vector<8x128xf32>
    %1046 = arith.addf %1044, %1045 : vector<8x128xf32>
    %1047 = arith.subf %990, %1046 : vector<8x128xf32>
    %1048 = arith.addf %1047, %169 : vector<8x128xf32>
    %c4_333 = arith.constant 4 : index
    %1049 = memref.load %arg5[%c4_333] : memref<8xf32, #tpu.memory_space<smem>>
    %1050 = vector.broadcast %1049 : f32 to vector<8x128xf32>
    %1051 = arith.addf %1048, %1050 : vector<8x128xf32>
    %c4_334 = arith.constant 4 : index
    %c0_335 = arith.constant 0 : index
    %c0_336 = arith.constant 0 : index
    %1052 = vector.load %arg6[%c4_334, %c0_335, %c0_336] : memref<8x8x128xf32, #tpu.memory_space<vmem>>, vector<1x8x128xf32>
    %1053 = vector.shape_cast %1052 : vector<1x8x128xf32> to vector<8x128xf32>
    %1054 = vector.shape_cast %1051 : vector<8x128xf32> to vector<1x8x128xf32>
    tpu.vector_store %arg6[%c4_334, %c0_335, %c0_336], %1054 {strides = array<i32>} : memref<8x8x128xf32, #tpu.memory_space<vmem>>, vector<1x8x128xf32>,
    %c5 = arith.constant 5 : index
    %1055 = memref.load %arg3[%c5] : memref<8xf32, #tpu.memory_space<smem>>
    %c5_337 = arith.constant 5 : index
    %1056 = memref.load %arg4[%c5_337] : memref<8xf32, #tpu.memory_space<smem>>
    %1057 = vector.broadcast %1055 : f32 to vector<8x128xf32>
    %1058 = arith.addf %0, %1057 : vector<8x128xf32>
    %1059 = tpu.reciprocal %1058 {approx = true} : vector<8x128xf32> -> vector<8x128xf32>
    %cst_338 = arith.constant 2.50662827 : f32
    %1060 = vector.broadcast %cst_338 : f32 to vector<8x128xf32>
    %1061 = arith.mulf %1060, %1059 : vector<8x128xf32>
    %cst_339 = arith.constant 29969.5938 : f32
    %1062 = vector.broadcast %cst_339 : f32 to vector<8x128xf32>
    %1063 = arith.mulf %1062, %1059 : vector<8x128xf32>
    %cst_340 = arith.constant 32281.0645 : f32
    %1064 = vector.broadcast %cst_340 : f32 to vector<8x128xf32>
    %1065 = arith.addf %1063, %1064 : vector<8x128xf32>
    %1066 = arith.mulf %1065, %1059 : vector<8x128xf32>
    %cst_341 = arith.constant 14484.9141 : f32
    %1067 = vector.broadcast %cst_341 : f32 to vector<8x128xf32>
    %1068 = arith.addf %1066, %1067 : vector<8x128xf32>
    %1069 = arith.mulf %1068, %1059 : vector<8x128xf32>
    %cst_342 = arith.constant 3465.70947 : f32
    %1070 = vector.broadcast %cst_342 : f32 to vector<8x128xf32>
    %1071 = arith.addf %1069, %1070 : vector<8x128xf32>
    %1072 = arith.mulf %1071, %1059 : vector<8x128xf32>
    %cst_343 = arith.constant 466.334198 : f32
    %1073 = vector.broadcast %cst_343 : f32 to vector<8x128xf32>
    %1074 = arith.addf %1072, %1073 : vector<8x128xf32>
    %1075 = arith.mulf %1074, %1059 : vector<8x128xf32>
    %cst_344 = arith.constant 33.4583321 : f32
    %1076 = vector.broadcast %cst_344 : f32 to vector<8x128xf32>
    %1077 = arith.addf %1075, %1076 : vector<8x128xf32>
    %1078 = arith.mulf %1077, %1059 : vector<8x128xf32>
    %cst_345 = arith.constant 1.000000e+00 : f32
    %1079 = vector.broadcast %cst_345 : f32 to vector<8x128xf32>
    %1080 = arith.addf %1078, %1079 : vector<8x128xf32>
    %1081 = arith.mulf %1061, %1080 : vector<8x128xf32>
    %cst_346 = arith.constant 7.200000e+02 : f32
    %1082 = vector.broadcast %cst_346 : f32 to vector<8x128xf32>
    %1083 = arith.mulf %1082, %1059 : vector<8x128xf32>
    %cst_347 = arith.constant 1.764000e+03 : f32
    %1084 = vector.broadcast %cst_347 : f32 to vector<8x128xf32>
    %1085 = arith.addf %1083, %1084 : vector<8x128xf32>
    %1086 = arith.mulf %1085, %1059 : vector<8x128xf32>
    %cst_348 = arith.constant 1.624000e+03 : f32
    %1087 = vector.broadcast %cst_348 : f32 to vector<8x128xf32>
    %1088 = arith.addf %1086, %1087 : vector<8x128xf32>
    %1089 = arith.mulf %1088, %1059 : vector<8x128xf32>
    %cst_349 = arith.constant 7.350000e+02 : f32
    %1090 = vector.broadcast %cst_349 : f32 to vector<8x128xf32>
    %1091 = arith.addf %1089, %1090 : vector<8x128xf32>
    %1092 = arith.mulf %1091, %1059 : vector<8x128xf32>
    %cst_350 = arith.constant 1.750000e+02 : f32
    %1093 = vector.broadcast %cst_350 : f32 to vector<8x128xf32>
    %1094 = arith.addf %1092, %1093 : vector<8x128xf32>
    %1095 = arith.mulf %1094, %1059 : vector<8x128xf32>
    %cst_351 = arith.constant 2.100000e+01 : f32
    %1096 = vector.broadcast %cst_351 : f32 to vector<8x128xf32>
    %1097 = arith.addf %1095, %1096 : vector<8x128xf32>
    %1098 = arith.mulf %1097, %1059 : vector<8x128xf32>
    %cst_352 = arith.constant 1.000000e+00 : f32
    %1099 = vector.broadcast %cst_352 : f32 to vector<8x128xf32>
    %1100 = arith.addf %1098, %1099 : vector<8x128xf32>
    %1101 = tpu.reciprocal %1100 {approx = true} : vector<8x128xf32> -> vector<8x128xf32>
    %1102 = arith.mulf %1081, %1101 : vector<8x128xf32>
    %cst_353 = arith.constant 5.500000e+00 : f32
    %1103 = vector.broadcast %cst_353 : f32 to vector<8x128xf32>
    %1104 = arith.addf %1058, %1103 : vector<8x128xf32>
    %cst_354 = arith.constant 5.000000e-01 : f32
    %1105 = vector.broadcast %cst_354 : f32 to vector<8x128xf32>
    %1106 = arith.addf %1058, %1105 : vector<8x128xf32>
    %1107 = math.log %1104 : vector<8x128xf32>
    %1108 = arith.mulf %1106, %1107 : vector<8x128xf32>
    %1109 = arith.subf %1108, %1104 : vector<8x128xf32>
    %1110 = math.log %1102 : vector<8x128xf32>
    %1111 = arith.addf %1109, %1110 : vector<8x128xf32>
    %1112 = vector.broadcast %1056 : f32 to vector<8x128xf32>
    %1113 = arith.addf %2, %1112 : vector<8x128xf32>
    %1114 = tpu.reciprocal %1113 {approx = true} : vector<8x128xf32> -> vector<8x128xf32>
    %cst_355 = arith.constant 2.50662827 : f32
    %1115 = vector.broadcast %cst_355 : f32 to vector<8x128xf32>
    %1116 = arith.mulf %1115, %1114 : vector<8x128xf32>
    %cst_356 = arith.constant 29969.5938 : f32
    %1117 = vector.broadcast %cst_356 : f32 to vector<8x128xf32>
    %1118 = arith.mulf %1117, %1114 : vector<8x128xf32>
    %cst_357 = arith.constant 32281.0645 : f32
    %1119 = vector.broadcast %cst_357 : f32 to vector<8x128xf32>
    %1120 = arith.addf %1118, %1119 : vector<8x128xf32>
    %1121 = arith.mulf %1120, %1114 : vector<8x128xf32>
    %cst_358 = arith.constant 14484.9141 : f32
    %1122 = vector.broadcast %cst_358 : f32 to vector<8x128xf32>
    %1123 = arith.addf %1121, %1122 : vector<8x128xf32>
    %1124 = arith.mulf %1123, %1114 : vector<8x128xf32>
    %cst_359 = arith.constant 3465.70947 : f32
    %1125 = vector.broadcast %cst_359 : f32 to vector<8x128xf32>
    %1126 = arith.addf %1124, %1125 : vector<8x128xf32>
    %1127 = arith.mulf %1126, %1114 : vector<8x128xf32>
    %cst_360 = arith.constant 466.334198 : f32
    %1128 = vector.broadcast %cst_360 : f32 to vector<8x128xf32>
    %1129 = arith.addf %1127, %1128 : vector<8x128xf32>
    %1130 = arith.mulf %1129, %1114 : vector<8x128xf32>
    %cst_361 = arith.constant 33.4583321 : f32
    %1131 = vector.broadcast %cst_361 : f32 to vector<8x128xf32>
    %1132 = arith.addf %1130, %1131 : vector<8x128xf32>
    %1133 = arith.mulf %1132, %1114 : vector<8x128xf32>
    %cst_362 = arith.constant 1.000000e+00 : f32
    %1134 = vector.broadcast %cst_362 : f32 to vector<8x128xf32>
    %1135 = arith.addf %1133, %1134 : vector<8x128xf32>
    %1136 = arith.mulf %1116, %1135 : vector<8x128xf32>
    %cst_363 = arith.constant 7.200000e+02 : f32
    %1137 = vector.broadcast %cst_363 : f32 to vector<8x128xf32>
    %1138 = arith.mulf %1137, %1114 : vector<8x128xf32>
    %cst_364 = arith.constant 1.764000e+03 : f32
    %1139 = vector.broadcast %cst_364 : f32 to vector<8x128xf32>
    %1140 = arith.addf %1138, %1139 : vector<8x128xf32>
    %1141 = arith.mulf %1140, %1114 : vector<8x128xf32>
    %cst_365 = arith.constant 1.624000e+03 : f32
    %1142 = vector.broadcast %cst_365 : f32 to vector<8x128xf32>
    %1143 = arith.addf %1141, %1142 : vector<8x128xf32>
    %1144 = arith.mulf %1143, %1114 : vector<8x128xf32>
    %cst_366 = arith.constant 7.350000e+02 : f32
    %1145 = vector.broadcast %cst_366 : f32 to vector<8x128xf32>
    %1146 = arith.addf %1144, %1145 : vector<8x128xf32>
    %1147 = arith.mulf %1146, %1114 : vector<8x128xf32>
    %cst_367 = arith.constant 1.750000e+02 : f32
    %1148 = vector.broadcast %cst_367 : f32 to vector<8x128xf32>
    %1149 = arith.addf %1147, %1148 : vector<8x128xf32>
    %1150 = arith.mulf %1149, %1114 : vector<8x128xf32>
    %cst_368 = arith.constant 2.100000e+01 : f32
    %1151 = vector.broadcast %cst_368 : f32 to vector<8x128xf32>
    %1152 = arith.addf %1150, %1151 : vector<8x128xf32>
    %1153 = arith.mulf %1152, %1114 : vector<8x128xf32>
    %cst_369 = arith.constant 1.000000e+00 : f32
    %1154 = vector.broadcast %cst_369 : f32 to vector<8x128xf32>
    %1155 = arith.addf %1153, %1154 : vector<8x128xf32>
    %1156 = tpu.reciprocal %1155 {approx = true} : vector<8x128xf32> -> vector<8x128xf32>
    %1157 = arith.mulf %1136, %1156 : vector<8x128xf32>
    %cst_370 = arith.constant 5.500000e+00 : f32
    %1158 = vector.broadcast %cst_370 : f32 to vector<8x128xf32>
    %1159 = arith.addf %1113, %1158 : vector<8x128xf32>
    %cst_371 = arith.constant 5.000000e-01 : f32
    %1160 = vector.broadcast %cst_371 : f32 to vector<8x128xf32>
    %1161 = arith.addf %1113, %1160 : vector<8x128xf32>
    %1162 = math.log %1159 : vector<8x128xf32>
    %1163 = arith.mulf %1161, %1162 : vector<8x128xf32>
    %1164 = arith.subf %1163, %1159 : vector<8x128xf32>
    %1165 = math.log %1157 : vector<8x128xf32>
    %1166 = arith.addf %1164, %1165 : vector<8x128xf32>
    %1167 = arith.addf %1111, %1166 : vector<8x128xf32>
    %1168 = arith.addf %1055, %1056 : f32
    %1169 = vector.broadcast %1168 : f32 to vector<8x128xf32>
    %1170 = arith.addf %1, %1169 : vector<8x128xf32>
    %1171 = tpu.reciprocal %1170 {approx = true} : vector<8x128xf32> -> vector<8x128xf32>
    %cst_372 = arith.constant 2.50662827 : f32
    %1172 = vector.broadcast %cst_372 : f32 to vector<8x128xf32>
    %1173 = arith.mulf %1172, %1171 : vector<8x128xf32>
    %cst_373 = arith.constant 29969.5938 : f32
    %1174 = vector.broadcast %cst_373 : f32 to vector<8x128xf32>
    %1175 = arith.mulf %1174, %1171 : vector<8x128xf32>
    %cst_374 = arith.constant 32281.0645 : f32
    %1176 = vector.broadcast %cst_374 : f32 to vector<8x128xf32>
    %1177 = arith.addf %1175, %1176 : vector<8x128xf32>
    %1178 = arith.mulf %1177, %1171 : vector<8x128xf32>
    %cst_375 = arith.constant 14484.9141 : f32
    %1179 = vector.broadcast %cst_375 : f32 to vector<8x128xf32>
    %1180 = arith.addf %1178, %1179 : vector<8x128xf32>
    %1181 = arith.mulf %1180, %1171 : vector<8x128xf32>
    %cst_376 = arith.constant 3465.70947 : f32
    %1182 = vector.broadcast %cst_376 : f32 to vector<8x128xf32>
    %1183 = arith.addf %1181, %1182 : vector<8x128xf32>
    %1184 = arith.mulf %1183, %1171 : vector<8x128xf32>
    %cst_377 = arith.constant 466.334198 : f32
    %1185 = vector.broadcast %cst_377 : f32 to vector<8x128xf32>
    %1186 = arith.addf %1184, %1185 : vector<8x128xf32>
    %1187 = arith.mulf %1186, %1171 : vector<8x128xf32>
    %cst_378 = arith.constant 33.4583321 : f32
    %1188 = vector.broadcast %cst_378 : f32 to vector<8x128xf32>
    %1189 = arith.addf %1187, %1188 : vector<8x128xf32>
    %1190 = arith.mulf %1189, %1171 : vector<8x128xf32>
    %cst_379 = arith.constant 1.000000e+00 : f32
    %1191 = vector.broadcast %cst_379 : f32 to vector<8x128xf32>
    %1192 = arith.addf %1190, %1191 : vector<8x128xf32>
    %1193 = arith.mulf %1173, %1192 : vector<8x128xf32>
    %cst_380 = arith.constant 7.200000e+02 : f32
    %1194 = vector.broadcast %cst_380 : f32 to vector<8x128xf32>
    %1195 = arith.mulf %1194, %1171 : vector<8x128xf32>
    %cst_381 = arith.constant 1.764000e+03 : f32
    %1196 = vector.broadcast %cst_381 : f32 to vector<8x128xf32>
    %1197 = arith.addf %1195, %1196 : vector<8x128xf32>
    %1198 = arith.mulf %1197, %1171 : vector<8x128xf32>
    %cst_382 = arith.constant 1.624000e+03 : f32
    %1199 = vector.broadcast %cst_382 : f32 to vector<8x128xf32>
    %1200 = arith.addf %1198, %1199 : vector<8x128xf32>
    %1201 = arith.mulf %1200, %1171 : vector<8x128xf32>
    %cst_383 = arith.constant 7.350000e+02 : f32
    %1202 = vector.broadcast %cst_383 : f32 to vector<8x128xf32>
    %1203 = arith.addf %1201, %1202 : vector<8x128xf32>
    %1204 = arith.mulf %1203, %1171 : vector<8x128xf32>
    %cst_384 = arith.constant 1.750000e+02 : f32
    %1205 = vector.broadcast %cst_384 : f32 to vector<8x128xf32>
    %1206 = arith.addf %1204, %1205 : vector<8x128xf32>
    %1207 = arith.mulf %1206, %1171 : vector<8x128xf32>
    %cst_385 = arith.constant 2.100000e+01 : f32
    %1208 = vector.broadcast %cst_385 : f32 to vector<8x128xf32>
    %1209 = arith.addf %1207, %1208 : vector<8x128xf32>
    %1210 = arith.mulf %1209, %1171 : vector<8x128xf32>
    %cst_386 = arith.constant 1.000000e+00 : f32
    %1211 = vector.broadcast %cst_386 : f32 to vector<8x128xf32>
    %1212 = arith.addf %1210, %1211 : vector<8x128xf32>
    %1213 = tpu.reciprocal %1212 {approx = true} : vector<8x128xf32> -> vector<8x128xf32>
    %1214 = arith.mulf %1193, %1213 : vector<8x128xf32>
    %cst_387 = arith.constant 5.500000e+00 : f32
    %1215 = vector.broadcast %cst_387 : f32 to vector<8x128xf32>
    %1216 = arith.addf %1170, %1215 : vector<8x128xf32>
    %cst_388 = arith.constant 5.000000e-01 : f32
    %1217 = vector.broadcast %cst_388 : f32 to vector<8x128xf32>
    %1218 = arith.addf %1170, %1217 : vector<8x128xf32>
    %1219 = math.log %1216 : vector<8x128xf32>
    %1220 = arith.mulf %1218, %1219 : vector<8x128xf32>
    %1221 = arith.subf %1220, %1216 : vector<8x128xf32>
    %1222 = math.log %1214 : vector<8x128xf32>
    %1223 = arith.addf %1221, %1222 : vector<8x128xf32>
    %1224 = arith.subf %1167, %1223 : vector<8x128xf32>
    %1225 = arith.addf %1224, %169 : vector<8x128xf32>
    %c5_389 = arith.constant 5 : index
    %1226 = memref.load %arg5[%c5_389] : memref<8xf32, #tpu.memory_space<smem>>
    %1227 = vector.broadcast %1226 : f32 to vector<8x128xf32>
    %1228 = arith.addf %1225, %1227 : vector<8x128xf32>
    %c5_390 = arith.constant 5 : index
    %c0_391 = arith.constant 0 : index
    %c0_392 = arith.constant 0 : index
    %1229 = vector.load %arg6[%c5_390, %c0_391, %c0_392] : memref<8x8x128xf32, #tpu.memory_space<vmem>>, vector<1x8x128xf32>
    %1230 = vector.shape_cast %1229 : vector<1x8x128xf32> to vector<8x128xf32>
    %1231 = vector.shape_cast %1228 : vector<8x128xf32> to vector<1x8x128xf32>
    tpu.vector_store %arg6[%c5_390, %c0_391, %c0_392], %1231 {strides = array<i32>} : memref<8x8x128xf32, #tpu.memory_space<vmem>>, vector<1x8x128xf32>,
    %c6 = arith.constant 6 : index
    %1232 = memref.load %arg3[%c6] : memref<8xf32, #tpu.memory_space<smem>>
    %c6_393 = arith.constant 6 : index
    %1233 = memref.load %arg4[%c6_393] : memref<8xf32, #tpu.memory_space<smem>>
    %1234 = vector.broadcast %1232 : f32 to vector<8x128xf32>
    %1235 = arith.addf %0, %1234 : vector<8x128xf32>
    %1236 = tpu.reciprocal %1235 {approx = true} : vector<8x128xf32> -> vector<8x128xf32>
    %cst_394 = arith.constant 2.50662827 : f32
    %1237 = vector.broadcast %cst_394 : f32 to vector<8x128xf32>
    %1238 = arith.mulf %1237, %1236 : vector<8x128xf32>
    %cst_395 = arith.constant 29969.5938 : f32
    %1239 = vector.broadcast %cst_395 : f32 to vector<8x128xf32>
    %1240 = arith.mulf %1239, %1236 : vector<8x128xf32>
    %cst_396 = arith.constant 32281.0645 : f32
    %1241 = vector.broadcast %cst_396 : f32 to vector<8x128xf32>
    %1242 = arith.addf %1240, %1241 : vector<8x128xf32>
    %1243 = arith.mulf %1242, %1236 : vector<8x128xf32>
    %cst_397 = arith.constant 14484.9141 : f32
    %1244 = vector.broadcast %cst_397 : f32 to vector<8x128xf32>
    %1245 = arith.addf %1243, %1244 : vector<8x128xf32>
    %1246 = arith.mulf %1245, %1236 : vector<8x128xf32>
    %cst_398 = arith.constant 3465.70947 : f32
    %1247 = vector.broadcast %cst_398 : f32 to vector<8x128xf32>
    %1248 = arith.addf %1246, %1247 : vector<8x128xf32>
    %1249 = arith.mulf %1248, %1236 : vector<8x128xf32>
    %cst_399 = arith.constant 466.334198 : f32
    %1250 = vector.broadcast %cst_399 : f32 to vector<8x128xf32>
    %1251 = arith.addf %1249, %1250 : vector<8x128xf32>
    %1252 = arith.mulf %1251, %1236 : vector<8x128xf32>
    %cst_400 = arith.constant 33.4583321 : f32
    %1253 = vector.broadcast %cst_400 : f32 to vector<8x128xf32>
    %1254 = arith.addf %1252, %1253 : vector<8x128xf32>
    %1255 = arith.mulf %1254, %1236 : vector<8x128xf32>
    %cst_401 = arith.constant 1.000000e+00 : f32
    %1256 = vector.broadcast %cst_401 : f32 to vector<8x128xf32>
    %1257 = arith.addf %1255, %1256 : vector<8x128xf32>
    %1258 = arith.mulf %1238, %1257 : vector<8x128xf32>
    %cst_402 = arith.constant 7.200000e+02 : f32
    %1259 = vector.broadcast %cst_402 : f32 to vector<8x128xf32>
    %1260 = arith.mulf %1259, %1236 : vector<8x128xf32>
    %cst_403 = arith.constant 1.764000e+03 : f32
    %1261 = vector.broadcast %cst_403 : f32 to vector<8x128xf32>
    %1262 = arith.addf %1260, %1261 : vector<8x128xf32>
    %1263 = arith.mulf %1262, %1236 : vector<8x128xf32>
    %cst_404 = arith.constant 1.624000e+03 : f32
    %1264 = vector.broadcast %cst_404 : f32 to vector<8x128xf32>
    %1265 = arith.addf %1263, %1264 : vector<8x128xf32>
    %1266 = arith.mulf %1265, %1236 : vector<8x128xf32>
    %cst_405 = arith.constant 7.350000e+02 : f32
    %1267 = vector.broadcast %cst_405 : f32 to vector<8x128xf32>
    %1268 = arith.addf %1266, %1267 : vector<8x128xf32>
    %1269 = arith.mulf %1268, %1236 : vector<8x128xf32>
    %cst_406 = arith.constant 1.750000e+02 : f32
    %1270 = vector.broadcast %cst_406 : f32 to vector<8x128xf32>
    %1271 = arith.addf %1269, %1270 : vector<8x128xf32>
    %1272 = arith.mulf %1271, %1236 : vector<8x128xf32>
    %cst_407 = arith.constant 2.100000e+01 : f32
    %1273 = vector.broadcast %cst_407 : f32 to vector<8x128xf32>
    %1274 = arith.addf %1272, %1273 : vector<8x128xf32>
    %1275 = arith.mulf %1274, %1236 : vector<8x128xf32>
    %cst_408 = arith.constant 1.000000e+00 : f32
    %1276 = vector.broadcast %cst_408 : f32 to vector<8x128xf32>
    %1277 = arith.addf %1275, %1276 : vector<8x128xf32>
    %1278 = tpu.reciprocal %1277 {approx = true} : vector<8x128xf32> -> vector<8x128xf32>
    %1279 = arith.mulf %1258, %1278 : vector<8x128xf32>
    %cst_409 = arith.constant 5.500000e+00 : f32
    %1280 = vector.broadcast %cst_409 : f32 to vector<8x128xf32>
    %1281 = arith.addf %1235, %1280 : vector<8x128xf32>
    %cst_410 = arith.constant 5.000000e-01 : f32
    %1282 = vector.broadcast %cst_410 : f32 to vector<8x128xf32>
    %1283 = arith.addf %1235, %1282 : vector<8x128xf32>
    %1284 = math.log %1281 : vector<8x128xf32>
    %1285 = arith.mulf %1283, %1284 : vector<8x128xf32>
    %1286 = arith.subf %1285, %1281 : vector<8x128xf32>
    %1287 = math.log %1279 : vector<8x128xf32>
    %1288 = arith.addf %1286, %1287 : vector<8x128xf32>
    %1289 = vector.broadcast %1233 : f32 to vector<8x128xf32>
    %1290 = arith.addf %2, %1289 : vector<8x128xf32>
    %1291 = tpu.reciprocal %1290 {approx = true} : vector<8x128xf32> -> vector<8x128xf32>
    %cst_411 = arith.constant 2.50662827 : f32
    %1292 = vector.broadcast %cst_411 : f32 to vector<8x128xf32>
    %1293 = arith.mulf %1292, %1291 : vector<8x128xf32>
    %cst_412 = arith.constant 29969.5938 : f32
    %1294 = vector.broadcast %cst_412 : f32 to vector<8x128xf32>
    %1295 = arith.mulf %1294, %1291 : vector<8x128xf32>
    %cst_413 = arith.constant 32281.0645 : f32
    %1296 = vector.broadcast %cst_413 : f32 to vector<8x128xf32>
    %1297 = arith.addf %1295, %1296 : vector<8x128xf32>
    %1298 = arith.mulf %1297, %1291 : vector<8x128xf32>
    %cst_414 = arith.constant 14484.9141 : f32
    %1299 = vector.broadcast %cst_414 : f32 to vector<8x128xf32>
    %1300 = arith.addf %1298, %1299 : vector<8x128xf32>
    %1301 = arith.mulf %1300, %1291 : vector<8x128xf32>
    %cst_415 = arith.constant 3465.70947 : f32
    %1302 = vector.broadcast %cst_415 : f32 to vector<8x128xf32>
    %1303 = arith.addf %1301, %1302 : vector<8x128xf32>
    %1304 = arith.mulf %1303, %1291 : vector<8x128xf32>
    %cst_416 = arith.constant 466.334198 : f32
    %1305 = vector.broadcast %cst_416 : f32 to vector<8x128xf32>
    %1306 = arith.addf %1304, %1305 : vector<8x128xf32>
    %1307 = arith.mulf %1306, %1291 : vector<8x128xf32>
    %cst_417 = arith.constant 33.4583321 : f32
    %1308 = vector.broadcast %cst_417 : f32 to vector<8x128xf32>
    %1309 = arith.addf %1307, %1308 : vector<8x128xf32>
    %1310 = arith.mulf %1309, %1291 : vector<8x128xf32>
    %cst_418 = arith.constant 1.000000e+00 : f32
    %1311 = vector.broadcast %cst_418 : f32 to vector<8x128xf32>
    %1312 = arith.addf %1310, %1311 : vector<8x128xf32>
    %1313 = arith.mulf %1293, %1312 : vector<8x128xf32>
    %cst_419 = arith.constant 7.200000e+02 : f32
    %1314 = vector.broadcast %cst_419 : f32 to vector<8x128xf32>
    %1315 = arith.mulf %1314, %1291 : vector<8x128xf32>
    %cst_420 = arith.constant 1.764000e+03 : f32
    %1316 = vector.broadcast %cst_420 : f32 to vector<8x128xf32>
    %1317 = arith.addf %1315, %1316 : vector<8x128xf32>
    %1318 = arith.mulf %1317, %1291 : vector<8x128xf32>
    %cst_421 = arith.constant 1.624000e+03 : f32
    %1319 = vector.broadcast %cst_421 : f32 to vector<8x128xf32>
    %1320 = arith.addf %1318, %1319 : vector<8x128xf32>
    %1321 = arith.mulf %1320, %1291 : vector<8x128xf32>
    %cst_422 = arith.constant 7.350000e+02 : f32
    %1322 = vector.broadcast %cst_422 : f32 to vector<8x128xf32>
    %1323 = arith.addf %1321, %1322 : vector<8x128xf32>
    %1324 = arith.mulf %1323, %1291 : vector<8x128xf32>
    %cst_423 = arith.constant 1.750000e+02 : f32
    %1325 = vector.broadcast %cst_423 : f32 to vector<8x128xf32>
    %1326 = arith.addf %1324, %1325 : vector<8x128xf32>
    %1327 = arith.mulf %1326, %1291 : vector<8x128xf32>
    %cst_424 = arith.constant 2.100000e+01 : f32
    %1328 = vector.broadcast %cst_424 : f32 to vector<8x128xf32>
    %1329 = arith.addf %1327, %1328 : vector<8x128xf32>
    %1330 = arith.mulf %1329, %1291 : vector<8x128xf32>
    %cst_425 = arith.constant 1.000000e+00 : f32
    %1331 = vector.broadcast %cst_425 : f32 to vector<8x128xf32>
    %1332 = arith.addf %1330, %1331 : vector<8x128xf32>
    %1333 = tpu.reciprocal %1332 {approx = true} : vector<8x128xf32> -> vector<8x128xf32>
    %1334 = arith.mulf %1313, %1333 : vector<8x128xf32>
    %cst_426 = arith.constant 5.500000e+00 : f32
    %1335 = vector.broadcast %cst_426 : f32 to vector<8x128xf32>
    %1336 = arith.addf %1290, %1335 : vector<8x128xf32>
    %cst_427 = arith.constant 5.000000e-01 : f32
    %1337 = vector.broadcast %cst_427 : f32 to vector<8x128xf32>
    %1338 = arith.addf %1290, %1337 : vector<8x128xf32>
    %1339 = math.log %1336 : vector<8x128xf32>
    %1340 = arith.mulf %1338, %1339 : vector<8x128xf32>
    %1341 = arith.subf %1340, %1336 : vector<8x128xf32>
    %1342 = math.log %1334 : vector<8x128xf32>
    %1343 = arith.addf %1341, %1342 : vector<8x128xf32>
    %1344 = arith.addf %1288, %1343 : vector<8x128xf32>
    %1345 = arith.addf %1232, %1233 : f32
    %1346 = vector.broadcast %1345 : f32 to vector<8x128xf32>
    %1347 = arith.addf %1, %1346 : vector<8x128xf32>
    %1348 = tpu.reciprocal %1347 {approx = true} : vector<8x128xf32> -> vector<8x128xf32>
    %cst_428 = arith.constant 2.50662827 : f32
    %1349 = vector.broadcast %cst_428 : f32 to vector<8x128xf32>
    %1350 = arith.mulf %1349, %1348 : vector<8x128xf32>
    %cst_429 = arith.constant 29969.5938 : f32
    %1351 = vector.broadcast %cst_429 : f32 to vector<8x128xf32>
    %1352 = arith.mulf %1351, %1348 : vector<8x128xf32>
    %cst_430 = arith.constant 32281.0645 : f32
    %1353 = vector.broadcast %cst_430 : f32 to vector<8x128xf32>
    %1354 = arith.addf %1352, %1353 : vector<8x128xf32>
    %1355 = arith.mulf %1354, %1348 : vector<8x128xf32>
    %cst_431 = arith.constant 14484.9141 : f32
    %1356 = vector.broadcast %cst_431 : f32 to vector<8x128xf32>
    %1357 = arith.addf %1355, %1356 : vector<8x128xf32>
    %1358 = arith.mulf %1357, %1348 : vector<8x128xf32>
    %cst_432 = arith.constant 3465.70947 : f32
    %1359 = vector.broadcast %cst_432 : f32 to vector<8x128xf32>
    %1360 = arith.addf %1358, %1359 : vector<8x128xf32>
    %1361 = arith.mulf %1360, %1348 : vector<8x128xf32>
    %cst_433 = arith.constant 466.334198 : f32
    %1362 = vector.broadcast %cst_433 : f32 to vector<8x128xf32>
    %1363 = arith.addf %1361, %1362 : vector<8x128xf32>
    %1364 = arith.mulf %1363, %1348 : vector<8x128xf32>
    %cst_434 = arith.constant 33.4583321 : f32
    %1365 = vector.broadcast %cst_434 : f32 to vector<8x128xf32>
    %1366 = arith.addf %1364, %1365 : vector<8x128xf32>
    %1367 = arith.mulf %1366, %1348 : vector<8x128xf32>
    %cst_435 = arith.constant 1.000000e+00 : f32
    %1368 = vector.broadcast %cst_435 : f32 to vector<8x128xf32>
    %1369 = arith.addf %1367, %1368 : vector<8x128xf32>
    %1370 = arith.mulf %1350, %1369 : vector<8x128xf32>
    %cst_436 = arith.constant 7.200000e+02 : f32
    %1371 = vector.broadcast %cst_436 : f32 to vector<8x128xf32>
    %1372 = arith.mulf %1371, %1348 : vector<8x128xf32>
    %cst_437 = arith.constant 1.764000e+03 : f32
    %1373 = vector.broadcast %cst_437 : f32 to vector<8x128xf32>
    %1374 = arith.addf %1372, %1373 : vector<8x128xf32>
    %1375 = arith.mulf %1374, %1348 : vector<8x128xf32>
    %cst_438 = arith.constant 1.624000e+03 : f32
    %1376 = vector.broadcast %cst_438 : f32 to vector<8x128xf32>
    %1377 = arith.addf %1375, %1376 : vector<8x128xf32>
    %1378 = arith.mulf %1377, %1348 : vector<8x128xf32>
    %cst_439 = arith.constant 7.350000e+02 : f32
    %1379 = vector.broadcast %cst_439 : f32 to vector<8x128xf32>
    %1380 = arith.addf %1378, %1379 : vector<8x128xf32>
    %1381 = arith.mulf %1380, %1348 : vector<8x128xf32>
    %cst_440 = arith.constant 1.750000e+02 : f32
    %1382 = vector.broadcast %cst_440 : f32 to vector<8x128xf32>
    %1383 = arith.addf %1381, %1382 : vector<8x128xf32>
    %1384 = arith.mulf %1383, %1348 : vector<8x128xf32>
    %cst_441 = arith.constant 2.100000e+01 : f32
    %1385 = vector.broadcast %cst_441 : f32 to vector<8x128xf32>
    %1386 = arith.addf %1384, %1385 : vector<8x128xf32>
    %1387 = arith.mulf %1386, %1348 : vector<8x128xf32>
    %cst_442 = arith.constant 1.000000e+00 : f32
    %1388 = vector.broadcast %cst_442 : f32 to vector<8x128xf32>
    %1389 = arith.addf %1387, %1388 : vector<8x128xf32>
    %1390 = tpu.reciprocal %1389 {approx = true} : vector<8x128xf32> -> vector<8x128xf32>
    %1391 = arith.mulf %1370, %1390 : vector<8x128xf32>
    %cst_443 = arith.constant 5.500000e+00 : f32
    %1392 = vector.broadcast %cst_443 : f32 to vector<8x128xf32>
    %1393 = arith.addf %1347, %1392 : vector<8x128xf32>
    %cst_444 = arith.constant 5.000000e-01 : f32
    %1394 = vector.broadcast %cst_444 : f32 to vector<8x128xf32>
    %1395 = arith.addf %1347, %1394 : vector<8x128xf32>
    %1396 = math.log %1393 : vector<8x128xf32>
    %1397 = arith.mulf %1395, %1396 : vector<8x128xf32>
    %1398 = arith.subf %1397, %1393 : vector<8x128xf32>
    %1399 = math.log %1391 : vector<8x128xf32>
    %1400 = arith.addf %1398, %1399 : vector<8x128xf32>
    %1401 = arith.subf %1344, %1400 : vector<8x128xf32>
    %1402 = arith.addf %1401, %169 : vector<8x128xf32>
    %c6_445 = arith.constant 6 : index
    %1403 = memref.load %arg5[%c6_445] : memref<8xf32, #tpu.memory_space<smem>>
    %1404 = vector.broadcast %1403 : f32 to vector<8x128xf32>
    %1405 = arith.addf %1402, %1404 : vector<8x128xf32>
    %c6_446 = arith.constant 6 : index
    %c0_447 = arith.constant 0 : index
    %c0_448 = arith.constant 0 : index
    %1406 = vector.load %arg6[%c6_446, %c0_447, %c0_448] : memref<8x8x128xf32, #tpu.memory_space<vmem>>, vector<1x8x128xf32>
    %1407 = vector.shape_cast %1406 : vector<1x8x128xf32> to vector<8x128xf32>
    %1408 = vector.shape_cast %1405 : vector<8x128xf32> to vector<1x8x128xf32>
    tpu.vector_store %arg6[%c6_446, %c0_447, %c0_448], %1408 {strides = array<i32>} : memref<8x8x128xf32, #tpu.memory_space<vmem>>, vector<1x8x128xf32>,
    %c7 = arith.constant 7 : index
    %1409 = memref.load %arg3[%c7] : memref<8xf32, #tpu.memory_space<smem>>
    %c7_449 = arith.constant 7 : index
    %1410 = memref.load %arg4[%c7_449] : memref<8xf32, #tpu.memory_space<smem>>
    %1411 = vector.broadcast %1409 : f32 to vector<8x128xf32>
    %1412 = arith.addf %0, %1411 : vector<8x128xf32>
    %1413 = tpu.reciprocal %1412 {approx = true} : vector<8x128xf32> -> vector<8x128xf32>
    %cst_450 = arith.constant 2.50662827 : f32
    %1414 = vector.broadcast %cst_450 : f32 to vector<8x128xf32>
    %1415 = arith.mulf %1414, %1413 : vector<8x128xf32>
    %cst_451 = arith.constant 29969.5938 : f32
    %1416 = vector.broadcast %cst_451 : f32 to vector<8x128xf32>
    %1417 = arith.mulf %1416, %1413 : vector<8x128xf32>
    %cst_452 = arith.constant 32281.0645 : f32
    %1418 = vector.broadcast %cst_452 : f32 to vector<8x128xf32>
    %1419 = arith.addf %1417, %1418 : vector<8x128xf32>
    %1420 = arith.mulf %1419, %1413 : vector<8x128xf32>
    %cst_453 = arith.constant 14484.9141 : f32
    %1421 = vector.broadcast %cst_453 : f32 to vector<8x128xf32>
    %1422 = arith.addf %1420, %1421 : vector<8x128xf32>
    %1423 = arith.mulf %1422, %1413 : vector<8x128xf32>
    %cst_454 = arith.constant 3465.70947 : f32
    %1424 = vector.broadcast %cst_454 : f32 to vector<8x128xf32>
    %1425 = arith.addf %1423, %1424 : vector<8x128xf32>
    %1426 = arith.mulf %1425, %1413 : vector<8x128xf32>
    %cst_455 = arith.constant 466.334198 : f32
    %1427 = vector.broadcast %cst_455 : f32 to vector<8x128xf32>
    %1428 = arith.addf %1426, %1427 : vector<8x128xf32>
    %1429 = arith.mulf %1428, %1413 : vector<8x128xf32>
    %cst_456 = arith.constant 33.4583321 : f32
    %1430 = vector.broadcast %cst_456 : f32 to vector<8x128xf32>
    %1431 = arith.addf %1429, %1430 : vector<8x128xf32>
    %1432 = arith.mulf %1431, %1413 : vector<8x128xf32>
    %cst_457 = arith.constant 1.000000e+00 : f32
    %1433 = vector.broadcast %cst_457 : f32 to vector<8x128xf32>
    %1434 = arith.addf %1432, %1433 : vector<8x128xf32>
    %1435 = arith.mulf %1415, %1434 : vector<8x128xf32>
    %cst_458 = arith.constant 7.200000e+02 : f32
    %1436 = vector.broadcast %cst_458 : f32 to vector<8x128xf32>
    %1437 = arith.mulf %1436, %1413 : vector<8x128xf32>
    %cst_459 = arith.constant 1.764000e+03 : f32
    %1438 = vector.broadcast %cst_459 : f32 to vector<8x128xf32>
    %1439 = arith.addf %1437, %1438 : vector<8x128xf32>
    %1440 = arith.mulf %1439, %1413 : vector<8x128xf32>
    %cst_460 = arith.constant 1.624000e+03 : f32
    %1441 = vector.broadcast %cst_460 : f32 to vector<8x128xf32>
    %1442 = arith.addf %1440, %1441 : vector<8x128xf32>
    %1443 = arith.mulf %1442, %1413 : vector<8x128xf32>
    %cst_461 = arith.constant 7.350000e+02 : f32
    %1444 = vector.broadcast %cst_461 : f32 to vector<8x128xf32>
    %1445 = arith.addf %1443, %1444 : vector<8x128xf32>
    %1446 = arith.mulf %1445, %1413 : vector<8x128xf32>
    %cst_462 = arith.constant 1.750000e+02 : f32
    %1447 = vector.broadcast %cst_462 : f32 to vector<8x128xf32>
    %1448 = arith.addf %1446, %1447 : vector<8x128xf32>
    %1449 = arith.mulf %1448, %1413 : vector<8x128xf32>
    %cst_463 = arith.constant 2.100000e+01 : f32
    %1450 = vector.broadcast %cst_463 : f32 to vector<8x128xf32>
    %1451 = arith.addf %1449, %1450 : vector<8x128xf32>
    %1452 = arith.mulf %1451, %1413 : vector<8x128xf32>
    %cst_464 = arith.constant 1.000000e+00 : f32
    %1453 = vector.broadcast %cst_464 : f32 to vector<8x128xf32>
    %1454 = arith.addf %1452, %1453 : vector<8x128xf32>
    %1455 = tpu.reciprocal %1454 {approx = true} : vector<8x128xf32> -> vector<8x128xf32>
    %1456 = arith.mulf %1435, %1455 : vector<8x128xf32>
    %cst_465 = arith.constant 5.500000e+00 : f32
    %1457 = vector.broadcast %cst_465 : f32 to vector<8x128xf32>
    %1458 = arith.addf %1412, %1457 : vector<8x128xf32>
    %cst_466 = arith.constant 5.000000e-01 : f32
    %1459 = vector.broadcast %cst_466 : f32 to vector<8x128xf32>
    %1460 = arith.addf %1412, %1459 : vector<8x128xf32>
    %1461 = math.log %1458 : vector<8x128xf32>
    %1462 = arith.mulf %1460, %1461 : vector<8x128xf32>
    %1463 = arith.subf %1462, %1458 : vector<8x128xf32>
    %1464 = math.log %1456 : vector<8x128xf32>
    %1465 = arith.addf %1463, %1464 : vector<8x128xf32>
    %1466 = vector.broadcast %1410 : f32 to vector<8x128xf32>
    %1467 = arith.addf %2, %1466 : vector<8x128xf32>
    %1468 = tpu.reciprocal %1467 {approx = true} : vector<8x128xf32> -> vector<8x128xf32>
    %cst_467 = arith.constant 2.50662827 : f32
    %1469 = vector.broadcast %cst_467 : f32 to vector<8x128xf32>
    %1470 = arith.mulf %1469, %1468 : vector<8x128xf32>
    %cst_468 = arith.constant 29969.5938 : f32
    %1471 = vector.broadcast %cst_468 : f32 to vector<8x128xf32>
    %1472 = arith.mulf %1471, %1468 : vector<8x128xf32>
    %cst_469 = arith.constant 32281.0645 : f32
    %1473 = vector.broadcast %cst_469 : f32 to vector<8x128xf32>
    %1474 = arith.addf %1472, %1473 : vector<8x128xf32>
    %1475 = arith.mulf %1474, %1468 : vector<8x128xf32>
    %cst_470 = arith.constant 14484.9141 : f32
    %1476 = vector.broadcast %cst_470 : f32 to vector<8x128xf32>
    %1477 = arith.addf %1475, %1476 : vector<8x128xf32>
    %1478 = arith.mulf %1477, %1468 : vector<8x128xf32>
    %cst_471 = arith.constant 3465.70947 : f32
    %1479 = vector.broadcast %cst_471 : f32 to vector<8x128xf32>
    %1480 = arith.addf %1478, %1479 : vector<8x128xf32>
    %1481 = arith.mulf %1480, %1468 : vector<8x128xf32>
    %cst_472 = arith.constant 466.334198 : f32
    %1482 = vector.broadcast %cst_472 : f32 to vector<8x128xf32>
    %1483 = arith.addf %1481, %1482 : vector<8x128xf32>
    %1484 = arith.mulf %1483, %1468 : vector<8x128xf32>
    %cst_473 = arith.constant 33.4583321 : f32
    %1485 = vector.broadcast %cst_473 : f32 to vector<8x128xf32>
    %1486 = arith.addf %1484, %1485 : vector<8x128xf32>
    %1487 = arith.mulf %1486, %1468 : vector<8x128xf32>
    %cst_474 = arith.constant 1.000000e+00 : f32
    %1488 = vector.broadcast %cst_474 : f32 to vector<8x128xf32>
    %1489 = arith.addf %1487, %1488 : vector<8x128xf32>
    %1490 = arith.mulf %1470, %1489 : vector<8x128xf32>
    %cst_475 = arith.constant 7.200000e+02 : f32
    %1491 = vector.broadcast %cst_475 : f32 to vector<8x128xf32>
    %1492 = arith.mulf %1491, %1468 : vector<8x128xf32>
    %cst_476 = arith.constant 1.764000e+03 : f32
    %1493 = vector.broadcast %cst_476 : f32 to vector<8x128xf32>
    %1494 = arith.addf %1492, %1493 : vector<8x128xf32>
    %1495 = arith.mulf %1494, %1468 : vector<8x128xf32>
    %cst_477 = arith.constant 1.624000e+03 : f32
    %1496 = vector.broadcast %cst_477 : f32 to vector<8x128xf32>
    %1497 = arith.addf %1495, %1496 : vector<8x128xf32>
    %1498 = arith.mulf %1497, %1468 : vector<8x128xf32>
    %cst_478 = arith.constant 7.350000e+02 : f32
    %1499 = vector.broadcast %cst_478 : f32 to vector<8x128xf32>
    %1500 = arith.addf %1498, %1499 : vector<8x128xf32>
    %1501 = arith.mulf %1500, %1468 : vector<8x128xf32>
    %cst_479 = arith.constant 1.750000e+02 : f32
    %1502 = vector.broadcast %cst_479 : f32 to vector<8x128xf32>
    %1503 = arith.addf %1501, %1502 : vector<8x128xf32>
    %1504 = arith.mulf %1503, %1468 : vector<8x128xf32>
    %cst_480 = arith.constant 2.100000e+01 : f32
    %1505 = vector.broadcast %cst_480 : f32 to vector<8x128xf32>
    %1506 = arith.addf %1504, %1505 : vector<8x128xf32>
    %1507 = arith.mulf %1506, %1468 : vector<8x128xf32>
    %cst_481 = arith.constant 1.000000e+00 : f32
    %1508 = vector.broadcast %cst_481 : f32 to vector<8x128xf32>
    %1509 = arith.addf %1507, %1508 : vector<8x128xf32>
    %1510 = tpu.reciprocal %1509 {approx = true} : vector<8x128xf32> -> vector<8x128xf32>
    %1511 = arith.mulf %1490, %1510 : vector<8x128xf32>
    %cst_482 = arith.constant 5.500000e+00 : f32
    %1512 = vector.broadcast %cst_482 : f32 to vector<8x128xf32>
    %1513 = arith.addf %1467, %1512 : vector<8x128xf32>
    %cst_483 = arith.constant 5.000000e-01 : f32
    %1514 = vector.broadcast %cst_483 : f32 to vector<8x128xf32>
    %1515 = arith.addf %1467, %1514 : vector<8x128xf32>
    %1516 = math.log %1513 : vector<8x128xf32>
    %1517 = arith.mulf %1515, %1516 : vector<8x128xf32>
    %1518 = arith.subf %1517, %1513 : vector<8x128xf32>
    %1519 = math.log %1511 : vector<8x128xf32>
    %1520 = arith.addf %1518, %1519 : vector<8x128xf32>
    %1521 = arith.addf %1465, %1520 : vector<8x128xf32>
    %1522 = arith.addf %1409, %1410 : f32
    %1523 = vector.broadcast %1522 : f32 to vector<8x128xf32>
    %1524 = arith.addf %1, %1523 : vector<8x128xf32>
    %1525 = tpu.reciprocal %1524 {approx = true} : vector<8x128xf32> -> vector<8x128xf32>
    %cst_484 = arith.constant 2.50662827 : f32
    %1526 = vector.broadcast %cst_484 : f32 to vector<8x128xf32>
    %1527 = arith.mulf %1526, %1525 : vector<8x128xf32>
    %cst_485 = arith.constant 29969.5938 : f32
    %1528 = vector.broadcast %cst_485 : f32 to vector<8x128xf32>
    %1529 = arith.mulf %1528, %1525 : vector<8x128xf32>
    %cst_486 = arith.constant 32281.0645 : f32
    %1530 = vector.broadcast %cst_486 : f32 to vector<8x128xf32>
    %1531 = arith.addf %1529, %1530 : vector<8x128xf32>
    %1532 = arith.mulf %1531, %1525 : vector<8x128xf32>
    %cst_487 = arith.constant 14484.9141 : f32
    %1533 = vector.broadcast %cst_487 : f32 to vector<8x128xf32>
    %1534 = arith.addf %1532, %1533 : vector<8x128xf32>
    %1535 = arith.mulf %1534, %1525 : vector<8x128xf32>
    %cst_488 = arith.constant 3465.70947 : f32
    %1536 = vector.broadcast %cst_488 : f32 to vector<8x128xf32>
    %1537 = arith.addf %1535, %1536 : vector<8x128xf32>
    %1538 = arith.mulf %1537, %1525 : vector<8x128xf32>
    %cst_489 = arith.constant 466.334198 : f32
    %1539 = vector.broadcast %cst_489 : f32 to vector<8x128xf32>
    %1540 = arith.addf %1538, %1539 : vector<8x128xf32>
    %1541 = arith.mulf %1540, %1525 : vector<8x128xf32>
    %cst_490 = arith.constant 33.4583321 : f32
    %1542 = vector.broadcast %cst_490 : f32 to vector<8x128xf32>
    %1543 = arith.addf %1541, %1542 : vector<8x128xf32>
    %1544 = arith.mulf %1543, %1525 : vector<8x128xf32>
    %cst_491 = arith.constant 1.000000e+00 : f32
    %1545 = vector.broadcast %cst_491 : f32 to vector<8x128xf32>
    %1546 = arith.addf %1544, %1545 : vector<8x128xf32>
    %1547 = arith.mulf %1527, %1546 : vector<8x128xf32>
    %cst_492 = arith.constant 7.200000e+02 : f32
    %1548 = vector.broadcast %cst_492 : f32 to vector<8x128xf32>
    %1549 = arith.mulf %1548, %1525 : vector<8x128xf32>
    %cst_493 = arith.constant 1.764000e+03 : f32
    %1550 = vector.broadcast %cst_493 : f32 to vector<8x128xf32>
    %1551 = arith.addf %1549, %1550 : vector<8x128xf32>
    %1552 = arith.mulf %1551, %1525 : vector<8x128xf32>
    %cst_494 = arith.constant 1.624000e+03 : f32
    %1553 = vector.broadcast %cst_494 : f32 to vector<8x128xf32>
    %1554 = arith.addf %1552, %1553 : vector<8x128xf32>
    %1555 = arith.mulf %1554, %1525 : vector<8x128xf32>
    %cst_495 = arith.constant 7.350000e+02 : f32
    %1556 = vector.broadcast %cst_495 : f32 to vector<8x128xf32>
    %1557 = arith.addf %1555, %1556 : vector<8x128xf32>
    %1558 = arith.mulf %1557, %1525 : vector<8x128xf32>
    %cst_496 = arith.constant 1.750000e+02 : f32
    %1559 = vector.broadcast %cst_496 : f32 to vector<8x128xf32>
    %1560 = arith.addf %1558, %1559 : vector<8x128xf32>
    %1561 = arith.mulf %1560, %1525 : vector<8x128xf32>
    %cst_497 = arith.constant 2.100000e+01 : f32
    %1562 = vector.broadcast %cst_497 : f32 to vector<8x128xf32>
    %1563 = arith.addf %1561, %1562 : vector<8x128xf32>
    %1564 = arith.mulf %1563, %1525 : vector<8x128xf32>
    %cst_498 = arith.constant 1.000000e+00 : f32
    %1565 = vector.broadcast %cst_498 : f32 to vector<8x128xf32>
    %1566 = arith.addf %1564, %1565 : vector<8x128xf32>
    %1567 = tpu.reciprocal %1566 {approx = true} : vector<8x128xf32> -> vector<8x128xf32>
    %1568 = arith.mulf %1547, %1567 : vector<8x128xf32>
    %cst_499 = arith.constant 5.500000e+00 : f32
    %1569 = vector.broadcast %cst_499 : f32 to vector<8x128xf32>
    %1570 = arith.addf %1524, %1569 : vector<8x128xf32>
    %cst_500 = arith.constant 5.000000e-01 : f32
    %1571 = vector.broadcast %cst_500 : f32 to vector<8x128xf32>
    %1572 = arith.addf %1524, %1571 : vector<8x128xf32>
    %1573 = math.log %1570 : vector<8x128xf32>
    %1574 = arith.mulf %1572, %1573 : vector<8x128xf32>
    %1575 = arith.subf %1574, %1570 : vector<8x128xf32>
    %1576 = math.log %1568 : vector<8x128xf32>
    %1577 = arith.addf %1575, %1576 : vector<8x128xf32>
    %1578 = arith.subf %1521, %1577 : vector<8x128xf32>
    %1579 = arith.addf %1578, %169 : vector<8x128xf32>
    %c7_501 = arith.constant 7 : index
    %1580 = memref.load %arg5[%c7_501] : memref<8xf32, #tpu.memory_space<smem>>
    %1581 = vector.broadcast %1580 : f32 to vector<8x128xf32>
    %1582 = arith.addf %1579, %1581 : vector<8x128xf32>
    %c7_502 = arith.constant 7 : index
    %c0_503 = arith.constant 0 : index
    %c0_504 = arith.constant 0 : index
    %1583 = vector.load %arg6[%c7_502, %c0_503, %c0_504] : memref<8x8x128xf32, #tpu.memory_space<vmem>>, vector<1x8x128xf32>
    %1584 = vector.shape_cast %1583 : vector<1x8x128xf32> to vector<8x128xf32>
    %1585 = vector.shape_cast %1582 : vector<8x128xf32> to vector<1x8x128xf32>
    tpu.vector_store %arg6[%c7_502, %c0_503, %c0_504], %1585 {strides = array<i32>} : memref<8x8x128xf32, #tpu.memory_space<vmem>>, vector<1x8x128xf32>,
    return
  }
  func.func @transform_0(%arg0: i32) -> (i32, i32) {
    %c0_i32 = arith.constant 0 : i32
    %c0_i32_0 = arith.constant 0 : i32
    return %c0_i32, %arg0 : i32, i32
  }
  func.func @transform_1(%arg0: i32) -> (i32, i32) {
    %c0_i32 = arith.constant 0 : i32
    %c0_i32_0 = arith.constant 0 : i32
    return %c0_i32, %arg0 : i32, i32
  }
  func.func @transform_2(%arg0: i32) -> i32 {
    %c0_i32 = arith.constant 0 : i32
    %c0_i32_0 = arith.constant 0 : i32
    return %c0_i32 : i32
  }
  func.func @transform_3(%arg0: i32) -> i32 {
    %c0_i32 = arith.constant 0 : i32
    %c0_i32_0 = arith.constant 0 : i32
    return %c0_i32 : i32
  }
  func.func @transform_4(%arg0: i32) -> i32 {
    %c0_i32 = arith.constant 0 : i32
    %c0_i32_0 = arith.constant 0 : i32
    return %c0_i32 : i32
  }
  func.func @transform_5(%arg0: i32) -> (i32, i32, i32) {
    %c0_i32 = arith.constant 0 : i32
    %c0_i32_0 = arith.constant 0 : i32
    %c0_i32_1 = arith.constant 0 : i32
    return %c0_i32, %c0_i32_0, %arg0 : i32, i32, i32
  }
}

</mosaic_0001>

<llo_original>
// kernel: tpu_custom_call.1
$region0: #{tpu_custom_call.1}
  #allocation0 [shape = 'u32[]', space=smem, size = 0x4, offset = 0x4, fixed_abs, tag = 'smem constant byte address 0x4 - core index']
  #allocation1 [shape = 'u32[144,128]{1,0:T(1,128)}', space=vmem, size = 0x12000, scoped, tag = 'internal scratch']
  %s0 = inlined_call_operand.hbm [shape: f32[8,128], index: 0, kind: input, shape index: {}]
  %s1 = inlined_call_operand.hbm [shape: f32[8,128], index: 1, kind: input, shape index: {}]
  %s2 = inlined_call_operand.vmem [shape: f32[8], index: 2, kind: input, shape index: {}]
  %s3 = inlined_call_operand.vmem [shape: f32[8], index: 3, kind: input, shape index: {}]
  %s4 = inlined_call_operand.vmem [shape: f32[8], index: 4, kind: input, shape index: {}]
  %s5 = inlined_call_operand.hbm [shape: f32[8,8,128], index: 5, kind: output, shape index: {}]
  %s6 = sld [smem:[#allocation0]]
  $region50: #{tpu_custom_call.1} parent=0
    _
  %s8 = ssub.s32 1, %s6
  %s9 = scalar_select 0, %s8, %s6
  $region1: #{tpu_custom_call.1} parent=0
    #allocation2 [shape = 'u8[4096]{0}', space=vmem, size = 0x1000, scoped, tag = 'input window, operand 0, single buffered']
    #allocation3 [shape = 's32[1]{0}', space=sflag, size = 0x4, scoped, tag = 'scoped memory for tpu_custom_call.1']
    #allocation4 [shape = 's32[1]{0}', space=sflag, size = 0x4, scoped, tag = 'scoped memory for tpu_custom_call.1']
    #allocation5 [shape = 's32[1]{0}', space=sflag, size = 0x4, scoped, tag = 'scoped memory for tpu_custom_call.1']
    #allocation6 [shape = 'u8[4096]{0}', space=vmem, size = 0x1000, scoped, tag = 'input window, operand 1, single buffered']
    #allocation7 [shape = 's32[1]{0}', space=sflag, size = 0x4, scoped, tag = 'scoped memory for tpu_custom_call.1']
    #allocation8 [shape = 'u8[512]{0}', space=smem, size = 0x200, scoped, tag = 'input window, operand 2, single buffered']
    #allocation9 [shape = 'u8[512]{0}', space=smem, size = 0x200, scoped, tag = 'input window, operand 3, single buffered']
    #allocation10 [shape = 's32[1]{0}', space=sflag, size = 0x4, scoped, tag = 'scoped memory for tpu_custom_call.1']
    #allocation11 [shape = 'u8[512]{0}', space=smem, size = 0x200, scoped, tag = 'input window, operand 4, single buffered']
    #allocation12 [shape = 'u8[32768]{0}', space=vmem, size = 0x8000, scoped, tag = 'output window, operand 0, single buffered']
    %10 = vsyncpa [#allocation3], 0
    %11 = vsyncpa [#allocation7], 0
    %12 = vsyncpa [#allocation5], 0
    %13 = vsyncpa [#allocation10], 0
    %14 = vsyncpa [#allocation4], 0
    // Predicated region
    $region2: #{tpu_custom_call.1} parent=1 // pred_check
      _
    $region3: #{tpu_custom_call.1} parent=1 // pred_check_branch
      %16 = sbr.rel (0) target = $region5
    $region4: #{tpu_custom_call.1} parent=1 // pred_region
      %s18 = ssub.s32 128, 128
      %19 = vsyncadd [#allocation3], %s18
      %s21 = sshll.u32 [#allocation2], 4
      %s22 = int_to_ptr.vmem [resolvable:$true] %s21
      %24 = dma.hbm_to_vmem [thread:$0]  %s0, 128, %s22, [#allocation3]
    $region5: #{tpu_custom_call.1} parent=1 // pred_fallthru
      _
    // Predicated region
    $region6: #{tpu_custom_call.1} parent=1 // pred_check
      _
    $region7: #{tpu_custom_call.1} parent=1 // pred_check_branch
      %26 = sbr.rel (0) target = $region9
    $region8: #{tpu_custom_call.1} parent=1 // pred_region
      %s28 = ssub.s32 128, 128
      %29 = vsyncadd [#allocation7], %s28
      %s31 = sshll.u32 [#allocation6], 4
      %s32 = int_to_ptr.vmem [resolvable:$true] %s31
      %34 = dma.hbm_to_vmem [thread:$0]  %s1, 128, %s32, [#allocation7]
    $region9: #{tpu_custom_call.1} parent=1 // pred_fallthru
      _
    // Predicated region
    $region10: #{tpu_custom_call.1} parent=1 // pred_check
      _
    $region11: #{tpu_custom_call.1} parent=1 // pred_check_branch
      %36 = sbr.rel (0) target = $region13
    $region12: #{tpu_custom_call.1} parent=1 // pred_region
      %s38 = ssub.s32 16, 16
      %39 = vsyncadd [#allocation5], %s38
      %s41 = sshll.u32 %s2, 4
      %s42 = int_to_ptr.vmem [resolvable:$true] %s41
      %44 = dma.vmem_to_smem %s42, 16, [#allocation8], [#allocation5]
    $region13: #{tpu_custom_call.1} parent=1 // pred_fallthru
      _
    // Predicated region
    $region14: #{tpu_custom_call.1} parent=1 // pred_check
      _
    $region15: #{tpu_custom_call.1} parent=1 // pred_check_branch
      %46 = sbr.rel (0) target = $region17
    $region16: #{tpu_custom_call.1} parent=1 // pred_region
      %s48 = ssub.s32 16, 16
      %49 = vsyncadd [#allocation10], %s48
      %s51 = sshll.u32 %s3, 4
      %s52 = int_to_ptr.vmem [resolvable:$true] %s51
      %54 = dma.vmem_to_smem %s52, 16, [#allocation9], [#allocation10]
    $region17: #{tpu_custom_call.1} parent=1 // pred_fallthru
      _
    // Predicated region
    $region18: #{tpu_custom_call.1} parent=1 // pred_check
      _
    $region19: #{tpu_custom_call.1} parent=1 // pred_check_branch
      %56 = sbr.rel (0) target = $region21
    $region20: #{tpu_custom_call.1} parent=1 // pred_region
      %s58 = ssub.s32 16, 16
      %59 = vsyncadd [#allocation10], %s58
      %s61 = sshll.u32 %s4, 4
      %s62 = int_to_ptr.vmem [resolvable:$true] %s61
      %64 = dma.vmem_to_smem %s62, 16, [#allocation11], [#allocation10]
    $region21: #{tpu_custom_call.1} parent=1 // pred_fallthru
      _
    // Predicated region
    $region22: #{tpu_custom_call.1} parent=1 // pred_check
      _
    $region23: #{tpu_custom_call.1} parent=1 // pred_check_branch
      %66 = sbr.rel (0) target = $region25
    $region24: #{tpu_custom_call.1} parent=1 // pred_region
      %67 = dma.done [#allocation3], 128
    $region25: #{tpu_custom_call.1} parent=1 // pred_fallthru
      _
    // Predicated region
    $region26: #{tpu_custom_call.1} parent=1 // pred_check
      _
    $region27: #{tpu_custom_call.1} parent=1 // pred_check_branch
      %69 = sbr.rel (0) target = $region29
    $region28: #{tpu_custom_call.1} parent=1 // pred_region
      %70 = dma.done [#allocation7], 128
    $region29: #{tpu_custom_call.1} parent=1 // pred_fallthru
      _
    // Predicated region
    $region30: #{tpu_custom_call.1} parent=1 // pred_check
      _
    $region31: #{tpu_custom_call.1} parent=1 // pred_check_branch
      %72 = sbr.rel (0) target = $region33
    $region32: #{tpu_custom_call.1} parent=1 // pred_region
      %73 = dma.done [#allocation5], 16
    $region33: #{tpu_custom_call.1} parent=1 // pred_fallthru
      _
    // Predicated region
    $region34: #{tpu_custom_call.1} parent=1 // pred_check
      _
    $region35: #{tpu_custom_call.1} parent=1 // pred_check_branch
      %75 = sbr.rel (0) target = $region37
    $region36: #{tpu_custom_call.1} parent=1 // pred_region
      %76 = dma.done [#allocation10], 16
    $region37: #{tpu_custom_call.1} parent=1 // pred_fallthru
      _
    // Predicated region
    $region38: #{tpu_custom_call.1} parent=1 // pred_check
      _
    $region39: #{tpu_custom_call.1} parent=1 // pred_check_branch
      %78 = sbr.rel (0) target = $region41
    $region40: #{tpu_custom_call.1} parent=1 // pred_region
      %79 = dma.done [#allocation10], 16
    $region41: #{tpu_custom_call.1} parent=1 // pred_fallthru
      _
    %80 = sfence
    %v81 = vld [vmem:[#allocation2] sm:$0xff]
    %v82 = vld [vmem:[#allocation6] sm:$0xff]
    %v83 = vsub.f32 %v82, %v81
    %v84 = vadd.f32 %v82, 1.0
    %v85 = vrcp.pop %v84
    %v86 = vmul.f32 %v85, 2.5066283
    %v87 = vmul.f32 %v85, 29969.594
    %v88 = vadd.f32 %v87, 32281.064
    %v89 = vmul.f32 %v88, %v85
    %v90 = vadd.f32 %v89, 14484.914
    %v91 = vmul.f32 %v90, %v85
    %v92 = vadd.f32 %v91, 3465.7095
    %v93 = vmul.f32 %v92, %v85
    %v94 = vadd.f32 %v93, 466.3342
    %v95 = vmul.f32 %v94, %v85
    %v96 = vadd.f32 %v95, 33.458332
    %v97 = vmul.f32 %v96, %v85
    %v98 = vadd.f32 %v97, 1.0
    %v99 = vmul.f32 %v86, %v98
    %v100 = vmul.f32 %v85, 720.0
    %v101 = vadd.f32 %v100, 1764.0
    %v102 = vmul.f32 %v101, %v85
    %v103 = vadd.f32 %v102, 1624.0
    %v104 = vmul.f32 %v103, %v85
    %v105 = vadd.f32 %v104, 735.0
    %v106 = vmul.f32 %v105, %v85
    %v107 = vadd.f32 %v106, 175.0
    %v108 = vmul.f32 %v107, %v85
    %v109 = vadd.f32 %v108, 21.0
    %v110 = vmul.f32 %v109, %v85
    %v111 = vadd.f32 %v110, 1.0
    %v112 = vrcp.pop %v111
    %v113 = vmul.f32 %v99, %v112
    %v114 = vadd.f32 %v84, 5.5
    %v115 = vadd.f32 %v84, 0.5
    %v116 = vlog2.pop %v114
    %v117 = vmul.f32 %v116, 0.6931472
    %v118 = vmul.f32 %v115, %v117
    %v119 = vsub.f32 %v118, %v114
    %v120 = vlog2.pop %v113
    %v121 = vmul.f32 %v120, 0.6931472
    %v122 = vadd.f32 %v119, %v121
    %v123 = vadd.f32 %v81, 1.0
    %v124 = vrcp.pop %v123
    %v125 = vmul.f32 %v124, 2.5066283
    %v126 = vmul.f32 %v124, 29969.594
    %v127 = vadd.f32 %v126, 32281.064
    %v128 = vmul.f32 %v127, %v124
    %v129 = vadd.f32 %v128, 14484.914
    %v130 = vmul.f32 %v129, %v124
    %v131 = vadd.f32 %v130, 3465.7095
    %v132 = vmul.f32 %v131, %v124
    %v133 = vadd.f32 %v132, 466.3342
    %v134 = vmul.f32 %v133, %v124
    %v135 = vadd.f32 %v134, 33.458332
    %v136 = vmul.f32 %v135, %v124
    %v137 = vadd.f32 %v136, 1.0
    %v138 = vmul.f32 %v125, %v137
    %v139 = vmul.f32 %v124, 720.0
    %v140 = vadd.f32 %v139, 1764.0
    %v141 = vmul.f32 %v140, %v124
    %v142 = vadd.f32 %v141, 1624.0
    %v143 = vmul.f32 %v142, %v124
    %v144 = vadd.f32 %v143, 735.0
    %v145 = vmul.f32 %v144, %v124
    %v146 = vadd.f32 %v145, 175.0
    %v147 = vmul.f32 %v146, %v124
    %v148 = vadd.f32 %v147, 21.0
    %v149 = vmul.f32 %v148, %v124
    %v150 = vadd.f32 %v149, 1.0
    %v151 = vrcp.pop %v150
    %v152 = vmul.f32 %v138, %v151
    %v153 = vadd.f32 %v123, 5.5
    %v154 = vadd.f32 %v123, 0.5
    %v155 = vlog2.pop %v153
    %v156 = vmul.f32 %v155, 0.6931472
    %v157 = vmul.f32 %v154, %v156
    %v158 = vsub.f32 %v157, %v153
    %v159 = vlog2.pop %v152
    %v160 = vmul.f32 %v159, 0.6931472
    %v161 = vadd.f32 %v158, %v160
    %v162 = vsub.f32 %v122, %v161
    %v163 = vadd.f32 %v83, 1.0
    %v164 = vrcp.pop %v163
    %v165 = vmul.f32 %v164, 2.5066283
    %v166 = vmul.f32 %v164, 29969.594
    %v167 = vadd.f32 %v166, 32281.064
    %v168 = vmul.f32 %v167, %v164
    %v169 = vadd.f32 %v168, 14484.914
    %v170 = vmul.f32 %v169, %v164
    %v171 = vadd.f32 %v170, 3465.7095
    %v172 = vmul.f32 %v171, %v164
    %v173 = vadd.f32 %v172, 466.3342
    %v174 = vmul.f32 %v173, %v164
    %v175 = vadd.f32 %v174, 33.458332
    %v176 = vmul.f32 %v175, %v164
    %v177 = vadd.f32 %v176, 1.0
    %v178 = vmul.f32 %v165, %v177
    %v179 = vmul.f32 %v164, 720.0
    %v180 = vadd.f32 %v179, 1764.0
    %v181 = vmul.f32 %v180, %v164
    %v182 = vadd.f32 %v181, 1624.0
    %v183 = vmul.f32 %v182, %v164
    %v184 = vadd.f32 %v183, 735.0
    %v185 = vmul.f32 %v184, %v164
    %v186 = vadd.f32 %v185, 175.0
    %v187 = vmul.f32 %v186, %v164
    %v188 = vadd.f32 %v187, 21.0
    %v189 = vmul.f32 %v188, %v164
    %v190 = vadd.f32 %v189, 1.0
    %v191 = vrcp.pop %v190
    %v192 = vmul.f32 %v178, %v191
    %v193 = vadd.f32 %v163, 5.5
    %v194 = vadd.f32 %v163, 0.5
    %v195 = vlog2.pop %v193
    %v196 = vmul.f32 %v195, 0.6931472
    %v197 = vmul.f32 %v194, %v196
    %v198 = vsub.f32 %v197, %v193
    %v199 = vlog2.pop %v192
    %v200 = vmul.f32 %v199, 0.6931472
    %v201 = vadd.f32 %v198, %v200
    %v202 = vsub.f32 %v162, %v201
    %s203 = sld [smem:[#allocation8]]
    %s204 = sld [smem:[#allocation9]]
    %v205 = vstv %s203
    %v206 = vadd.f32 %v81, %v205
    %v207 = vrcp.pop %v206
    %v208 = vmul.f32 %v207, 2.5066283
    %v209 = vmul.f32 %v207, 29969.594
    %v210 = vadd.f32 %v209, 32281.064
    %v211 = vmul.f32 %v210, %v207
    %v212 = vadd.f32 %v211, 14484.914
    %v213 = vmul.f32 %v212, %v207
    %v214 = vadd.f32 %v213, 3465.7095
    %v215 = vmul.f32 %v214, %v207
    %v216 = vadd.f32 %v215, 466.3342
    %v217 = vmul.f32 %v216, %v207
    %v218 = vadd.f32 %v217, 33.458332
    %v219 = vmul.f32 %v218, %v207
    %v220 = vadd.f32 %v219, 1.0
    %v221 = vmul.f32 %v208, %v220
    %v222 = vmul.f32 %v207, 720.0
    %v223 = vadd.f32 %v222, 1764.0
    %v224 = vmul.f32 %v223, %v207
    %v225 = vadd.f32 %v224, 1624.0
    %v226 = vmul.f32 %v225, %v207
    %v227 = vadd.f32 %v226, 735.0
    %v228 = vmul.f32 %v227, %v207
    %v229 = vadd.f32 %v228, 175.0
    %v230 = vmul.f32 %v229, %v207
    %v231 = vadd.f32 %v230, 21.0
    %v232 = vmul.f32 %v231, %v207
    %v233 = vadd.f32 %v232, 1.0
    %v234 = vrcp.pop %v233
    %v235 = vmul.f32 %v221, %v234
    %v236 = vadd.f32 %v206, 5.5
    %v237 = vadd.f32 %v206, 0.5
    %v238 = vlog2.pop %v236
    %v239 = vmul.f32 %v238, 0.6931472
    %v240 = vmul.f32 %v237, %v239
    %v241 = vsub.f32 %v240, %v236
    %v242 = vlog2.pop %v235
    %v243 = vmul.f32 %v242, 0.6931472
    %v244 = vadd.f32 %v241, %v243
    %v245 = vstv %s204
    %v246 = vadd.f32 %v83, %v245
    %v247 = vrcp.pop %v246
    %v248 = vmul.f32 %v247, 2.5066283
    %v249 = vmul.f32 %v247, 29969.594
    %v250 = vadd.f32 %v249, 32281.064
    %v251 = vmul.f32 %v250, %v247
    %v252 = vadd.f32 %v251, 14484.914
    %v253 = vmul.f32 %v252, %v247
    %v254 = vadd.f32 %v253, 3465.7095
    %v255 = vmul.f32 %v254, %v247
    %v256 = vadd.f32 %v255, 466.3342
    %v257 = vmul.f32 %v256, %v247
    %v258 = vadd.f32 %v257, 33.458332
    %v259 = vmul.f32 %v258, %v247
    %v260 = vadd.f32 %v259, 1.0
    %v261 = vmul.f32 %v248, %v260
    %v262 = vmul.f32 %v247, 720.0
    %v263 = vadd.f32 %v262, 1764.0
    %v264 = vmul.f32 %v263, %v247
    %v265 = vadd.f32 %v264, 1624.0
    %v266 = vmul.f32 %v265, %v247
    %v267 = vadd.f32 %v266, 735.0
    %v268 = vmul.f32 %v267, %v247
    %v269 = vadd.f32 %v268, 175.0
    %v270 = vmul.f32 %v269, %v247
    %v271 = vadd.f32 %v270, 21.0
    %v272 = vmul.f32 %v271, %v247
    %v273 = vadd.f32 %v272, 1.0
    %v274 = vrcp.pop %v273
    %v275 = vmul.f32 %v261, %v274
    %v276 = vadd.f32 %v246, 5.5
    %v277 = vadd.f32 %v246, 0.5
    %v278 = vlog2.pop %v276
    %v279 = vmul.f32 %v278, 0.6931472
    %v280 = vmul.f32 %v277, %v279
    %v281 = vsub.f32 %v280, %v276
    %v282 = vlog2.pop %v275
    %v283 = vmul.f32 %v282, 0.6931472
    %v284 = vadd.f32 %v281, %v283
    %v285 = vadd.f32 %v244, %v284
    %s286 = sadd.f32 %s203, %s204
    %v287 = vstv %s286
    %v288 = vadd.f32 %v82, %v287
    %v289 = vrcp.pop %v288
    %v290 = vmul.f32 %v289, 2.5066283
    %v291 = vmul.f32 %v289, 29969.594
    %v292 = vadd.f32 %v291, 32281.064
    %v293 = vmul.f32 %v292, %v289
    %v294 = vadd.f32 %v293, 14484.914
    %v295 = vmul.f32 %v294, %v289
    %v296 = vadd.f32 %v295, 3465.7095
    %v297 = vmul.f32 %v296, %v289
    %v298 = vadd.f32 %v297, 466.3342
    %v299 = vmul.f32 %v298, %v289
    %v300 = vadd.f32 %v299, 33.458332
    %v301 = vmul.f32 %v300, %v289
    %v302 = vadd.f32 %v301, 1.0
    %v303 = vmul.f32 %v290, %v302
    %v304 = vmul.f32 %v289, 720.0
    %v305 = vadd.f32 %v304, 1764.0
    %v306 = vmul.f32 %v305, %v289
    %v307 = vadd.f32 %v306, 1624.0
    %v308 = vmul.f32 %v307, %v289
    %v309 = vadd.f32 %v308, 735.0
    %v310 = vmul.f32 %v309, %v289
    %v311 = vadd.f32 %v310, 175.0
    %v312 = vmul.f32 %v311, %v289
    %v313 = vadd.f32 %v312, 21.0
    %v314 = vmul.f32 %v313, %v289
    %v315 = vadd.f32 %v314, 1.0
    %v316 = vrcp.pop %v315
    %v317 = vmul.f32 %v303, %v316
    %v318 = vadd.f32 %v288, 5.5
    %v319 = vadd.f32 %v288, 0.5
    %v320 = vlog2.pop %v318
    %v321 = vmul.f32 %v320, 0.6931472
    %v322 = vmul.f32 %v319, %v321
    %v323 = vsub.f32 %v322, %v318
    %v324 = vlog2.pop %v317
    %v325 = vmul.f32 %v324, 0.6931472
    %v326 = vadd.f32 %v323, %v325
    %v327 = vsub.f32 %v285, %v326
    %v328 = vadd.f32 %v327, %v202
    %s329 = sld [smem:[#allocation11]]
    %v330 = vstv %s329
    %v331 = vadd.f32 %v328, %v330
    %332 = vst [vmem:[#allocation12] sm:$0xff] %v331
    %s333 = sld [smem:[#allocation8 + $0x1]]
    %s334 = sld [smem:[#allocation9 + $0x1]]
    %v335 = vstv %s333
    %v336 = vadd.f32 %v81, %v335
    %v337 = vrcp.pop %v336
    %v338 = vmul.f32 %v337, 2.5066283
    %v339 = vmul.f32 %v337, 29969.594
    %v340 = vadd.f32 %v339, 32281.064
    %v341 = vmul.f32 %v340, %v337
    %v342 = vadd.f32 %v341, 14484.914
    %v343 = vmul.f32 %v342, %v337
    %v344 = vadd.f32 %v343, 3465.7095
    %v345 = vmul.f32 %v344, %v337
    %v346 = vadd.f32 %v345, 466.3342
    %v347 = vmul.f32 %v346, %v337
    %v348 = vadd.f32 %v347, 33.458332
    %v349 = vmul.f32 %v348, %v337
    %v350 = vadd.f32 %v349, 1.0
    %v351 = vmul.f32 %v338, %v350
    %v352 = vmul.f32 %v337, 720.0
    %v353 = vadd.f32 %v352, 1764.0
    %v354 = vmul.f32 %v353, %v337
    %v355 = vadd.f32 %v354, 1624.0
    %v356 = vmul.f32 %v355, %v337
    %v357 = vadd.f32 %v356, 735.0
    %v358 = vmul.f32 %v357, %v337
    %v359 = vadd.f32 %v358, 175.0
    %v360 = vmul.f32 %v359, %v337
    %v361 = vadd.f32 %v360, 21.0
    %v362 = vmul.f32 %v361, %v337
    %v363 = vadd.f32 %v362, 1.0
    %v364 = vrcp.pop %v363
    %v365 = vmul.f32 %v351, %v364
    %v366 = vadd.f32 %v336, 5.5
    %v367 = vadd.f32 %v336, 0.5
    %v368 = vlog2.pop %v366
    %v369 = vmul.f32 %v368, 0.6931472
    %v370 = vmul.f32 %v367, %v369
    %v371 = vsub.f32 %v370, %v366
    %v372 = vlog2.pop %v365
    %v373 = vmul.f32 %v372, 0.6931472
    %v374 = vadd.f32 %v371, %v373
    %v375 = vstv %s334
    %v376 = vadd.f32 %v83, %v375
    %v377 = vrcp.pop %v376
    %v378 = vmul.f32 %v377, 2.5066283
    %v379 = vmul.f32 %v377, 29969.594
    %v380 = vadd.f32 %v379, 32281.064
    %v381 = vmul.f32 %v380, %v377
    %v382 = vadd.f32 %v381, 14484.914
    %v383 = vmul.f32 %v382, %v377
    %v384 = vadd.f32 %v383, 3465.7095
    %v385 = vmul.f32 %v384, %v377
    %v386 = vadd.f32 %v385, 466.3342
    %v387 = vmul.f32 %v386, %v377
    %v388 = vadd.f32 %v387, 33.458332
    %v389 = vmul.f32 %v388, %v377
    %v390 = vadd.f32 %v389, 1.0
    %v391 = vmul.f32 %v378, %v390
    %v392 = vmul.f32 %v377, 720.0
    %v393 = vadd.f32 %v392, 1764.0
    %v394 = vmul.f32 %v393, %v377
    %v395 = vadd.f32 %v394, 1624.0
    %v396 = vmul.f32 %v395, %v377
    %v397 = vadd.f32 %v396, 735.0
    %v398 = vmul.f32 %v397, %v377
    %v399 = vadd.f32 %v398, 175.0
    %v400 = vmul.f32 %v399, %v377
    %v401 = vadd.f32 %v400, 21.0
    %v402 = vmul.f32 %v401, %v377
    %v403 = vadd.f32 %v402, 1.0
    %v404 = vrcp.pop %v403
    %v405 = vmul.f32 %v391, %v404
    %v406 = vadd.f32 %v376, 5.5
    %v407 = vadd.f32 %v376, 0.5
    %v408 = vlog2.pop %v406
    %v409 = vmul.f32 %v408, 0.6931472
    %v410 = vmul.f32 %v407, %v409
    %v411 = vsub.f32 %v410, %v406
    %v412 = vlog2.pop %v405
    %v413 = vmul.f32 %v412, 0.6931472
    %v414 = vadd.f32 %v411, %v413
    %v415 = vadd.f32 %v374, %v414
    %s416 = sadd.f32 %s333, %s334
    %v417 = vstv %s416
    %v418 = vadd.f32 %v82, %v417
    %v419 = vrcp.pop %v418
    %v420 = vmul.f32 %v419, 2.5066283
    %v421 = vmul.f32 %v419, 29969.594
    %v422 = vadd.f32 %v421, 32281.064
    %v423 = vmul.f32 %v422, %v419
    %v424 = vadd.f32 %v423, 14484.914
    %v425 = vmul.f32 %v424, %v419
    %v426 = vadd.f32 %v425, 3465.7095
    %v427 = vmul.f32 %v426, %v419
    %v428 = vadd.f32 %v427, 466.3342
    %v429 = vmul.f32 %v428, %v419
    %v430 = vadd.f32 %v429, 33.458332
    %v431 = vmul.f32 %v430, %v419
    %v432 = vadd.f32 %v431, 1.0
    %v433 = vmul.f32 %v420, %v432
    %v434 = vmul.f32 %v419, 720.0
    %v435 = vadd.f32 %v434, 1764.0
    %v436 = vmul.f32 %v435, %v419
    %v437 = vadd.f32 %v436, 1624.0
    %v438 = vmul.f32 %v437, %v419
    %v439 = vadd.f32 %v438, 735.0
    %v440 = vmul.f32 %v439, %v419
    %v441 = vadd.f32 %v440, 175.0
    %v442 = vmul.f32 %v441, %v419
    %v443 = vadd.f32 %v442, 21.0
    %v444 = vmul.f32 %v443, %v419
    %v445 = vadd.f32 %v444, 1.0
    %v446 = vrcp.pop %v445
    %v447 = vmul.f32 %v433, %v446
    %v448 = vadd.f32 %v418, 5.5
    %v449 = vadd.f32 %v418, 0.5
    %v450 = vlog2.pop %v448
    %v451 = vmul.f32 %v450, 0.6931472
    %v452 = vmul.f32 %v449, %v451
    %v453 = vsub.f32 %v452, %v448
    %v454 = vlog2.pop %v447
    %v455 = vmul.f32 %v454, 0.6931472
    %v456 = vadd.f32 %v453, %v455
    %v457 = vsub.f32 %v415, %v456
    %v458 = vadd.f32 %v457, %v202
    %s459 = sld [smem:[#allocation11 + $0x1]]
    %v460 = vstv %s459
    %v461 = vadd.f32 %v458, %v460
    %s462 = scalar_lea.vmem [#allocation12], 8
    %463 = vst [vmem:[%s462] sm:$0xff] %v461
    %s464 = sld [smem:[#allocation8 + $0x2]]
    %s465 = sld [smem:[#allocation9 + $0x2]]
    %v466 = vstv %s464
    %v467 = vadd.f32 %v81, %v466
    %v468 = vrcp.pop %v467
    %v469 = vmul.f32 %v468, 2.5066283
    %v470 = vmul.f32 %v468, 29969.594
    %v471 = vadd.f32 %v470, 32281.064
    %v472 = vmul.f32 %v471, %v468
    %v473 = vadd.f32 %v472, 14484.914
    %v474 = vmul.f32 %v473, %v468
    %v475 = vadd.f32 %v474, 3465.7095
    %v476 = vmul.f32 %v475, %v468
    %v477 = vadd.f32 %v476, 466.3342
    %v478 = vmul.f32 %v477, %v468
    %v479 = vadd.f32 %v478, 33.458332
    %v480 = vmul.f32 %v479, %v468
    %v481 = vadd.f32 %v480, 1.0
    %v482 = vmul.f32 %v469, %v481
    %v483 = vmul.f32 %v468, 720.0
    %v484 = vadd.f32 %v483, 1764.0
    %v485 = vmul.f32 %v484, %v468
    %v486 = vadd.f32 %v485, 1624.0
    %v487 = vmul.f32 %v486, %v468
    %v488 = vadd.f32 %v487, 735.0
    %v489 = vmul.f32 %v488, %v468
    %v490 = vadd.f32 %v489, 175.0
    %v491 = vmul.f32 %v490, %v468
    %v492 = vadd.f32 %v491, 21.0
    %v493 = vmul.f32 %v492, %v468
    %v494 = vadd.f32 %v493, 1.0
    %v495 = vrcp.pop %v494
    %v496 = vmul.f32 %v482, %v495
    %v497 = vadd.f32 %v467, 5.5
    %v498 = vadd.f32 %v467, 0.5
    %v499 = vlog2.pop %v497
    %v500 = vmul.f32 %v499, 0.6931472
    %v501 = vmul.f32 %v498, %v500
    %v502 = vsub.f32 %v501, %v497
    %v503 = vlog2.pop %v496
    %v504 = vmul.f32 %v503, 0.6931472
    %v505 = vadd.f32 %v502, %v504
    %v506 = vstv %s465
    %v507 = vadd.f32 %v83, %v506
    %v508 = vrcp.pop %v507
    %v509 = vmul.f32 %v508, 2.5066283
    %v510 = vmul.f32 %v508, 29969.594
    %v511 = vadd.f32 %v510, 32281.064
    %v512 = vmul.f32 %v511, %v508
    %v513 = vadd.f32 %v512, 14484.914
    %v514 = vmul.f32 %v513, %v508
    %v515 = vadd.f32 %v514, 3465.7095
    %v516 = vmul.f32 %v515, %v508
    %v517 = vadd.f32 %v516, 466.3342
    %v518 = vmul.f32 %v517, %v508
    %v519 = vadd.f32 %v518, 33.458332
    %v520 = vmul.f32 %v519, %v508
    %v521 = vadd.f32 %v520, 1.0
    %v522 = vmul.f32 %v509, %v521
    %v523 = vmul.f32 %v508, 720.0
    %v524 = vadd.f32 %v523, 1764.0
    %v525 = vmul.f32 %v524, %v508
    %v526 = vadd.f32 %v525, 1624.0
    %v527 = vmul.f32 %v526, %v508
    %v528 = vadd.f32 %v527, 735.0
    %v529 = vmul.f32 %v528, %v508
    %v530 = vadd.f32 %v529, 175.0
    %v531 = vmul.f32 %v530, %v508
    %v532 = vadd.f32 %v531, 21.0
    %v533 = vmul.f32 %v532, %v508
    %v534 = vadd.f32 %v533, 1.0
    %v535 = vrcp.pop %v534
    %v536 = vmul.f32 %v522, %v535
    %v537 = vadd.f32 %v507, 5.5
    %v538 = vadd.f32 %v507, 0.5
    %v539 = vlog2.pop %v537
    %v540 = vmul.f32 %v539, 0.6931472
    %v541 = vmul.f32 %v538, %v540
    %v542 = vsub.f32 %v541, %v537
    %v543 = vlog2.pop %v536
    %v544 = vmul.f32 %v543, 0.6931472
    %v545 = vadd.f32 %v542, %v544
    %v546 = vadd.f32 %v505, %v545
    %s547 = sadd.f32 %s464, %s465
    %v548 = vstv %s547
    %v549 = vadd.f32 %v82, %v548
    %v550 = vrcp.pop %v549
    %v551 = vmul.f32 %v550, 2.5066283
    %v552 = vmul.f32 %v550, 29969.594
    %v553 = vadd.f32 %v552, 32281.064
    %v554 = vmul.f32 %v553, %v550
    %v555 = vadd.f32 %v554, 14484.914
    %v556 = vmul.f32 %v555, %v550
    %v557 = vadd.f32 %v556, 3465.7095
    %v558 = vmul.f32 %v557, %v550
    %v559 = vadd.f32 %v558, 466.3342
    %v560 = vmul.f32 %v559, %v550
    %v561 = vadd.f32 %v560, 33.458332
    %v562 = vmul.f32 %v561, %v550
    %v563 = vadd.f32 %v562, 1.0
    %v564 = vmul.f32 %v551, %v563
    %v565 = vmul.f32 %v550, 720.0
    %v566 = vadd.f32 %v565, 1764.0
    %v567 = vmul.f32 %v566, %v550
    %v568 = vadd.f32 %v567, 1624.0
    %v569 = vmul.f32 %v568, %v550
    %v570 = vadd.f32 %v569, 735.0
    %v571 = vmul.f32 %v570, %v550
    %v572 = vadd.f32 %v571, 175.0
    %v573 = vmul.f32 %v572, %v550
    %v574 = vadd.f32 %v573, 21.0
    %v575 = vmul.f32 %v574, %v550
    %v576 = vadd.f32 %v575, 1.0
    %v577 = vrcp.pop %v576
    %v578 = vmul.f32 %v564, %v577
    %v579 = vadd.f32 %v549, 5.5
    %v580 = vadd.f32 %v549, 0.5
    %v581 = vlog2.pop %v579
    %v582 = vmul.f32 %v581, 0.6931472
    %v583 = vmul.f32 %v580, %v582
    %v584 = vsub.f32 %v583, %v579
    %v585 = vlog2.pop %v578
    %v586 = vmul.f32 %v585, 0.6931472
    %v587 = vadd.f32 %v584, %v586
    %v588 = vsub.f32 %v546, %v587
    %v589 = vadd.f32 %v588, %v202
    %s590 = sld [smem:[#allocation11 + $0x2]]
    %v591 = vstv %s590
    %v592 = vadd.f32 %v589, %v591
    %s593 = scalar_lea.vmem [#allocation12], 16
    %594 = vst [vmem:[%s593] sm:$0xff] %v592
    %s595 = sld [smem:[#allocation8 + $0x3]]
    %s596 = sld [smem:[#allocation9 + $0x3]]
    %v597 = vstv %s595
    %v598 = vadd.f32 %v81, %v597
    %v599 = vrcp.pop %v598
    %v600 = vmul.f32 %v599, 2.5066283
    %v601 = vmul.f32 %v599, 29969.594
    %v602 = vadd.f32 %v601, 32281.064
    %v603 = vmul.f32 %v602, %v599
    %v604 = vadd.f32 %v603, 14484.914
    %v605 = vmul.f32 %v604, %v599
    %v606 = vadd.f32 %v605, 3465.7095
    %v607 = vmul.f32 %v606, %v599
    %v608 = vadd.f32 %v607, 466.3342
    %v609 = vmul.f32 %v608, %v599
    %v610 = vadd.f32 %v609, 33.458332
    %v611 = vmul.f32 %v610, %v599
    %v612 = vadd.f32 %v611, 1.0
    %v613 = vmul.f32 %v600, %v612
    %v614 = vmul.f32 %v599, 720.0
    %v615 = vadd.f32 %v614, 1764.0
    %v616 = vmul.f32 %v615, %v599
    %v617 = vadd.f32 %v616, 1624.0
    %v618 = vmul.f32 %v617, %v599
    %v619 = vadd.f32 %v618, 735.0
    %v620 = vmul.f32 %v619, %v599
    %v621 = vadd.f32 %v620, 175.0
    %v622 = vmul.f32 %v621, %v599
    %v623 = vadd.f32 %v622, 21.0
    %v624 = vmul.f32 %v623, %v599
    %v625 = vadd.f32 %v624, 1.0
    %v626 = vrcp.pop %v625
    %v627 = vmul.f32 %v613, %v626
    %v628 = vadd.f32 %v598, 5.5
    %v629 = vadd.f32 %v598, 0.5
    %v630 = vlog2.pop %v628
    %v631 = vmul.f32 %v630, 0.6931472
    %v632 = vmul.f32 %v629, %v631
    %v633 = vsub.f32 %v632, %v628
    %v634 = vlog2.pop %v627
    %v635 = vmul.f32 %v634, 0.6931472
    %v636 = vadd.f32 %v633, %v635
    %v637 = vstv %s596
    %v638 = vadd.f32 %v83, %v637
    %v639 = vrcp.pop %v638
    %v640 = vmul.f32 %v639, 2.5066283
    %v641 = vmul.f32 %v639, 29969.594
    %v642 = vadd.f32 %v641, 32281.064
    %v643 = vmul.f32 %v642, %v639
    %v644 = vadd.f32 %v643, 14484.914
    %v645 = vmul.f32 %v644, %v639
    %v646 = vadd.f32 %v645, 3465.7095
    %v647 = vmul.f32 %v646, %v639
    %v648 = vadd.f32 %v647, 466.3342
    %v649 = vmul.f32 %v648, %v639
    %v650 = vadd.f32 %v649, 33.458332
    %v651 = vmul.f32 %v650, %v639
    %v652 = vadd.f32 %v651, 1.0
    %v653 = vmul.f32 %v640, %v652
    %v654 = vmul.f32 %v639, 720.0
    %v655 = vadd.f32 %v654, 1764.0
    %v656 = vmul.f32 %v655, %v639
    %v657 = vadd.f32 %v656, 1624.0
    %v658 = vmul.f32 %v657, %v639
    %v659 = vadd.f32 %v658, 735.0
    %v660 = vmul.f32 %v659, %v639
    %v661 = vadd.f32 %v660, 175.0
    %v662 = vmul.f32 %v661, %v639
    %v663 = vadd.f32 %v662, 21.0
    %v664 = vmul.f32 %v663, %v639
    %v665 = vadd.f32 %v664, 1.0
    %v666 = vrcp.pop %v665
    %v667 = vmul.f32 %v653, %v666
    %v668 = vadd.f32 %v638, 5.5
    %v669 = vadd.f32 %v638, 0.5
    %v670 = vlog2.pop %v668
    %v671 = vmul.f32 %v670, 0.6931472
    %v672 = vmul.f32 %v669, %v671
    %v673 = vsub.f32 %v672, %v668
    %v674 = vlog2.pop %v667
    %v675 = vmul.f32 %v674, 0.6931472
    %v676 = vadd.f32 %v673, %v675
    %v677 = vadd.f32 %v636, %v676
    %s678 = sadd.f32 %s595, %s596
    %v679 = vstv %s678
    %v680 = vadd.f32 %v82, %v679
    %v681 = vrcp.pop %v680
    %v682 = vmul.f32 %v681, 2.5066283
    %v683 = vmul.f32 %v681, 29969.594
    %v684 = vadd.f32 %v683, 32281.064
    %v685 = vmul.f32 %v684, %v681
    %v686 = vadd.f32 %v685, 14484.914
    %v687 = vmul.f32 %v686, %v681
    %v688 = vadd.f32 %v687, 3465.7095
    %v689 = vmul.f32 %v688, %v681
    %v690 = vadd.f32 %v689, 466.3342
    %v691 = vmul.f32 %v690, %v681
    %v692 = vadd.f32 %v691, 33.458332
    %v693 = vmul.f32 %v692, %v681
    %v694 = vadd.f32 %v693, 1.0
    %v695 = vmul.f32 %v682, %v694
    %v696 = vmul.f32 %v681, 720.0
    %v697 = vadd.f32 %v696, 1764.0
    %v698 = vmul.f32 %v697, %v681
    %v699 = vadd.f32 %v698, 1624.0
    %v700 = vmul.f32 %v699, %v681
    %v701 = vadd.f32 %v700, 735.0
    %v702 = vmul.f32 %v701, %v681
    %v703 = vadd.f32 %v702, 175.0
    %v704 = vmul.f32 %v703, %v681
    %v705 = vadd.f32 %v704, 21.0
    %v706 = vmul.f32 %v705, %v681
    %v707 = vadd.f32 %v706, 1.0
    %v708 = vrcp.pop %v707
    %v709 = vmul.f32 %v695, %v708
    %v710 = vadd.f32 %v680, 5.5
    %v711 = vadd.f32 %v680, 0.5
    %v712 = vlog2.pop %v710
    %v713 = vmul.f32 %v712, 0.6931472
    %v714 = vmul.f32 %v711, %v713
    %v715 = vsub.f32 %v714, %v710
    %v716 = vlog2.pop %v709
    %v717 = vmul.f32 %v716, 0.6931472
    %v718 = vadd.f32 %v715, %v717
    %v719 = vsub.f32 %v677, %v718
    %v720 = vadd.f32 %v719, %v202
    %s721 = sld [smem:[#allocation11 + $0x3]]
    %v722 = vstv %s721
    %v723 = vadd.f32 %v720, %v722
    %s724 = scalar_lea.vmem [#allocation12], 24
    %725 = vst [vmem:[%s724] sm:$0xff] %v723
    %s726 = sld [smem:[#allocation8 + $0x4]]
    %s727 = sld [smem:[#allocation9 + $0x4]]
    %v728 = vstv %s726
    %v729 = vadd.f32 %v81, %v728
    %v730 = vrcp.pop %v729
    %v731 = vmul.f32 %v730, 2.5066283
    %v732 = vmul.f32 %v730, 29969.594
    %v733 = vadd.f32 %v732, 32281.064
    %v734 = vmul.f32 %v733, %v730
    %v735 = vadd.f32 %v734, 14484.914
    %v736 = vmul.f32 %v735, %v730
    %v737 = vadd.f32 %v736, 3465.7095
    %v738 = vmul.f32 %v737, %v730
    %v739 = vadd.f32 %v738, 466.3342
    %v740 = vmul.f32 %v739, %v730
    %v741 = vadd.f32 %v740, 33.458332
    %v742 = vmul.f32 %v741, %v730
    %v743 = vadd.f32 %v742, 1.0
    %v744 = vmul.f32 %v731, %v743
    %v745 = vmul.f32 %v730, 720.0
    %v746 = vadd.f32 %v745, 1764.0
    %v747 = vmul.f32 %v746, %v730
    %v748 = vadd.f32 %v747, 1624.0
    %v749 = vmul.f32 %v748, %v730
    %v750 = vadd.f32 %v749, 735.0
    %v751 = vmul.f32 %v750, %v730
    %v752 = vadd.f32 %v751, 175.0
    %v753 = vmul.f32 %v752, %v730
    %v754 = vadd.f32 %v753, 21.0
    %v755 = vmul.f32 %v754, %v730
    %v756 = vadd.f32 %v755, 1.0
    %v757 = vrcp.pop %v756
    %v758 = vmul.f32 %v744, %v757
    %v759 = vadd.f32 %v729, 5.5
    %v760 = vadd.f32 %v729, 0.5
    %v761 = vlog2.pop %v759
    %v762 = vmul.f32 %v761, 0.6931472
    %v763 = vmul.f32 %v760, %v762
    %v764 = vsub.f32 %v763, %v759
    %v765 = vlog2.pop %v758
    %v766 = vmul.f32 %v765, 0.6931472
    %v767 = vadd.f32 %v764, %v766
    %v768 = vstv %s727
    %v769 = vadd.f32 %v83, %v768
    %v770 = vrcp.pop %v769
    %v771 = vmul.f32 %v770, 2.5066283
    %v772 = vmul.f32 %v770, 29969.594
    %v773 = vadd.f32 %v772, 32281.064
    %v774 = vmul.f32 %v773, %v770
    %v775 = vadd.f32 %v774, 14484.914
    %v776 = vmul.f32 %v775, %v770
    %v777 = vadd.f32 %v776, 3465.7095
    %v778 = vmul.f32 %v777, %v770
    %v779 = vadd.f32 %v778, 466.3342
    %v780 = vmul.f32 %v779, %v770
    %v781 = vadd.f32 %v780, 33.458332
    %v782 = vmul.f32 %v781, %v770
    %v783 = vadd.f32 %v782, 1.0
    %v784 = vmul.f32 %v771, %v783
    %v785 = vmul.f32 %v770, 720.0
    %v786 = vadd.f32 %v785, 1764.0
    %v787 = vmul.f32 %v786, %v770
    %v788 = vadd.f32 %v787, 1624.0
    %v789 = vmul.f32 %v788, %v770
    %v790 = vadd.f32 %v789, 735.0
    %v791 = vmul.f32 %v790, %v770
    %v792 = vadd.f32 %v791, 175.0
    %v793 = vmul.f32 %v792, %v770
    %v794 = vadd.f32 %v793, 21.0
    %v795 = vmul.f32 %v794, %v770
    %v796 = vadd.f32 %v795, 1.0
    %v797 = vrcp.pop %v796
    %v798 = vmul.f32 %v784, %v797
    %v799 = vadd.f32 %v769, 5.5
    %v800 = vadd.f32 %v769, 0.5
    %v801 = vlog2.pop %v799
    %v802 = vmul.f32 %v801, 0.6931472
    %v803 = vmul.f32 %v800, %v802
    %v804 = vsub.f32 %v803, %v799
    %v805 = vlog2.pop %v798
    %v806 = vmul.f32 %v805, 0.6931472
    %v807 = vadd.f32 %v804, %v806
    %v808 = vadd.f32 %v767, %v807
    %s809 = sadd.f32 %s726, %s727
    %v810 = vstv %s809
    %v811 = vadd.f32 %v82, %v810
    %v812 = vrcp.pop %v811
    %v813 = vmul.f32 %v812, 2.5066283
    %v814 = vmul.f32 %v812, 29969.594
    %v815 = vadd.f32 %v814, 32281.064
    %v816 = vmul.f32 %v815, %v812
    %v817 = vadd.f32 %v816, 14484.914
    %v818 = vmul.f32 %v817, %v812
    %v819 = vadd.f32 %v818, 3465.7095
    %v820 = vmul.f32 %v819, %v812
    %v821 = vadd.f32 %v820, 466.3342
    %v822 = vmul.f32 %v821, %v812
    %v823 = vadd.f32 %v822, 33.458332
    %v824 = vmul.f32 %v823, %v812
    %v825 = vadd.f32 %v824, 1.0
    %v826 = vmul.f32 %v813, %v825
    %v827 = vmul.f32 %v812, 720.0
    %v828 = vadd.f32 %v827, 1764.0
    %v829 = vmul.f32 %v828, %v812
    %v830 = vadd.f32 %v829, 1624.0
    %v831 = vmul.f32 %v830, %v812
    %v832 = vadd.f32 %v831, 735.0
    %v833 = vmul.f32 %v832, %v812
    %v834 = vadd.f32 %v833, 175.0
    %v835 = vmul.f32 %v834, %v812
    %v836 = vadd.f32 %v835, 21.0
    %v837 = vmul.f32 %v836, %v812
    %v838 = vadd.f32 %v837, 1.0
    %v839 = vrcp.pop %v838
    %v840 = vmul.f32 %v826, %v839
    %v841 = vadd.f32 %v811, 5.5
    %v842 = vadd.f32 %v811, 0.5
    %v843 = vlog2.pop %v841
    %v844 = vmul.f32 %v843, 0.6931472
    %v845 = vmul.f32 %v842, %v844
    %v846 = vsub.f32 %v845, %v841
    %v847 = vlog2.pop %v840
    %v848 = vmul.f32 %v847, 0.6931472
    %v849 = vadd.f32 %v846, %v848
    %v850 = vsub.f32 %v808, %v849
    %v851 = vadd.f32 %v850, %v202
    %s852 = sld [smem:[#allocation11 + $0x4]]
    %v853 = vstv %s852
    %v854 = vadd.f32 %v851, %v853
    %s855 = scalar_lea.vmem [#allocation12], 32
    %856 = vst [vmem:[%s855] sm:$0xff] %v854
    %s857 = sld [smem:[#allocation8 + $0x5]]
    %s858 = sld [smem:[#allocation9 + $0x5]]
    %v859 = vstv %s857
    %v860 = vadd.f32 %v81, %v859
    %v861 = vrcp.pop %v860
    %v862 = vmul.f32 %v861, 2.5066283
    %v863 = vmul.f32 %v861, 29969.594
    %v864 = vadd.f32 %v863, 32281.064
    %v865 = vmul.f32 %v864, %v861
    %v866 = vadd.f32 %v865, 14484.914
    %v867 = vmul.f32 %v866, %v861
    %v868 = vadd.f32 %v867, 3465.7095
    %v869 = vmul.f32 %v868, %v861
    %v870 = vadd.f32 %v869, 466.3342
    %v871 = vmul.f32 %v870, %v861
    %v872 = vadd.f32 %v871, 33.458332
    %v873 = vmul.f32 %v872, %v861
    %v874 = vadd.f32 %v873, 1.0
    %v875 = vmul.f32 %v862, %v874
    %v876 = vmul.f32 %v861, 720.0
    %v877 = vadd.f32 %v876, 1764.0
    %v878 = vmul.f32 %v877, %v861
    %v879 = vadd.f32 %v878, 1624.0
    %v880 = vmul.f32 %v879, %v861
    %v881 = vadd.f32 %v880, 735.0
    %v882 = vmul.f32 %v881, %v861
    %v883 = vadd.f32 %v882, 175.0
    %v884 = vmul.f32 %v883, %v861
    %v885 = vadd.f32 %v884, 21.0
    %v886 = vmul.f32 %v885, %v861
    %v887 = vadd.f32 %v886, 1.0
    %v888 = vrcp.pop %v887
    %v889 = vmul.f32 %v875, %v888
    %v890 = vadd.f32 %v860, 5.5
    %v891 = vadd.f32 %v860, 0.5
    %v892 = vlog2.pop %v890
    %v893 = vmul.f32 %v892, 0.6931472
    %v894 = vmul.f32 %v891, %v893
    %v895 = vsub.f32 %v894, %v890
    %v896 = vlog2.pop %v889
    %v897 = vmul.f32 %v896, 0.6931472
    %v898 = vadd.f32 %v895, %v897
    %v899 = vstv %s858
    %v900 = vadd.f32 %v83, %v899
    %v901 = vrcp.pop %v900
    %v902 = vmul.f32 %v901, 2.5066283
    %v903 = vmul.f32 %v901, 29969.594
    %v904 = vadd.f32 %v903, 32281.064
    %v905 = vmul.f32 %v904, %v901
    %v906 = vadd.f32 %v905, 14484.914
    %v907 = vmul.f32 %v906, %v901
    %v908 = vadd.f32 %v907, 3465.7095
    %v909 = vmul.f32 %v908, %v901
    %v910 = vadd.f32 %v909, 466.3342
    %v911 = vmul.f32 %v910, %v901
    %v912 = vadd.f32 %v911, 33.458332
    %v913 = vmul.f32 %v912, %v901
    %v914 = vadd.f32 %v913, 1.0
    %v915 = vmul.f32 %v902, %v914
    %v916 = vmul.f32 %v901, 720.0
    %v917 = vadd.f32 %v916, 1764.0
    %v918 = vmul.f32 %v917, %v901
    %v919 = vadd.f32 %v918, 1624.0
    %v920 = vmul.f32 %v919, %v901
    %v921 = vadd.f32 %v920, 735.0
    %v922 = vmul.f32 %v921, %v901
    %v923 = vadd.f32 %v922, 175.0
    %v924 = vmul.f32 %v923, %v901
    %v925 = vadd.f32 %v924, 21.0
    %v926 = vmul.f32 %v925, %v901
    %v927 = vadd.f32 %v926, 1.0
    %v928 = vrcp.pop %v927
    %v929 = vmul.f32 %v915, %v928
    %v930 = vadd.f32 %v900, 5.5
    %v931 = vadd.f32 %v900, 0.5
    %v932 = vlog2.pop %v930
    %v933 = vmul.f32 %v932, 0.6931472
    %v934 = vmul.f32 %v931, %v933
    %v935 = vsub.f32 %v934, %v930
    %v936 = vlog2.pop %v929
    %v937 = vmul.f32 %v936, 0.6931472
    %v938 = vadd.f32 %v935, %v937
    %v939 = vadd.f32 %v898, %v938
    %s940 = sadd.f32 %s857, %s858
    %v941 = vstv %s940
    %v942 = vadd.f32 %v82, %v941
    %v943 = vrcp.pop %v942
    %v944 = vmul.f32 %v943, 2.5066283
    %v945 = vmul.f32 %v943, 29969.594
    %v946 = vadd.f32 %v945, 32281.064
    %v947 = vmul.f32 %v946, %v943
    %v948 = vadd.f32 %v947, 14484.914
    %v949 = vmul.f32 %v948, %v943
    %v950 = vadd.f32 %v949, 3465.7095
    %v951 = vmul.f32 %v950, %v943
    %v952 = vadd.f32 %v951, 466.3342
    %v953 = vmul.f32 %v952, %v943
    %v954 = vadd.f32 %v953, 33.458332
    %v955 = vmul.f32 %v954, %v943
    %v956 = vadd.f32 %v955, 1.0
    %v957 = vmul.f32 %v944, %v956
    %v958 = vmul.f32 %v943, 720.0
    %v959 = vadd.f32 %v958, 1764.0
    %v960 = vmul.f32 %v959, %v943
    %v961 = vadd.f32 %v960, 1624.0
    %v962 = vmul.f32 %v961, %v943
    %v963 = vadd.f32 %v962, 735.0
    %v964 = vmul.f32 %v963, %v943
    %v965 = vadd.f32 %v964, 175.0
    %v966 = vmul.f32 %v965, %v943
    %v967 = vadd.f32 %v966, 21.0
    %v968 = vmul.f32 %v967, %v943
    %v969 = vadd.f32 %v968, 1.0
    %v970 = vrcp.pop %v969
    %v971 = vmul.f32 %v957, %v970
    %v972 = vadd.f32 %v942, 5.5
    %v973 = vadd.f32 %v942, 0.5
    %v974 = vlog2.pop %v972
    %v975 = vmul.f32 %v974, 0.6931472
    %v976 = vmul.f32 %v973, %v975
    %v977 = vsub.f32 %v976, %v972
    %v978 = vlog2.pop %v971
    %v979 = vmul.f32 %v978, 0.6931472
    %v980 = vadd.f32 %v977, %v979
    %v981 = vsub.f32 %v939, %v980
    %v982 = vadd.f32 %v981, %v202
    %s983 = sld [smem:[#allocation11 + $0x5]]
    %v984 = vstv %s983
    %v985 = vadd.f32 %v982, %v984
    %s986 = scalar_lea.vmem [#allocation12], 40
    %987 = vst [vmem:[%s986] sm:$0xff] %v985
    %s988 = sld [smem:[#allocation8 + $0x6]]
    %s989 = sld [smem:[#allocation9 + $0x6]]
    %v990 = vstv %s988
    %v991 = vadd.f32 %v81, %v990
    %v992 = vrcp.pop %v991
    %v993 = vmul.f32 %v992, 2.5066283
    %v994 = vmul.f32 %v992, 29969.594
    %v995 = vadd.f32 %v994, 32281.064
    %v996 = vmul.f32 %v995, %v992
    %v997 = vadd.f32 %v996, 14484.914
    %v998 = vmul.f32 %v997, %v992
    %v999 = vadd.f32 %v998, 3465.7095
    %v1000 = vmul.f32 %v999, %v992
    %v1001 = vadd.f32 %v1000, 466.3342
    %v1002 = vmul.f32 %v1001, %v992
    %v1003 = vadd.f32 %v1002, 33.458332
    %v1004 = vmul.f32 %v1003, %v992
    %v1005 = vadd.f32 %v1004, 1.0
    %v1006 = vmul.f32 %v993, %v1005
    %v1007 = vmul.f32 %v992, 720.0
    %v1008 = vadd.f32 %v1007, 1764.0
    %v1009 = vmul.f32 %v1008, %v992
    %v1010 = vadd.f32 %v1009, 1624.0
    %v1011 = vmul.f32 %v1010, %v992
    %v1012 = vadd.f32 %v1011, 735.0
    %v1013 = vmul.f32 %v1012, %v992
    %v1014 = vadd.f32 %v1013, 175.0
    %v1015 = vmul.f32 %v1014, %v992
    %v1016 = vadd.f32 %v1015, 21.0
    %v1017 = vmul.f32 %v1016, %v992
    %v1018 = vadd.f32 %v1017, 1.0
    %v1019 = vrcp.pop %v1018
    %v1020 = vmul.f32 %v1006, %v1019
    %v1021 = vadd.f32 %v991, 5.5
    %v1022 = vadd.f32 %v991, 0.5
    %v1023 = vlog2.pop %v1021
    %v1024 = vmul.f32 %v1023, 0.6931472
    %v1025 = vmul.f32 %v1022, %v1024
    %v1026 = vsub.f32 %v1025, %v1021
    %v1027 = vlog2.pop %v1020
    %v1028 = vmul.f32 %v1027, 0.6931472
    %v1029 = vadd.f32 %v1026, %v1028
    %v1030 = vstv %s989
    %v1031 = vadd.f32 %v83, %v1030
    %v1032 = vrcp.pop %v1031
    %v1033 = vmul.f32 %v1032, 2.5066283
    %v1034 = vmul.f32 %v1032, 29969.594
    %v1035 = vadd.f32 %v1034, 32281.064
    %v1036 = vmul.f32 %v1035, %v1032
    %v1037 = vadd.f32 %v1036, 14484.914
    %v1038 = vmul.f32 %v1037, %v1032
    %v1039 = vadd.f32 %v1038, 3465.7095
    %v1040 = vmul.f32 %v1039, %v1032
    %v1041 = vadd.f32 %v1040, 466.3342
    %v1042 = vmul.f32 %v1041, %v1032
    %v1043 = vadd.f32 %v1042, 33.458332
    %v1044 = vmul.f32 %v1043, %v1032
    %v1045 = vadd.f32 %v1044, 1.0
    %v1046 = vmul.f32 %v1033, %v1045
    %v1047 = vmul.f32 %v1032, 720.0
    %v1048 = vadd.f32 %v1047, 1764.0
    %v1049 = vmul.f32 %v1048, %v1032
    %v1050 = vadd.f32 %v1049, 1624.0
    %v1051 = vmul.f32 %v1050, %v1032
    %v1052 = vadd.f32 %v1051, 735.0
    %v1053 = vmul.f32 %v1052, %v1032
    %v1054 = vadd.f32 %v1053, 175.0
    %v1055 = vmul.f32 %v1054, %v1032
    %v1056 = vadd.f32 %v1055, 21.0
    %v1057 = vmul.f32 %v1056, %v1032
    %v1058 = vadd.f32 %v1057, 1.0
    %v1059 = vrcp.pop %v1058
    %v1060 = vmul.f32 %v1046, %v1059
    %v1061 = vadd.f32 %v1031, 5.5
    %v1062 = vadd.f32 %v1031, 0.5
    %v1063 = vlog2.pop %v1061
    %v1064 = vmul.f32 %v1063, 0.6931472
    %v1065 = vmul.f32 %v1062, %v1064
    %v1066 = vsub.f32 %v1065, %v1061
    %v1067 = vlog2.pop %v1060
    %v1068 = vmul.f32 %v1067, 0.6931472
    %v1069 = vadd.f32 %v1066, %v1068
    %v1070 = vadd.f32 %v1029, %v1069
    %s1071 = sadd.f32 %s988, %s989
    %v1072 = vstv %s1071
    %v1073 = vadd.f32 %v82, %v1072
    %v1074 = vrcp.pop %v1073
    %v1075 = vmul.f32 %v1074, 2.5066283
    %v1076 = vmul.f32 %v1074, 29969.594
    %v1077 = vadd.f32 %v1076, 32281.064
    %v1078 = vmul.f32 %v1077, %v1074
    %v1079 = vadd.f32 %v1078, 14484.914
    %v1080 = vmul.f32 %v1079, %v1074
    %v1081 = vadd.f32 %v1080, 3465.7095
    %v1082 = vmul.f32 %v1081, %v1074
    %v1083 = vadd.f32 %v1082, 466.3342
    %v1084 = vmul.f32 %v1083, %v1074
    %v1085 = vadd.f32 %v1084, 33.458332
    %v1086 = vmul.f32 %v1085, %v1074
    %v1087 = vadd.f32 %v1086, 1.0
    %v1088 = vmul.f32 %v1075, %v1087
    %v1089 = vmul.f32 %v1074, 720.0
    %v1090 = vadd.f32 %v1089, 1764.0
    %v1091 = vmul.f32 %v1090, %v1074
    %v1092 = vadd.f32 %v1091, 1624.0
    %v1093 = vmul.f32 %v1092, %v1074
    %v1094 = vadd.f32 %v1093, 735.0
    %v1095 = vmul.f32 %v1094, %v1074
    %v1096 = vadd.f32 %v1095, 175.0
    %v1097 = vmul.f32 %v1096, %v1074
    %v1098 = vadd.f32 %v1097, 21.0
    %v1099 = vmul.f32 %v1098, %v1074
    %v1100 = vadd.f32 %v1099, 1.0
    %v1101 = vrcp.pop %v1100
    %v1102 = vmul.f32 %v1088, %v1101
    %v1103 = vadd.f32 %v1073, 5.5
    %v1104 = vadd.f32 %v1073, 0.5
    %v1105 = vlog2.pop %v1103
    %v1106 = vmul.f32 %v1105, 0.6931472
    %v1107 = vmul.f32 %v1104, %v1106
    %v1108 = vsub.f32 %v1107, %v1103
    %v1109 = vlog2.pop %v1102
    %v1110 = vmul.f32 %v1109, 0.6931472
    %v1111 = vadd.f32 %v1108, %v1110
    %v1112 = vsub.f32 %v1070, %v1111
    %v1113 = vadd.f32 %v1112, %v202
    %s1114 = sld [smem:[#allocation11 + $0x6]]
    %v1115 = vstv %s1114
    %v1116 = vadd.f32 %v1113, %v1115
    %s1117 = scalar_lea.vmem [#allocation12], 48
    %1118 = vst [vmem:[%s1117] sm:$0xff] %v1116
    %s1119 = sld [smem:[#allocation8 + $0x7]]
    %s1120 = sld [smem:[#allocation9 + $0x7]]
    %v1121 = vstv %s1119
    %v1122 = vadd.f32 %v81, %v1121
    %v1123 = vrcp.pop %v1122
    %v1124 = vmul.f32 %v1123, 2.5066283
    %v1125 = vmul.f32 %v1123, 29969.594
    %v1126 = vadd.f32 %v1125, 32281.064
    %v1127 = vmul.f32 %v1126, %v1123
    %v1128 = vadd.f32 %v1127, 14484.914
    %v1129 = vmul.f32 %v1128, %v1123
    %v1130 = vadd.f32 %v1129, 3465.7095
    %v1131 = vmul.f32 %v1130, %v1123
    %v1132 = vadd.f32 %v1131, 466.3342
    %v1133 = vmul.f32 %v1132, %v1123
    %v1134 = vadd.f32 %v1133, 33.458332
    %v1135 = vmul.f32 %v1134, %v1123
    %v1136 = vadd.f32 %v1135, 1.0
    %v1137 = vmul.f32 %v1124, %v1136
    %v1138 = vmul.f32 %v1123, 720.0
    %v1139 = vadd.f32 %v1138, 1764.0
    %v1140 = vmul.f32 %v1139, %v1123
    %v1141 = vadd.f32 %v1140, 1624.0
    %v1142 = vmul.f32 %v1141, %v1123
    %v1143 = vadd.f32 %v1142, 735.0
    %v1144 = vmul.f32 %v1143, %v1123
    %v1145 = vadd.f32 %v1144, 175.0
    %v1146 = vmul.f32 %v1145, %v1123
    %v1147 = vadd.f32 %v1146, 21.0
    %v1148 = vmul.f32 %v1147, %v1123
    %v1149 = vadd.f32 %v1148, 1.0
    %v1150 = vrcp.pop %v1149
    %v1151 = vmul.f32 %v1137, %v1150
    %v1152 = vadd.f32 %v1122, 5.5
    %v1153 = vadd.f32 %v1122, 0.5
    %v1154 = vlog2.pop %v1152
    %v1155 = vmul.f32 %v1154, 0.6931472
    %v1156 = vmul.f32 %v1153, %v1155
    %v1157 = vsub.f32 %v1156, %v1152
    %v1158 = vlog2.pop %v1151
    %v1159 = vmul.f32 %v1158, 0.6931472
    %v1160 = vadd.f32 %v1157, %v1159
    %v1161 = vstv %s1120
    %v1162 = vadd.f32 %v83, %v1161
    %v1163 = vrcp.pop %v1162
    %v1164 = vmul.f32 %v1163, 2.5066283
    %v1165 = vmul.f32 %v1163, 29969.594
    %v1166 = vadd.f32 %v1165, 32281.064
    %v1167 = vmul.f32 %v1166, %v1163
    %v1168 = vadd.f32 %v1167, 14484.914
    %v1169 = vmul.f32 %v1168, %v1163
    %v1170 = vadd.f32 %v1169, 3465.7095
    %v1171 = vmul.f32 %v1170, %v1163
    %v1172 = vadd.f32 %v1171, 466.3342
    %v1173 = vmul.f32 %v1172, %v1163
    %v1174 = vadd.f32 %v1173, 33.458332
    %v1175 = vmul.f32 %v1174, %v1163
    %v1176 = vadd.f32 %v1175, 1.0
    %v1177 = vmul.f32 %v1164, %v1176
    %v1178 = vmul.f32 %v1163, 720.0
    %v1179 = vadd.f32 %v1178, 1764.0
    %v1180 = vmul.f32 %v1179, %v1163
    %v1181 = vadd.f32 %v1180, 1624.0
    %v1182 = vmul.f32 %v1181, %v1163
    %v1183 = vadd.f32 %v1182, 735.0
    %v1184 = vmul.f32 %v1183, %v1163
    %v1185 = vadd.f32 %v1184, 175.0
    %v1186 = vmul.f32 %v1185, %v1163
    %v1187 = vadd.f32 %v1186, 21.0
    %v1188 = vmul.f32 %v1187, %v1163
    %v1189 = vadd.f32 %v1188, 1.0
    %v1190 = vrcp.pop %v1189
    %v1191 = vmul.f32 %v1177, %v1190
    %v1192 = vadd.f32 %v1162, 5.5
    %v1193 = vadd.f32 %v1162, 0.5
    %v1194 = vlog2.pop %v1192
    %v1195 = vmul.f32 %v1194, 0.6931472
    %v1196 = vmul.f32 %v1193, %v1195
    %v1197 = vsub.f32 %v1196, %v1192
    %v1198 = vlog2.pop %v1191
    %v1199 = vmul.f32 %v1198, 0.6931472
    %v1200 = vadd.f32 %v1197, %v1199
    %v1201 = vadd.f32 %v1160, %v1200
    %s1202 = sadd.f32 %s1119, %s1120
    %v1203 = vstv %s1202
    %v1204 = vadd.f32 %v82, %v1203
    %v1205 = vrcp.pop %v1204
    %v1206 = vmul.f32 %v1205, 2.5066283
    %v1207 = vmul.f32 %v1205, 29969.594
    %v1208 = vadd.f32 %v1207, 32281.064
    %v1209 = vmul.f32 %v1208, %v1205
    %v1210 = vadd.f32 %v1209, 14484.914
    %v1211 = vmul.f32 %v1210, %v1205
    %v1212 = vadd.f32 %v1211, 3465.7095
    %v1213 = vmul.f32 %v1212, %v1205
    %v1214 = vadd.f32 %v1213, 466.3342
    %v1215 = vmul.f32 %v1214, %v1205
    %v1216 = vadd.f32 %v1215, 33.458332
    %v1217 = vmul.f32 %v1216, %v1205
    %v1218 = vadd.f32 %v1217, 1.0
    %v1219 = vmul.f32 %v1206, %v1218
    %v1220 = vmul.f32 %v1205, 720.0
    %v1221 = vadd.f32 %v1220, 1764.0
    %v1222 = vmul.f32 %v1221, %v1205
    %v1223 = vadd.f32 %v1222, 1624.0
    %v1224 = vmul.f32 %v1223, %v1205
    %v1225 = vadd.f32 %v1224, 735.0
    %v1226 = vmul.f32 %v1225, %v1205
    %v1227 = vadd.f32 %v1226, 175.0
    %v1228 = vmul.f32 %v1227, %v1205
    %v1229 = vadd.f32 %v1228, 21.0
    %v1230 = vmul.f32 %v1229, %v1205
    %v1231 = vadd.f32 %v1230, 1.0
    %v1232 = vrcp.pop %v1231
    %v1233 = vmul.f32 %v1219, %v1232
    %v1234 = vadd.f32 %v1204, 5.5
    %v1235 = vadd.f32 %v1204, 0.5
    %v1236 = vlog2.pop %v1234
    %v1237 = vmul.f32 %v1236, 0.6931472
    %v1238 = vmul.f32 %v1235, %v1237
    %v1239 = vsub.f32 %v1238, %v1234
    %v1240 = vlog2.pop %v1233
    %v1241 = vmul.f32 %v1240, 0.6931472
    %v1242 = vadd.f32 %v1239, %v1241
    %v1243 = vsub.f32 %v1201, %v1242
    %v1244 = vadd.f32 %v1243, %v202
    %s1245 = sld [smem:[#allocation11 + $0x7]]
    %v1246 = vstv %s1245
    %v1247 = vadd.f32 %v1244, %v1246
    %s1248 = scalar_lea.vmem [#allocation12], 56
    %1249 = vst [vmem:[%s1248] sm:$0xff] %v1247
    // Predicated region
    $region42: #{tpu_custom_call.1} parent=1 // pred_check
      _
    $region43: #{tpu_custom_call.1} parent=1 // pred_check_branch
      %1251 = sbr.rel (0) target = $region45
    $region44: #{tpu_custom_call.1} parent=1 // pred_region
      %s1253 = ssub.s32 1024, 1024
      %1254 = vsyncadd [#allocation4], %s1253
      %s1255 = sshll.u32 [#allocation12], 4
      %s1256 = int_to_ptr.vmem [resolvable:$true] %s1255
      %1261 = dma.vmem_to_hbm [thread:$0]  %s1256, 1024, %s5, [#allocation4], 128, 128, 8
    $region45: #{tpu_custom_call.1} parent=1 // pred_fallthru
      _
    // Predicated region
    $region46: #{tpu_custom_call.1} parent=1 // pred_check
      _
    $region47: #{tpu_custom_call.1} parent=1 // pred_check_branch
      %1263 = sbr.rel (0) target = $region49
    $region48: #{tpu_custom_call.1} parent=1 // pred_region
      %1264 = dma.done [#allocation4], 1024
    $region49: #{tpu_custom_call.1} parent=1 // pred_fallthru
      _
    %1265 = vsyncpa [#allocation3], 1
    %1266 = vsyncpa [#allocation7], 1
    %1267 = vsyncpa [#allocation4], 1
    %1268 = vsyncpa [#allocation5], 1
    %1269 = vsyncpa [#allocation10], 1

</llo_original>
